<compile_context>
chip_gen: v7x
topology: tpu7x:2x2x1
jax: 0.10.0
libtpu: 0.0.40
codegen_flags: <defaults>
</compile_context>

<pallas_src>
import jax
import jax.numpy as jnp
from jax.experimental import pallas as pl
from jax.experimental.pallas import tpu as pltpu

I_SIZE = 700
H_SIZES = (256, 64)
O_SIZE = 20

THR_MIN = 0.1
U_R = 0.0

_LANE = 128
_SUBLANE = 8


def _ceil_to(n, m):
    return ((n + m - 1) // m) * m


# Lane-dense padded widths (multiples of 128).
I_PAD = _ceil_to(I_SIZE, _LANE)       # 768
H1 = _ceil_to(H_SIZES[0], _LANE)      # 256
H2 = _ceil_to(H_SIZES[1], _LANE)      # 128
O_PAD = _ceil_to(O_SIZE, _LANE)       # 128

# Rows of the per-layer packed small-operand array (8, 2*o_pad):
_ROW_B_SYN, _ROW_B_GATE, _ROW_U0, _ROW_B0, _ROW_SPK0 = 0, 1, 2, 3, 4


def _gate_and_state_step(l1, wg_f32_ref, pack_ref, state_ref):
    """Output_layer.forward math for one layer at one timestep.

    l1:         (B_pad, o_pad) f32  -- self.syn(x_t), bias already added.
    wg_f32_ref: VMEM f32 (o_pad, 2*o_pad) = [W_Tm | W_Tadp] (x @ W layout).
    pack_ref:   (8, 2*o_pad) f32 packed biases / initial state rows.
    state_ref:  (3, B_pad, o_pad) f32 resident state [u_t, b_t, spk].
    Updates state_ref in place (incl. membrane reset) and returns the spikes.
    """
    o = state_ref.shape[2]
    u = state_ref[0]
    b = state_ref[1]
    spk = state_ref[2]

    w_tm = wg_f32_ref[:, :o]
    w_ta = wg_f32_ref[:, o:]
    b_tm = pack_ref[_ROW_B_GATE:_ROW_B_GATE + 1, :o]
    b_ta = pack_ref[_ROW_B_GATE:_ROW_B_GATE + 1, o:]

    alpha = jax.nn.sigmoid(
        jnp.dot(l1 + u, w_tm, preferred_element_type=jnp.float32) + b_tm)
    rho = jax.nn.sigmoid(
        jnp.dot(l1 + b, w_ta, preferred_element_type=jnp.float32) + b_ta)

    b_new = rho * b + (1.0 - rho) * spk
    thr = THR_MIN + 1.8 * b_new
    u_new = u + (l1 - u) / alpha                   # exact divide (per review)
    s = (u_new - thr > 0.0).astype(jnp.float32)
    state_ref[0] = u_new * (1.0 - s) + U_R * s     # membrane reset (u_r = 0)
    state_ref[1] = b_new
    state_ref[2] = s
    return s


def _lsnn_kernel(x_ref, ws1, wg1, pk1, ws2, wg2, pk2, ws3, wg3, pk3,
                 spk_ref, st1, st2, st3,
                 l1_scr, wg1f, ws2f, wg2f, ws3f, wg3f):
    t = pl.program_id(0)
    b_pad = st1.shape[1]

    @pl.when(t == 0)
    def _init():
        # bf16 weights -> f32 VMEM scratch, once (exact for the 0/1 init).
        wg1f[...] = wg1[...].astype(jnp.float32)
        ws2f[...] = ws2[...].astype(jnp.float32)
        wg2f[...] = wg2[...].astype(jnp.float32)
        ws3f[...] = ws3[...].astype(jnp.float32)
        wg3f[...] = wg3[...].astype(jnp.float32)
        # Hoisted, state-independent layer-1 syn matmul over ALL timesteps.
        l1_scr[...] = (
            jnp.dot(x_ref[...], ws1[...].astype(jnp.float32),
                    preferred_element_type=jnp.float32)
            + pk1[_ROW_B_SYN:_ROW_B_SYN + 1, :ws1.shape[1]])
        # Initialise per-layer state from the packed init rows.
        for st, pk in ((st1, pk1), (st2, pk2), (st3, pk3)):
            o = st.shape[2]
            st[0] = jnp.broadcast_to(pk[_ROW_U0:_ROW_U0 + 1, :o], (b_pad, o))
            st[1] = jnp.broadcast_to(pk[_ROW_B0:_ROW_B0 + 1, :o], (b_pad, o))
            st[2] = jnp.broadcast_to(pk[_ROW_SPK0:_ROW_SPK0 + 1, :o], (b_pad, o))

    # ---- one timestep through the three LSNN layers ----
    row0 = pl.multiple_of(t * b_pad, b_pad)
    l1_1 = l1_scr[pl.ds(row0, b_pad), :]
    s1 = _gate_and_state_step(l1_1, wg1f, pk1, st1)

    l1_2 = (jnp.dot(s1, ws2f[...], preferred_element_type=jnp.float32)
            + pk2[_ROW_B_SYN:_ROW_B_SYN + 1, :st2.shape[2]])
    s2 = _gate_and_state_step(l1_2, wg2f, pk2, st2)

    l1_3 = (jnp.dot(s2, ws3f[...], preferred_element_type=jnp.float32)
            + pk3[_ROW_B_SYN:_ROW_B_SYN + 1, :st3.shape[2]])
    s3 = _gate_and_state_step(l1_3, wg3f, pk3, st3)

    spk_ref[...] = s3


def make_layer_params(i_size, o_size):
    """ones weights / zeros biases / zeros state, padded to (.,128) tiles."""
    i_pad = _ceil_to(i_size, _LANE)
    o_pad = _ceil_to(o_size, _LANE)
    bf16, f32 = jnp.bfloat16, jnp.float32
    w_syn = jnp.zeros((i_pad, o_pad), bf16).at[:i_size, :o_size].set(1.0)
    w_tm = jnp.zeros((o_pad, o_pad), bf16).at[:o_size, :o_size].set(1.0)
    w_tadp = jnp.zeros((o_pad, o_pad), bf16).at[:o_size, :o_size].set(1.0)
    w_gate = jnp.concatenate([w_tm, w_tadp], axis=1)          # (o_pad, 2*o_pad)
    # Packed small operands: row0=b_syn, row1=[b_Tm|b_Tadp], rows2..4=u/b/spk
    # init. All zeros for this module's init but kept general.
    pack = jnp.zeros((_SUBLANE, 2 * o_pad), f32)
    return dict(w_syn=w_syn, w_gate=w_gate, pack=pack)


def make_lsnn_params():
    sizes = (I_SIZE,) + H_SIZES + (O_SIZE,)
    return [make_layer_params(sizes[k], sizes[k + 1]) for k in range(3)]


def _full_spec(shape):
    nd = len(shape)
    return pl.BlockSpec(shape, lambda *_: (0,) * nd)


@jax.jit
def lsnn_forward(x_seq, params):
    """x_seq: (T, B, 700) f32 -> (spikes (T, B, 20), final per-layer state)."""
    t_steps, batch, i_size = x_seq.shape
    b_pad = _ceil_to(batch, _SUBLANE)
    x_pad = jnp.zeros((t_steps, b_pad, I_PAD), jnp.float32)
    x_pad = x_pad.at[:, :batch, :i_size].set(x_seq.astype(jnp.float32))
    x2d = x_pad.reshape(t_steps * b_pad, I_PAD)   # layout for hoisted matmul

    p1, p2, p3 = params
    flat = (x2d,
            p1["w_syn"], p1["w_gate"], p1["pack"],
            p2["w_syn"], p2["w_gate"], p2["pack"],
            p3["w_syn"], p3["w_gate"], p3["pack"])
    in_specs = [_full_spec(a.shape) for a in flat]

    out_shape = (
        jax.ShapeDtypeStruct((t_steps, b_pad, O_PAD), jnp.float32),  # spikes
        jax.ShapeDtypeStruct((3, b_pad, H1), jnp.float32),           # L1 state
        jax.ShapeDtypeStruct((3, b_pad, H2), jnp.float32),           # L2 state
        jax.ShapeDtypeStruct((3, b_pad, O_PAD), jnp.float32),        # L3 state
    )
    out_specs = (
        pl.BlockSpec((None, b_pad, O_PAD), lambda t: (t, 0, 0)),     # per-step
        pl.BlockSpec((3, b_pad, H1), lambda t: (0, 0, 0)),           # resident
        pl.BlockSpec((3, b_pad, H2), lambda t: (0, 0, 0)),
        pl.BlockSpec((3, b_pad, O_PAD), lambda t: (0, 0, 0)),
    )
    scratch_shapes = [
        pltpu.VMEM((t_steps * b_pad, H1), jnp.float32),   # hoisted layer-1 L1
        pltpu.VMEM((H1, 2 * H1), jnp.float32),            # f32 weight copies
        pltpu.VMEM((H1, H2), jnp.float32),
        pltpu.VMEM((H2, 2 * H2), jnp.float32),
        pltpu.VMEM((H2, O_PAD), jnp.float32),
        pltpu.VMEM((O_PAD, 2 * O_PAD), jnp.float32),
    ]

    # Advisory cost estimate (helps XLA schedule around a microsecond call).
    mm = lambda m, k, n: 2 * m * k * n
    flops = (mm(t_steps * b_pad, I_PAD, H1)
             + t_steps * (2 * mm(b_pad, H1, H1)
                          + mm(b_pad, H1, H2) + 2 * mm(b_pad, H2, H2)
                          + mm(b_pad, H2, O_PAD) + 2 * mm(b_pad, O_PAD, O_PAD)))
    transcendentals = t_steps * 2 * b_pad * (H1 + H2 + O_PAD)
    bytes_accessed = (x2d.size * 4
                      + sum(int(a.size) * a.dtype.itemsize for a in flat[1:])
                      + t_steps * b_pad * O_PAD * 4
                      + 3 * b_pad * (H1 + H2 + O_PAD) * 4)

    spk_pad, st1, st2, st3 = pl.pallas_call(
        _lsnn_kernel,
        grid=(t_steps,),
        in_specs=in_specs,
        out_specs=out_specs,
        out_shape=out_shape,
        scratch_shapes=scratch_shapes,
        compiler_params=pltpu.CompilerParams(
            dimension_semantics=("arbitrary",)),
        cost_estimate=pl.CostEstimate(
            flops=int(flops), transcendentals=int(transcendentals),
            bytes_accessed=int(bytes_accessed)),
    )(*flat)

    spikes = spk_pad[:, :batch, :O_SIZE]
    final_state = (st1[:, :batch, :H_SIZES[0]],
                   st2[:, :batch, :H_SIZES[1]],
                   st3[:, :batch, :O_SIZE])
    return spikes, final_state


# ---- pure-JAX f32 reference (unpadded) of the same multi-step recurrence ----
def lsnn_reference(x_seq):
    sizes = (I_SIZE,) + H_SIZES + (O_SIZE,)
    t_steps, batch, _ = x_seq.shape
    f32 = jnp.float32
    hp = jax.lax.Precision.HIGHEST
    state = [dict(u=jnp.zeros((batch, o), f32),
                  b=jnp.zeros((batch, o), f32),
                  spk=jnp.zeros((batch, o), f32)) for o in sizes[1:]]
    outs = []
    for t in range(t_steps):
        h = x_seq[t].astype(f32)
        for k in range(3):
            i_size, o_size = sizes[k], sizes[k + 1]
            st = state[k]
            w_syn = jnp.ones((i_size, o_size), f32)
            w_tm = jnp.ones((o_size, o_size), f32)
            w_ta = jnp.ones((o_size, o_size), f32)
            l1 = jnp.dot(h, w_syn, precision=hp)                   # + b_syn (=0)
            alpha = jax.nn.sigmoid(jnp.dot(l1 + st["u"], w_tm, precision=hp))
            rho = jax.nn.sigmoid(jnp.dot(l1 + st["b"], w_ta, precision=hp))
            b_new = rho * st["b"] + (1.0 - rho) * st["spk"]
            thr = THR_MIN + 1.8 * b_new
            u_new = st["u"] + (l1 - st["u"]) / alpha
            s = (u_new - thr > 0.0).astype(f32)
            st["u"] = u_new * (1.0 - s) + U_R * s
            st["b"] = b_new
            st["spk"] = s
            h = s
        outs.append(h)
    return jnp.stack(outs, axis=0)


if __name__ == "__main__":
    key = jax.random.PRNGKey(0)
    T, B = 8, 2                     # timesteps x batch; LSNN input is fixed at 700
    x_seq = jax.random.normal(key, (T, B, I_SIZE), dtype=jnp.float32)
    params = make_lsnn_params()
    spikes, final_state = lsnn_forward(x_seq, params)
    jax.block_until_ready((spikes, final_state))
    assert spikes.shape == (T, B, O_SIZE) and spikes.dtype == jnp.float32
    ref = lsnn_reference(x_seq)
    assert bool(jnp.array_equal(spikes, ref)), "spike mismatch vs pure-JAX reference"
    print("KERNEL_OK")
</pallas_src>

<mosaic_0001>
module attributes {stable_mosaic.version = 11 : i64} {
  func.func @_lsnn_kernel(%arg0: i32, %arg1: memref<64x768xf32, #tpu.memory_space<vmem>>, %arg2: memref<768x256xbf16, #tpu.memory_space<vmem>>, %arg3: memref<256x512xbf16, #tpu.memory_space<vmem>>, %arg4: memref<8x512xf32, #tpu.memory_space<vmem>>, %arg5: memref<256x128xbf16, #tpu.memory_space<vmem>>, %arg6: memref<128x256xbf16, #tpu.memory_space<vmem>>, %arg7: memref<8x256xf32, #tpu.memory_space<vmem>>, %arg8: memref<128x128xbf16, #tpu.memory_space<vmem>>, %arg9: memref<128x256xbf16, #tpu.memory_space<vmem>>, %arg10: memref<8x256xf32, #tpu.memory_space<vmem>>, %arg11: memref<1x8x128xf32, #tpu.memory_space<vmem>>, %arg12: memref<3x8x256xf32, #tpu.memory_space<vmem>>, %arg13: memref<3x8x128xf32, #tpu.memory_space<vmem>>, %arg14: memref<3x8x128xf32, #tpu.memory_space<vmem>>, %arg15: memref<64x256xf32, #tpu.memory_space<vmem>>, %arg16: memref<256x512xf32, #tpu.memory_space<vmem>>, %arg17: memref<256x128xf32, #tpu.memory_space<vmem>>, %arg18: memref<128x256xf32, #tpu.memory_space<vmem>>, %arg19: memref<128x128xf32, #tpu.memory_space<vmem>>, %arg20: memref<128x256xf32, #tpu.memory_space<vmem>>) attributes {dimension_semantics = [#tpu.dimension_semantics<arbitrary>], iteration_bounds = array<i64: 8>, scalar_prefetch = 0 : i64, scratch_operands = 6 : i64, tpu.core_type = #tpu.core_type<tc>, window_params = [{pipeline_mode = #tpu.pipeline_mode<synchronous>, transform_indices = @transform_0, window_bounds = array<i64: 64, 768>}, {pipeline_mode = #tpu.pipeline_mode<synchronous>, transform_indices = @transform_1, window_bounds = array<i64: 768, 256>}, {pipeline_mode = #tpu.pipeline_mode<synchronous>, transform_indices = @transform_2, window_bounds = array<i64: 256, 512>}, {pipeline_mode = #tpu.pipeline_mode<synchronous>, transform_indices = @transform_3, window_bounds = array<i64: 8, 512>}, {pipeline_mode = #tpu.pipeline_mode<synchronous>, transform_indices = @transform_4, window_bounds = array<i64: 256, 128>}, {pipeline_mode = #tpu.pipeline_mode<synchronous>, transform_indices = @transform_5, window_bounds = array<i64: 128, 256>}, {pipeline_mode = #tpu.pipeline_mode<synchronous>, transform_indices = @transform_6, window_bounds = array<i64: 8, 256>}, {pipeline_mode = #tpu.pipeline_mode<synchronous>, transform_indices = @transform_7, window_bounds = array<i64: 128, 128>}, {pipeline_mode = #tpu.pipeline_mode<synchronous>, transform_indices = @transform_8, window_bounds = array<i64: 128, 256>}, {pipeline_mode = #tpu.pipeline_mode<synchronous>, transform_indices = @transform_9, window_bounds = array<i64: 8, 256>}, {transform_indices = @transform_10, window_bounds = array<i64: 1, 8, 128>}, {pipeline_mode = #tpu.pipeline_mode<synchronous>, transform_indices = @transform_11, window_bounds = array<i64: 3, 8, 256>}, {pipeline_mode = #tpu.pipeline_mode<synchronous>, transform_indices = @transform_12, window_bounds = array<i64: 3, 8, 128>}, {pipeline_mode = #tpu.pipeline_mode<synchronous>, transform_indices = @transform_13, window_bounds = array<i64: 3, 8, 128>}]} {
    %c0_i32 = arith.constant 0 : i32
    %0 = arith.cmpi eq, %arg0, %c0_i32 : i32
    %1 = arith.extui %0 : i1 to i32
    %c0_i32_0 = arith.constant 0 : i32
    %2 = arith.cmpi ne, %1, %c0_i32_0 : i32
    scf.if %2 {
      %c0_117 = arith.constant 0 : index
      %c0_118 = arith.constant 0 : index
      %200 = vector.load %arg3[%c0_117, %c0_118] : memref<256x512xbf16, #tpu.memory_space<vmem>>, vector<256x512xbf16>
      %201 = arith.extf %200 : vector<256x512xbf16> to vector<256x512xf32>
      %c0_119 = arith.constant 0 : index
      %c0_120 = arith.constant 0 : index
      %202 = vector.load %arg16[%c0_119, %c0_120] : memref<256x512xf32, #tpu.memory_space<vmem>>, vector<256x512xf32>
      tpu.vector_store %arg16[%c0_119, %c0_120], %201 {strides = array<i32>} : memref<256x512xf32, #tpu.memory_space<vmem>>, vector<256x512xf32>,
      %c0_121 = arith.constant 0 : index
      %c0_122 = arith.constant 0 : index
      %203 = vector.load %arg5[%c0_121, %c0_122] : memref<256x128xbf16, #tpu.memory_space<vmem>>, vector<256x128xbf16>
      %204 = arith.extf %203 : vector<256x128xbf16> to vector<256x128xf32>
      %c0_123 = arith.constant 0 : index
      %c0_124 = arith.constant 0 : index
      %205 = vector.load %arg17[%c0_123, %c0_124] : memref<256x128xf32, #tpu.memory_space<vmem>>, vector<256x128xf32>
      tpu.vector_store %arg17[%c0_123, %c0_124], %204 {strides = array<i32>} : memref<256x128xf32, #tpu.memory_space<vmem>>, vector<256x128xf32>,
      %c0_125 = arith.constant 0 : index
      %c0_126 = arith.constant 0 : index
      %206 = vector.load %arg6[%c0_125, %c0_126] : memref<128x256xbf16, #tpu.memory_space<vmem>>, vector<128x256xbf16>
      %207 = arith.extf %206 : vector<128x256xbf16> to vector<128x256xf32>
      %c0_127 = arith.constant 0 : index
      %c0_128 = arith.constant 0 : index
      %208 = vector.load %arg18[%c0_127, %c0_128] : memref<128x256xf32, #tpu.memory_space<vmem>>, vector<128x256xf32>
      tpu.vector_store %arg18[%c0_127, %c0_128], %207 {strides = array<i32>} : memref<128x256xf32, #tpu.memory_space<vmem>>, vector<128x256xf32>,
      %c0_129 = arith.constant 0 : index
      %c0_130 = arith.constant 0 : index
      %209 = vector.load %arg8[%c0_129, %c0_130] : memref<128x128xbf16, #tpu.memory_space<vmem>>, vector<128x128xbf16>
      %210 = arith.extf %209 : vector<128x128xbf16> to vector<128x128xf32>
      %c0_131 = arith.constant 0 : index
      %c0_132 = arith.constant 0 : index
      %211 = vector.load %arg19[%c0_131, %c0_132] : memref<128x128xf32, #tpu.memory_space<vmem>>, vector<128x128xf32>
      tpu.vector_store %arg19[%c0_131, %c0_132], %210 {strides = array<i32>} : memref<128x128xf32, #tpu.memory_space<vmem>>, vector<128x128xf32>,
      %c0_133 = arith.constant 0 : index
      %c0_134 = arith.constant 0 : index
      %212 = vector.load %arg9[%c0_133, %c0_134] : memref<128x256xbf16, #tpu.memory_space<vmem>>, vector<128x256xbf16>
      %213 = arith.extf %212 : vector<128x256xbf16> to vector<128x256xf32>
      %c0_135 = arith.constant 0 : index
      %c0_136 = arith.constant 0 : index
      %214 = vector.load %arg20[%c0_135, %c0_136] : memref<128x256xf32, #tpu.memory_space<vmem>>, vector<128x256xf32>
      tpu.vector_store %arg20[%c0_135, %c0_136], %213 {strides = array<i32>} : memref<128x256xf32, #tpu.memory_space<vmem>>, vector<128x256xf32>,
      %c0_137 = arith.constant 0 : index
      %c0_138 = arith.constant 0 : index
      %215 = vector.load %arg1[%c0_137, %c0_138] : memref<64x768xf32, #tpu.memory_space<vmem>>, vector<64x768xf32>
      %c0_139 = arith.constant 0 : index
      %c0_140 = arith.constant 0 : index
      %216 = vector.load %arg2[%c0_139, %c0_140] : memref<768x256xbf16, #tpu.memory_space<vmem>>, vector<768x256xbf16>
      %217 = arith.extf %216 : vector<768x256xbf16> to vector<768x256xf32>
      %cst_141 = arith.constant dense<0.000000e+00> : vector<64x256xf32>
      %218 = tpu.matmul %215, %217, %cst_141 {dimension_numbers = #tpu.dot_dimension_numbers<[1], [0], [0], [1], [0, 0, 1, 1], [], []>} : vector<64x768xf32>, vector<768x256xf32>, vector<64x256xf32> -> vector<64x256xf32>
      %c0_142 = arith.constant 0 : index
      %c0_143 = arith.constant 0 : index
      %219 = vector.load %arg4[%c0_142, %c0_143] : memref<8x512xf32, #tpu.memory_space<vmem>>, vector<1x256xf32>
      %220 = vector.broadcast %219 : vector<1x256xf32> to vector<64x256xf32>
      %221 = arith.addf %218, %220 : vector<64x256xf32>
      %c0_144 = arith.constant 0 : index
      %c0_145 = arith.constant 0 : index
      %222 = vector.load %arg15[%c0_144, %c0_145] : memref<64x256xf32, #tpu.memory_space<vmem>>, vector<64x256xf32>
      tpu.vector_store %arg15[%c0_144, %c0_145], %221 {strides = array<i32>} : memref<64x256xf32, #tpu.memory_space<vmem>>, vector<64x256xf32>,
      %c2_146 = arith.constant 2 : index
      %c0_147 = arith.constant 0 : index
      %223 = vector.load %arg4[%c2_146, %c0_147] : memref<8x512xf32, #tpu.memory_space<vmem>>, vector<1x256xf32>
      %224 = vector.shape_cast %223 : vector<1x256xf32> to vector<1x256xf32>
      %225 = vector.broadcast %224 : vector<1x256xf32> to vector<8x256xf32>
      %c0_148 = arith.constant 0 : index
      %c0_149 = arith.constant 0 : index
      %c0_150 = arith.constant 0 : index
      %226 = vector.load %arg12[%c0_148, %c0_149, %c0_150] : memref<3x8x256xf32, #tpu.memory_space<vmem>>, vector<1x8x256xf32>
      %227 = vector.shape_cast %226 : vector<1x8x256xf32> to vector<8x256xf32>
      %228 = vector.shape_cast %225 : vector<8x256xf32> to vector<1x8x256xf32>
      tpu.vector_store %arg12[%c0_148, %c0_149, %c0_150], %228 {strides = array<i32>} : memref<3x8x256xf32, #tpu.memory_space<vmem>>, vector<1x8x256xf32>,
      %c3 = arith.constant 3 : index
      %c0_151 = arith.constant 0 : index
      %229 = vector.load %arg4[%c3, %c0_151] : memref<8x512xf32, #tpu.memory_space<vmem>>, vector<1x256xf32>
      %230 = vector.shape_cast %229 : vector<1x256xf32> to vector<1x256xf32>
      %231 = vector.broadcast %230 : vector<1x256xf32> to vector<8x256xf32>
      %c1_152 = arith.constant 1 : index
      %c0_153 = arith.constant 0 : index
      %c0_154 = arith.constant 0 : index
      %232 = vector.load %arg12[%c1_152, %c0_153, %c0_154] : memref<3x8x256xf32, #tpu.memory_space<vmem>>, vector<1x8x256xf32>
      %233 = vector.shape_cast %232 : vector<1x8x256xf32> to vector<8x256xf32>
      %234 = vector.shape_cast %231 : vector<8x256xf32> to vector<1x8x256xf32>
      tpu.vector_store %arg12[%c1_152, %c0_153, %c0_154], %234 {strides = array<i32>} : memref<3x8x256xf32, #tpu.memory_space<vmem>>, vector<1x8x256xf32>,
      %c4 = arith.constant 4 : index
      %c0_155 = arith.constant 0 : index
      %235 = vector.load %arg4[%c4, %c0_155] : memref<8x512xf32, #tpu.memory_space<vmem>>, vector<1x256xf32>
      %236 = vector.shape_cast %235 : vector<1x256xf32> to vector<1x256xf32>
      %237 = vector.broadcast %236 : vector<1x256xf32> to vector<8x256xf32>
      %c2_156 = arith.constant 2 : index
      %c0_157 = arith.constant 0 : index
      %c0_158 = arith.constant 0 : index
      %238 = vector.load %arg12[%c2_156, %c0_157, %c0_158] : memref<3x8x256xf32, #tpu.memory_space<vmem>>, vector<1x8x256xf32>
      %239 = vector.shape_cast %238 : vector<1x8x256xf32> to vector<8x256xf32>
      %240 = vector.shape_cast %237 : vector<8x256xf32> to vector<1x8x256xf32>
      tpu.vector_store %arg12[%c2_156, %c0_157, %c0_158], %240 {strides = array<i32>} : memref<3x8x256xf32, #tpu.memory_space<vmem>>, vector<1x8x256xf32>,
      %c2_159 = arith.constant 2 : index
      %c0_160 = arith.constant 0 : index
      %241 = vector.load %arg7[%c2_159, %c0_160] : memref<8x256xf32, #tpu.memory_space<vmem>>, vector<1x128xf32>
      %242 = vector.shape_cast %241 : vector<1x128xf32> to vector<1x128xf32>
      %243 = vector.broadcast %242 : vector<1x128xf32> to vector<8x128xf32>
      %c0_161 = arith.constant 0 : index
      %c0_162 = arith.constant 0 : index
      %c0_163 = arith.constant 0 : index
      %244 = vector.load %arg13[%c0_161, %c0_162, %c0_163] : memref<3x8x128xf32, #tpu.memory_space<vmem>>, vector<1x8x128xf32>
      %245 = vector.shape_cast %244 : vector<1x8x128xf32> to vector<8x128xf32>
      %246 = vector.shape_cast %243 : vector<8x128xf32> to vector<1x8x128xf32>
      tpu.vector_store %arg13[%c0_161, %c0_162, %c0_163], %246 {strides = array<i32>} : memref<3x8x128xf32, #tpu.memory_space<vmem>>, vector<1x8x128xf32>,
      %c3_164 = arith.constant 3 : index
      %c0_165 = arith.constant 0 : index
      %247 = vector.load %arg7[%c3_164, %c0_165] : memref<8x256xf32, #tpu.memory_space<vmem>>, vector<1x128xf32>
      %248 = vector.shape_cast %247 : vector<1x128xf32> to vector<1x128xf32>
      %249 = vector.broadcast %248 : vector<1x128xf32> to vector<8x128xf32>
      %c1_166 = arith.constant 1 : index
      %c0_167 = arith.constant 0 : index
      %c0_168 = arith.constant 0 : index
      %250 = vector.load %arg13[%c1_166, %c0_167, %c0_168] : memref<3x8x128xf32, #tpu.memory_space<vmem>>, vector<1x8x128xf32>
      %251 = vector.shape_cast %250 : vector<1x8x128xf32> to vector<8x128xf32>
      %252 = vector.shape_cast %249 : vector<8x128xf32> to vector<1x8x128xf32>
      tpu.vector_store %arg13[%c1_166, %c0_167, %c0_168], %252 {strides = array<i32>} : memref<3x8x128xf32, #tpu.memory_space<vmem>>, vector<1x8x128xf32>,
      %c4_169 = arith.constant 4 : index
      %c0_170 = arith.constant 0 : index
      %253 = vector.load %arg7[%c4_169, %c0_170] : memref<8x256xf32, #tpu.memory_space<vmem>>, vector<1x128xf32>
      %254 = vector.shape_cast %253 : vector<1x128xf32> to vector<1x128xf32>
      %255 = vector.broadcast %254 : vector<1x128xf32> to vector<8x128xf32>
      %c2_171 = arith.constant 2 : index
      %c0_172 = arith.constant 0 : index
      %c0_173 = arith.constant 0 : index
      %256 = vector.load %arg13[%c2_171, %c0_172, %c0_173] : memref<3x8x128xf32, #tpu.memory_space<vmem>>, vector<1x8x128xf32>
      %257 = vector.shape_cast %256 : vector<1x8x128xf32> to vector<8x128xf32>
      %258 = vector.shape_cast %255 : vector<8x128xf32> to vector<1x8x128xf32>
      tpu.vector_store %arg13[%c2_171, %c0_172, %c0_173], %258 {strides = array<i32>} : memref<3x8x128xf32, #tpu.memory_space<vmem>>, vector<1x8x128xf32>,
      %c2_174 = arith.constant 2 : index
      %c0_175 = arith.constant 0 : index
      %259 = vector.load %arg10[%c2_174, %c0_175] : memref<8x256xf32, #tpu.memory_space<vmem>>, vector<1x128xf32>
      %260 = vector.shape_cast %259 : vector<1x128xf32> to vector<1x128xf32>
      %261 = vector.broadcast %260 : vector<1x128xf32> to vector<8x128xf32>
      %c0_176 = arith.constant 0 : index
      %c0_177 = arith.constant 0 : index
      %c0_178 = arith.constant 0 : index
      %262 = vector.load %arg14[%c0_176, %c0_177, %c0_178] : memref<3x8x128xf32, #tpu.memory_space<vmem>>, vector<1x8x128xf32>
      %263 = vector.shape_cast %262 : vector<1x8x128xf32> to vector<8x128xf32>
      %264 = vector.shape_cast %261 : vector<8x128xf32> to vector<1x8x128xf32>
      tpu.vector_store %arg14[%c0_176, %c0_177, %c0_178], %264 {strides = array<i32>} : memref<3x8x128xf32, #tpu.memory_space<vmem>>, vector<1x8x128xf32>,
      %c3_179 = arith.constant 3 : index
      %c0_180 = arith.constant 0 : index
      %265 = vector.load %arg10[%c3_179, %c0_180] : memref<8x256xf32, #tpu.memory_space<vmem>>, vector<1x128xf32>
      %266 = vector.shape_cast %265 : vector<1x128xf32> to vector<1x128xf32>
      %267 = vector.broadcast %266 : vector<1x128xf32> to vector<8x128xf32>
      %c1_181 = arith.constant 1 : index
      %c0_182 = arith.constant 0 : index
      %c0_183 = arith.constant 0 : index
      %268 = vector.load %arg14[%c1_181, %c0_182, %c0_183] : memref<3x8x128xf32, #tpu.memory_space<vmem>>, vector<1x8x128xf32>
      %269 = vector.shape_cast %268 : vector<1x8x128xf32> to vector<8x128xf32>
      %270 = vector.shape_cast %267 : vector<8x128xf32> to vector<1x8x128xf32>
      tpu.vector_store %arg14[%c1_181, %c0_182, %c0_183], %270 {strides = array<i32>} : memref<3x8x128xf32, #tpu.memory_space<vmem>>, vector<1x8x128xf32>,
      %c4_184 = arith.constant 4 : index
      %c0_185 = arith.constant 0 : index
      %271 = vector.load %arg10[%c4_184, %c0_185] : memref<8x256xf32, #tpu.memory_space<vmem>>, vector<1x128xf32>
      %272 = vector.shape_cast %271 : vector<1x128xf32> to vector<1x128xf32>
      %273 = vector.broadcast %272 : vector<1x128xf32> to vector<8x128xf32>
      %c2_186 = arith.constant 2 : index
      %c0_187 = arith.constant 0 : index
      %c0_188 = arith.constant 0 : index
      %274 = vector.load %arg14[%c2_186, %c0_187, %c0_188] : memref<3x8x128xf32, #tpu.memory_space<vmem>>, vector<1x8x128xf32>
      %275 = vector.shape_cast %274 : vector<1x8x128xf32> to vector<8x128xf32>
      %276 = vector.shape_cast %273 : vector<8x128xf32> to vector<1x8x128xf32>
      tpu.vector_store %arg14[%c2_186, %c0_187, %c0_188], %276 {strides = array<i32>} : memref<3x8x128xf32, #tpu.memory_space<vmem>>, vector<1x8x128xf32>,
    } else {
    }
    %c8_i32 = arith.constant 8 : i32
    %3 = arith.muli %arg0, %c8_i32 : i32
    %4 = tpu.assume_multiple %3, 8 : i32
    %5 = arith.index_cast %4 : i32 to index
    %c0 = arith.constant 0 : index
    %6 = vector.load %arg15[%5, %c0] : memref<64x256xf32, #tpu.memory_space<vmem>>, vector<8x256xf32>
    %c0_1 = arith.constant 0 : index
    %c0_2 = arith.constant 0 : index
    %c0_3 = arith.constant 0 : index
    %7 = vector.load %arg12[%c0_1, %c0_2, %c0_3] : memref<3x8x256xf32, #tpu.memory_space<vmem>>, vector<1x8x256xf32>
    %8 = vector.shape_cast %7 : vector<1x8x256xf32> to vector<8x256xf32>
    %c1 = arith.constant 1 : index
    %c0_4 = arith.constant 0 : index
    %c0_5 = arith.constant 0 : index
    %9 = vector.load %arg12[%c1, %c0_4, %c0_5] : memref<3x8x256xf32, #tpu.memory_space<vmem>>, vector<1x8x256xf32>
    %10 = vector.shape_cast %9 : vector<1x8x256xf32> to vector<8x256xf32>
    %c2 = arith.constant 2 : index
    %c0_6 = arith.constant 0 : index
    %c0_7 = arith.constant 0 : index
    %11 = vector.load %arg12[%c2, %c0_6, %c0_7] : memref<3x8x256xf32, #tpu.memory_space<vmem>>, vector<1x8x256xf32>
    %12 = vector.shape_cast %11 : vector<1x8x256xf32> to vector<8x256xf32>
    %c0_8 = arith.constant 0 : index
    %c0_9 = arith.constant 0 : index
    %13 = vector.load %arg16[%c0_8, %c0_9] : memref<256x512xf32, #tpu.memory_space<vmem>>, vector<256x256xf32>
    %c0_10 = arith.constant 0 : index
    %c256 = arith.constant 256 : index
    %14 = vector.load %arg16[%c0_10, %c256] : memref<256x512xf32, #tpu.memory_space<vmem>>, vector<256x256xf32>
    %c1_11 = arith.constant 1 : index
    %c0_12 = arith.constant 0 : index
    %15 = vector.load %arg4[%c1_11, %c0_12] : memref<8x512xf32, #tpu.memory_space<vmem>>, vector<1x256xf32>
    %c1_13 = arith.constant 1 : index
    %c256_14 = arith.constant 256 : index
    %16 = vector.load %arg4[%c1_13, %c256_14] : memref<8x512xf32, #tpu.memory_space<vmem>>, vector<1x256xf32>
    %17 = arith.addf %6, %8 : vector<8x256xf32>
    %cst = arith.constant dense<0.000000e+00> : vector<8x256xf32>
    %18 = tpu.matmul %17, %13, %cst {dimension_numbers = #tpu.dot_dimension_numbers<[1], [0], [0], [1], [0, 0, 1, 1], [], []>} : vector<8x256xf32>, vector<256x256xf32>, vector<8x256xf32> -> vector<8x256xf32>
    %19 = vector.broadcast %15 : vector<1x256xf32> to vector<8x256xf32>
    %20 = arith.addf %18, %19 : vector<8x256xf32>
    %21 = arith.negf %20 : vector<8x256xf32>
    %22 = math.exp %21 : vector<8x256xf32>
    %cst_15 = arith.constant 1.000000e+00 : f32
    %23 = vector.broadcast %cst_15 : f32 to vector<8x256xf32>
    %24 = arith.addf %23, %22 : vector<8x256xf32>
    %25 = arith.divf %23, %24 : vector<8x256xf32>
    %26 = arith.addf %6, %10 : vector<8x256xf32>
    %cst_16 = arith.constant dense<0.000000e+00> : vector<8x256xf32>
    %27 = tpu.matmul %26, %14, %cst_16 {dimension_numbers = #tpu.dot_dimension_numbers<[1], [0], [0], [1], [0, 0, 1, 1], [], []>} : vector<8x256xf32>, vector<256x256xf32>, vector<8x256xf32> -> vector<8x256xf32>
    %28 = vector.broadcast %16 : vector<1x256xf32> to vector<8x256xf32>
    %29 = arith.addf %27, %28 : vector<8x256xf32>
    %30 = arith.negf %29 : vector<8x256xf32>
    %31 = math.exp %30 : vector<8x256xf32>
    %cst_17 = arith.constant 1.000000e+00 : f32
    %32 = vector.broadcast %cst_17 : f32 to vector<8x256xf32>
    %33 = arith.addf %32, %31 : vector<8x256xf32>
    %34 = arith.divf %32, %33 : vector<8x256xf32>
    %35 = arith.mulf %34, %10 : vector<8x256xf32>
    %cst_18 = arith.constant 1.000000e+00 : f32
    %36 = vector.broadcast %cst_18 : f32 to vector<8x256xf32>
    %37 = arith.subf %36, %34 : vector<8x256xf32>
    %38 = arith.mulf %37, %12 : vector<8x256xf32>
    %39 = arith.addf %35, %38 : vector<8x256xf32>
    %cst_19 = arith.constant 1.800000e+00 : f32
    %40 = vector.broadcast %cst_19 : f32 to vector<8x256xf32>
    %41 = arith.mulf %40, %39 : vector<8x256xf32>
    %cst_20 = arith.constant 1.000000e-01 : f32
    %42 = vector.broadcast %cst_20 : f32 to vector<8x256xf32>
    %43 = arith.addf %42, %41 : vector<8x256xf32>
    %44 = arith.subf %6, %8 : vector<8x256xf32>
    %45 = arith.divf %44, %25 : vector<8x256xf32>
    %46 = arith.addf %8, %45 : vector<8x256xf32>
    %47 = arith.subf %46, %43 : vector<8x256xf32>
    %cst_21 = arith.constant 0.000000e+00 : f32
    %48 = vector.broadcast %cst_21 : f32 to vector<8x256xf32>
    %49 = arith.cmpf ogt, %47, %48 : vector<8x256xf32>
    %50 = arith.extui %49 : vector<8x256xi1> to vector<8x256xi32>
    %51 = arith.sitofp %50 : vector<8x256xi32> to vector<8x256xf32>
    %cst_22 = arith.constant 1.000000e+00 : f32
    %52 = vector.broadcast %cst_22 : f32 to vector<8x256xf32>
    %53 = arith.subf %52, %51 : vector<8x256xf32>
    %54 = arith.mulf %46, %53 : vector<8x256xf32>
    %cst_23 = arith.constant 0.000000e+00 : f32
    %55 = vector.broadcast %cst_23 : f32 to vector<8x256xf32>
    %56 = arith.mulf %55, %51 : vector<8x256xf32>
    %57 = arith.addf %54, %56 : vector<8x256xf32>
    %c0_24 = arith.constant 0 : index
    %c0_25 = arith.constant 0 : index
    %c0_26 = arith.constant 0 : index
    %58 = vector.load %arg12[%c0_24, %c0_25, %c0_26] : memref<3x8x256xf32, #tpu.memory_space<vmem>>, vector<1x8x256xf32>
    %59 = vector.shape_cast %58 : vector<1x8x256xf32> to vector<8x256xf32>
    %60 = vector.shape_cast %57 : vector<8x256xf32> to vector<1x8x256xf32>
    tpu.vector_store %arg12[%c0_24, %c0_25, %c0_26], %60 {strides = array<i32>} : memref<3x8x256xf32, #tpu.memory_space<vmem>>, vector<1x8x256xf32>,
    %c1_27 = arith.constant 1 : index
    %c0_28 = arith.constant 0 : index
    %c0_29 = arith.constant 0 : index
    %61 = vector.load %arg12[%c1_27, %c0_28, %c0_29] : memref<3x8x256xf32, #tpu.memory_space<vmem>>, vector<1x8x256xf32>
    %62 = vector.shape_cast %61 : vector<1x8x256xf32> to vector<8x256xf32>
    %63 = vector.shape_cast %39 : vector<8x256xf32> to vector<1x8x256xf32>
    tpu.vector_store %arg12[%c1_27, %c0_28, %c0_29], %63 {strides = array<i32>} : memref<3x8x256xf32, #tpu.memory_space<vmem>>, vector<1x8x256xf32>,
    %c2_30 = arith.constant 2 : index
    %c0_31 = arith.constant 0 : index
    %c0_32 = arith.constant 0 : index
    %64 = vector.load %arg12[%c2_30, %c0_31, %c0_32] : memref<3x8x256xf32, #tpu.memory_space<vmem>>, vector<1x8x256xf32>
    %65 = vector.shape_cast %64 : vector<1x8x256xf32> to vector<8x256xf32>
    %66 = vector.shape_cast %51 : vector<8x256xf32> to vector<1x8x256xf32>
    tpu.vector_store %arg12[%c2_30, %c0_31, %c0_32], %66 {strides = array<i32>} : memref<3x8x256xf32, #tpu.memory_space<vmem>>, vector<1x8x256xf32>,
    %c0_33 = arith.constant 0 : index
    %c0_34 = arith.constant 0 : index
    %67 = vector.load %arg17[%c0_33, %c0_34] : memref<256x128xf32, #tpu.memory_space<vmem>>, vector<256x128xf32>
    %cst_35 = arith.constant dense<0.000000e+00> : vector<8x128xf32>
    %68 = tpu.matmul %51, %67, %cst_35 {dimension_numbers = #tpu.dot_dimension_numbers<[1], [0], [0], [1], [0, 0, 1, 1], [], []>} : vector<8x256xf32>, vector<256x128xf32>, vector<8x128xf32> -> vector<8x128xf32>
    %c0_36 = arith.constant 0 : index
    %c0_37 = arith.constant 0 : index
    %69 = vector.load %arg7[%c0_36, %c0_37] : memref<8x256xf32, #tpu.memory_space<vmem>>, vector<1x128xf32>
    %70 = vector.broadcast %69 : vector<1x128xf32> to vector<8x128xf32>
    %71 = arith.addf %68, %70 : vector<8x128xf32>
    %c0_38 = arith.constant 0 : index
    %c0_39 = arith.constant 0 : index
    %c0_40 = arith.constant 0 : index
    %72 = vector.load %arg13[%c0_38, %c0_39, %c0_40] : memref<3x8x128xf32, #tpu.memory_space<vmem>>, vector<1x8x128xf32>
    %73 = vector.shape_cast %72 : vector<1x8x128xf32> to vector<8x128xf32>
    %c1_41 = arith.constant 1 : index
    %c0_42 = arith.constant 0 : index
    %c0_43 = arith.constant 0 : index
    %74 = vector.load %arg13[%c1_41, %c0_42, %c0_43] : memref<3x8x128xf32, #tpu.memory_space<vmem>>, vector<1x8x128xf32>
    %75 = vector.shape_cast %74 : vector<1x8x128xf32> to vector<8x128xf32>
    %c2_44 = arith.constant 2 : index
    %c0_45 = arith.constant 0 : index
    %c0_46 = arith.constant 0 : index
    %76 = vector.load %arg13[%c2_44, %c0_45, %c0_46] : memref<3x8x128xf32, #tpu.memory_space<vmem>>, vector<1x8x128xf32>
    %77 = vector.shape_cast %76 : vector<1x8x128xf32> to vector<8x128xf32>
    %c0_47 = arith.constant 0 : index
    %c0_48 = arith.constant 0 : index
    %78 = vector.load %arg18[%c0_47, %c0_48] : memref<128x256xf32, #tpu.memory_space<vmem>>, vector<128x128xf32>
    %c0_49 = arith.constant 0 : index
    %c128 = arith.constant 128 : index
    %79 = vector.load %arg18[%c0_49, %c128] : memref<128x256xf32, #tpu.memory_space<vmem>>, vector<128x128xf32>
    %c1_50 = arith.constant 1 : index
    %c0_51 = arith.constant 0 : index
    %80 = vector.load %arg7[%c1_50, %c0_51] : memref<8x256xf32, #tpu.memory_space<vmem>>, vector<1x128xf32>
    %c1_52 = arith.constant 1 : index
    %c128_53 = arith.constant 128 : index
    %81 = vector.load %arg7[%c1_52, %c128_53] : memref<8x256xf32, #tpu.memory_space<vmem>>, vector<1x128xf32>
    %82 = arith.addf %71, %73 : vector<8x128xf32>
    %cst_54 = arith.constant dense<0.000000e+00> : vector<8x128xf32>
    %83 = tpu.matmul %82, %78, %cst_54 {dimension_numbers = #tpu.dot_dimension_numbers<[1], [0], [0], [1], [0, 0, 1, 1], [], []>} : vector<8x128xf32>, vector<128x128xf32>, vector<8x128xf32> -> vector<8x128xf32>
    %84 = vector.broadcast %80 : vector<1x128xf32> to vector<8x128xf32>
    %85 = arith.addf %83, %84 : vector<8x128xf32>
    %86 = arith.negf %85 : vector<8x128xf32>
    %87 = math.exp %86 : vector<8x128xf32>
    %cst_55 = arith.constant 1.000000e+00 : f32
    %88 = vector.broadcast %cst_55 : f32 to vector<8x128xf32>
    %89 = arith.addf %88, %87 : vector<8x128xf32>
    %90 = arith.divf %88, %89 : vector<8x128xf32>
    %91 = arith.addf %71, %75 : vector<8x128xf32>
    %cst_56 = arith.constant dense<0.000000e+00> : vector<8x128xf32>
    %92 = tpu.matmul %91, %79, %cst_56 {dimension_numbers = #tpu.dot_dimension_numbers<[1], [0], [0], [1], [0, 0, 1, 1], [], []>} : vector<8x128xf32>, vector<128x128xf32>, vector<8x128xf32> -> vector<8x128xf32>
    %93 = vector.broadcast %81 : vector<1x128xf32> to vector<8x128xf32>
    %94 = arith.addf %92, %93 : vector<8x128xf32>
    %95 = arith.negf %94 : vector<8x128xf32>
    %96 = math.exp %95 : vector<8x128xf32>
    %cst_57 = arith.constant 1.000000e+00 : f32
    %97 = vector.broadcast %cst_57 : f32 to vector<8x128xf32>
    %98 = arith.addf %97, %96 : vector<8x128xf32>
    %99 = arith.divf %97, %98 : vector<8x128xf32>
    %100 = arith.mulf %99, %75 : vector<8x128xf32>
    %cst_58 = arith.constant 1.000000e+00 : f32
    %101 = vector.broadcast %cst_58 : f32 to vector<8x128xf32>
    %102 = arith.subf %101, %99 : vector<8x128xf32>
    %103 = arith.mulf %102, %77 : vector<8x128xf32>
    %104 = arith.addf %100, %103 : vector<8x128xf32>
    %cst_59 = arith.constant 1.800000e+00 : f32
    %105 = vector.broadcast %cst_59 : f32 to vector<8x128xf32>
    %106 = arith.mulf %105, %104 : vector<8x128xf32>
    %cst_60 = arith.constant 1.000000e-01 : f32
    %107 = vector.broadcast %cst_60 : f32 to vector<8x128xf32>
    %108 = arith.addf %107, %106 : vector<8x128xf32>
    %109 = arith.subf %71, %73 : vector<8x128xf32>
    %110 = arith.divf %109, %90 : vector<8x128xf32>
    %111 = arith.addf %73, %110 : vector<8x128xf32>
    %112 = arith.subf %111, %108 : vector<8x128xf32>
    %cst_61 = arith.constant 0.000000e+00 : f32
    %113 = vector.broadcast %cst_61 : f32 to vector<8x128xf32>
    %114 = arith.cmpf ogt, %112, %113 : vector<8x128xf32>
    %115 = arith.extui %114 : vector<8x128xi1> to vector<8x128xi32>
    %116 = arith.sitofp %115 : vector<8x128xi32> to vector<8x128xf32>
    %cst_62 = arith.constant 1.000000e+00 : f32
    %117 = vector.broadcast %cst_62 : f32 to vector<8x128xf32>
    %118 = arith.subf %117, %116 : vector<8x128xf32>
    %119 = arith.mulf %111, %118 : vector<8x128xf32>
    %cst_63 = arith.constant 0.000000e+00 : f32
    %120 = vector.broadcast %cst_63 : f32 to vector<8x128xf32>
    %121 = arith.mulf %120, %116 : vector<8x128xf32>
    %122 = arith.addf %119, %121 : vector<8x128xf32>
    %c0_64 = arith.constant 0 : index
    %c0_65 = arith.constant 0 : index
    %c0_66 = arith.constant 0 : index
    %123 = vector.load %arg13[%c0_64, %c0_65, %c0_66] : memref<3x8x128xf32, #tpu.memory_space<vmem>>, vector<1x8x128xf32>
    %124 = vector.shape_cast %123 : vector<1x8x128xf32> to vector<8x128xf32>
    %125 = vector.shape_cast %122 : vector<8x128xf32> to vector<1x8x128xf32>
    tpu.vector_store %arg13[%c0_64, %c0_65, %c0_66], %125 {strides = array<i32>} : memref<3x8x128xf32, #tpu.memory_space<vmem>>, vector<1x8x128xf32>,
    %c1_67 = arith.constant 1 : index
    %c0_68 = arith.constant 0 : index
    %c0_69 = arith.constant 0 : index
    %126 = vector.load %arg13[%c1_67, %c0_68, %c0_69] : memref<3x8x128xf32, #tpu.memory_space<vmem>>, vector<1x8x128xf32>
    %127 = vector.shape_cast %126 : vector<1x8x128xf32> to vector<8x128xf32>
    %128 = vector.shape_cast %104 : vector<8x128xf32> to vector<1x8x128xf32>
    tpu.vector_store %arg13[%c1_67, %c0_68, %c0_69], %128 {strides = array<i32>} : memref<3x8x128xf32, #tpu.memory_space<vmem>>, vector<1x8x128xf32>,
    %c2_70 = arith.constant 2 : index
    %c0_71 = arith.constant 0 : index
    %c0_72 = arith.constant 0 : index
    %129 = vector.load %arg13[%c2_70, %c0_71, %c0_72] : memref<3x8x128xf32, #tpu.memory_space<vmem>>, vector<1x8x128xf32>
    %130 = vector.shape_cast %129 : vector<1x8x128xf32> to vector<8x128xf32>
    %131 = vector.shape_cast %116 : vector<8x128xf32> to vector<1x8x128xf32>
    tpu.vector_store %arg13[%c2_70, %c0_71, %c0_72], %131 {strides = array<i32>} : memref<3x8x128xf32, #tpu.memory_space<vmem>>, vector<1x8x128xf32>,
    %c0_73 = arith.constant 0 : index
    %c0_74 = arith.constant 0 : index
    %132 = vector.load %arg19[%c0_73, %c0_74] : memref<128x128xf32, #tpu.memory_space<vmem>>, vector<128x128xf32>
    %cst_75 = arith.constant dense<0.000000e+00> : vector<8x128xf32>
    %133 = tpu.matmul %116, %132, %cst_75 {dimension_numbers = #tpu.dot_dimension_numbers<[1], [0], [0], [1], [0, 0, 1, 1], [], []>} : vector<8x128xf32>, vector<128x128xf32>, vector<8x128xf32> -> vector<8x128xf32>
    %c0_76 = arith.constant 0 : index
    %c0_77 = arith.constant 0 : index
    %134 = vector.load %arg10[%c0_76, %c0_77] : memref<8x256xf32, #tpu.memory_space<vmem>>, vector<1x128xf32>
    %135 = vector.broadcast %134 : vector<1x128xf32> to vector<8x128xf32>
    %136 = arith.addf %133, %135 : vector<8x128xf32>
    %c0_78 = arith.constant 0 : index
    %c0_79 = arith.constant 0 : index
    %c0_80 = arith.constant 0 : index
    %137 = vector.load %arg14[%c0_78, %c0_79, %c0_80] : memref<3x8x128xf32, #tpu.memory_space<vmem>>, vector<1x8x128xf32>
    %138 = vector.shape_cast %137 : vector<1x8x128xf32> to vector<8x128xf32>
    %c1_81 = arith.constant 1 : index
    %c0_82 = arith.constant 0 : index
    %c0_83 = arith.constant 0 : index
    %139 = vector.load %arg14[%c1_81, %c0_82, %c0_83] : memref<3x8x128xf32, #tpu.memory_space<vmem>>, vector<1x8x128xf32>
    %140 = vector.shape_cast %139 : vector<1x8x128xf32> to vector<8x128xf32>
    %c2_84 = arith.constant 2 : index
    %c0_85 = arith.constant 0 : index
    %c0_86 = arith.constant 0 : index
    %141 = vector.load %arg14[%c2_84, %c0_85, %c0_86] : memref<3x8x128xf32, #tpu.memory_space<vmem>>, vector<1x8x128xf32>
    %142 = vector.shape_cast %141 : vector<1x8x128xf32> to vector<8x128xf32>
    %c0_87 = arith.constant 0 : index
    %c0_88 = arith.constant 0 : index
    %143 = vector.load %arg20[%c0_87, %c0_88] : memref<128x256xf32, #tpu.memory_space<vmem>>, vector<128x128xf32>
    %c0_89 = arith.constant 0 : index
    %c128_90 = arith.constant 128 : index
    %144 = vector.load %arg20[%c0_89, %c128_90] : memref<128x256xf32, #tpu.memory_space<vmem>>, vector<128x128xf32>
    %c1_91 = arith.constant 1 : index
    %c0_92 = arith.constant 0 : index
    %145 = vector.load %arg10[%c1_91, %c0_92] : memref<8x256xf32, #tpu.memory_space<vmem>>, vector<1x128xf32>
    %c1_93 = arith.constant 1 : index
    %c128_94 = arith.constant 128 : index
    %146 = vector.load %arg10[%c1_93, %c128_94] : memref<8x256xf32, #tpu.memory_space<vmem>>, vector<1x128xf32>
    %147 = arith.addf %136, %138 : vector<8x128xf32>
    %cst_95 = arith.constant dense<0.000000e+00> : vector<8x128xf32>
    %148 = tpu.matmul %147, %143, %cst_95 {dimension_numbers = #tpu.dot_dimension_numbers<[1], [0], [0], [1], [0, 0, 1, 1], [], []>} : vector<8x128xf32>, vector<128x128xf32>, vector<8x128xf32> -> vector<8x128xf32>
    %149 = vector.broadcast %145 : vector<1x128xf32> to vector<8x128xf32>
    %150 = arith.addf %148, %149 : vector<8x128xf32>
    %151 = arith.negf %150 : vector<8x128xf32>
    %152 = math.exp %151 : vector<8x128xf32>
    %cst_96 = arith.constant 1.000000e+00 : f32
    %153 = vector.broadcast %cst_96 : f32 to vector<8x128xf32>
    %154 = arith.addf %153, %152 : vector<8x128xf32>
    %155 = arith.divf %153, %154 : vector<8x128xf32>
    %156 = arith.addf %136, %140 : vector<8x128xf32>
    %cst_97 = arith.constant dense<0.000000e+00> : vector<8x128xf32>
    %157 = tpu.matmul %156, %144, %cst_97 {dimension_numbers = #tpu.dot_dimension_numbers<[1], [0], [0], [1], [0, 0, 1, 1], [], []>} : vector<8x128xf32>, vector<128x128xf32>, vector<8x128xf32> -> vector<8x128xf32>
    %158 = vector.broadcast %146 : vector<1x128xf32> to vector<8x128xf32>
    %159 = arith.addf %157, %158 : vector<8x128xf32>
    %160 = arith.negf %159 : vector<8x128xf32>
    %161 = math.exp %160 : vector<8x128xf32>
    %cst_98 = arith.constant 1.000000e+00 : f32
    %162 = vector.broadcast %cst_98 : f32 to vector<8x128xf32>
    %163 = arith.addf %162, %161 : vector<8x128xf32>
    %164 = arith.divf %162, %163 : vector<8x128xf32>
    %165 = arith.mulf %164, %140 : vector<8x128xf32>
    %cst_99 = arith.constant 1.000000e+00 : f32
    %166 = vector.broadcast %cst_99 : f32 to vector<8x128xf32>
    %167 = arith.subf %166, %164 : vector<8x128xf32>
    %168 = arith.mulf %167, %142 : vector<8x128xf32>
    %169 = arith.addf %165, %168 : vector<8x128xf32>
    %cst_100 = arith.constant 1.800000e+00 : f32
    %170 = vector.broadcast %cst_100 : f32 to vector<8x128xf32>
    %171 = arith.mulf %170, %169 : vector<8x128xf32>
    %cst_101 = arith.constant 1.000000e-01 : f32
    %172 = vector.broadcast %cst_101 : f32 to vector<8x128xf32>
    %173 = arith.addf %172, %171 : vector<8x128xf32>
    %174 = arith.subf %136, %138 : vector<8x128xf32>
    %175 = arith.divf %174, %155 : vector<8x128xf32>
    %176 = arith.addf %138, %175 : vector<8x128xf32>
    %177 = arith.subf %176, %173 : vector<8x128xf32>
    %cst_102 = arith.constant 0.000000e+00 : f32
    %178 = vector.broadcast %cst_102 : f32 to vector<8x128xf32>
    %179 = arith.cmpf ogt, %177, %178 : vector<8x128xf32>
    %180 = arith.extui %179 : vector<8x128xi1> to vector<8x128xi32>
    %181 = arith.sitofp %180 : vector<8x128xi32> to vector<8x128xf32>
    %cst_103 = arith.constant 1.000000e+00 : f32
    %182 = vector.broadcast %cst_103 : f32 to vector<8x128xf32>
    %183 = arith.subf %182, %181 : vector<8x128xf32>
    %184 = arith.mulf %176, %183 : vector<8x128xf32>
    %cst_104 = arith.constant 0.000000e+00 : f32
    %185 = vector.broadcast %cst_104 : f32 to vector<8x128xf32>
    %186 = arith.mulf %185, %181 : vector<8x128xf32>
    %187 = arith.addf %184, %186 : vector<8x128xf32>
    %c0_105 = arith.constant 0 : index
    %c0_106 = arith.constant 0 : index
    %c0_107 = arith.constant 0 : index
    %188 = vector.load %arg14[%c0_105, %c0_106, %c0_107] : memref<3x8x128xf32, #tpu.memory_space<vmem>>, vector<1x8x128xf32>
    %189 = vector.shape_cast %188 : vector<1x8x128xf32> to vector<8x128xf32>
    %190 = vector.shape_cast %187 : vector<8x128xf32> to vector<1x8x128xf32>
    tpu.vector_store %arg14[%c0_105, %c0_106, %c0_107], %190 {strides = array<i32>} : memref<3x8x128xf32, #tpu.memory_space<vmem>>, vector<1x8x128xf32>,
    %c1_108 = arith.constant 1 : index
    %c0_109 = arith.constant 0 : index
    %c0_110 = arith.constant 0 : index
    %191 = vector.load %arg14[%c1_108, %c0_109, %c0_110] : memref<3x8x128xf32, #tpu.memory_space<vmem>>, vector<1x8x128xf32>
    %192 = vector.shape_cast %191 : vector<1x8x128xf32> to vector<8x128xf32>
    %193 = vector.shape_cast %169 : vector<8x128xf32> to vector<1x8x128xf32>
    tpu.vector_store %arg14[%c1_108, %c0_109, %c0_110], %193 {strides = array<i32>} : memref<3x8x128xf32, #tpu.memory_space<vmem>>, vector<1x8x128xf32>,
    %c2_111 = arith.constant 2 : index
    %c0_112 = arith.constant 0 : index
    %c0_113 = arith.constant 0 : index
    %194 = vector.load %arg14[%c2_111, %c0_112, %c0_113] : memref<3x8x128xf32, #tpu.memory_space<vmem>>, vector<1x8x128xf32>
    %195 = vector.shape_cast %194 : vector<1x8x128xf32> to vector<8x128xf32>
    %196 = vector.shape_cast %181 : vector<8x128xf32> to vector<1x8x128xf32>
    tpu.vector_store %arg14[%c2_111, %c0_112, %c0_113], %196 {strides = array<i32>} : memref<3x8x128xf32, #tpu.memory_space<vmem>>, vector<1x8x128xf32>,
    %c0_114 = arith.constant 0 : index
    %c0_115 = arith.constant 0 : index
    %c0_116 = arith.constant 0 : index
    %197 = vector.load %arg11[%c0_114, %c0_115, %c0_116] : memref<1x8x128xf32, #tpu.memory_space<vmem>>, vector<1x8x128xf32>
    %198 = vector.shape_cast %197 : vector<1x8x128xf32> to vector<8x128xf32>
    %199 = vector.shape_cast %181 : vector<8x128xf32> to vector<1x8x128xf32>
    tpu.vector_store %arg11[%c0_114, %c0_115, %c0_116], %199 {strides = array<i32>} : memref<1x8x128xf32, #tpu.memory_space<vmem>>, vector<1x8x128xf32>,
    return
  }
  func.func @transform_0(%arg0: i32) -> (i32, i32) {
    %c0_i32 = arith.constant 0 : i32
    %c0_i32_0 = arith.constant 0 : i32
    %c0_i32_1 = arith.constant 0 : i32
    return %c0_i32, %c0_i32_0 : i32, i32
  }
  func.func @transform_1(%arg0: i32) -> (i32, i32) {
    %c0_i32 = arith.constant 0 : i32
    %c0_i32_0 = arith.constant 0 : i32
    %c0_i32_1 = arith.constant 0 : i32
    return %c0_i32, %c0_i32_0 : i32, i32
  }
  func.func @transform_2(%arg0: i32) -> (i32, i32) {
    %c0_i32 = arith.constant 0 : i32
    %c0_i32_0 = arith.constant 0 : i32
    %c0_i32_1 = arith.constant 0 : i32
    return %c0_i32, %c0_i32_0 : i32, i32
  }
  func.func @transform_3(%arg0: i32) -> (i32, i32) {
    %c0_i32 = arith.constant 0 : i32
    %c0_i32_0 = arith.constant 0 : i32
    %c0_i32_1 = arith.constant 0 : i32
    return %c0_i32, %c0_i32_0 : i32, i32
  }
  func.func @transform_4(%arg0: i32) -> (i32, i32) {
    %c0_i32 = arith.constant 0 : i32
    %c0_i32_0 = arith.constant 0 : i32
    %c0_i32_1 = arith.constant 0 : i32
    return %c0_i32, %c0_i32_0 : i32, i32
  }
  func.func @transform_5(%arg0: i32) -> (i32, i32) {
    %c0_i32 = arith.constant 0 : i32
    %c0_i32_0 = arith.constant 0 : i32
    %c0_i32_1 = arith.constant 0 : i32
    return %c0_i32, %c0_i32_0 : i32, i32
  }
  func.func @transform_6(%arg0: i32) -> (i32, i32) {
    %c0_i32 = arith.constant 0 : i32
    %c0_i32_0 = arith.constant 0 : i32
    %c0_i32_1 = arith.constant 0 : i32
    return %c0_i32, %c0_i32_0 : i32, i32
  }
  func.func @transform_7(%arg0: i32) -> (i32, i32) {
    %c0_i32 = arith.constant 0 : i32
    %c0_i32_0 = arith.constant 0 : i32
    %c0_i32_1 = arith.constant 0 : i32
    return %c0_i32, %c0_i32_0 : i32, i32
  }
  func.func @transform_8(%arg0: i32) -> (i32, i32) {
    %c0_i32 = arith.constant 0 : i32
    %c0_i32_0 = arith.constant 0 : i32
    %c0_i32_1 = arith.constant 0 : i32
    return %c0_i32, %c0_i32_0 : i32, i32
  }
  func.func @transform_9(%arg0: i32) -> (i32, i32) {
    %c0_i32 = arith.constant 0 : i32
    %c0_i32_0 = arith.constant 0 : i32
    %c0_i32_1 = arith.constant 0 : i32
    return %c0_i32, %c0_i32_0 : i32, i32
  }
  func.func @transform_10(%arg0: i32) -> (i32, i32, i32) {
    %c0_i32 = arith.constant 0 : i32
    %c0_i32_0 = arith.constant 0 : i32
    %c0_i32_1 = arith.constant 0 : i32
    return %arg0, %c0_i32, %c0_i32_0 : i32, i32, i32
  }
  func.func @transform_11(%arg0: i32) -> (i32, i32, i32) {
    %c0_i32 = arith.constant 0 : i32
    %c0_i32_0 = arith.constant 0 : i32
    %c0_i32_1 = arith.constant 0 : i32
    %c0_i32_2 = arith.constant 0 : i32
    return %c0_i32, %c0_i32_0, %c0_i32_1 : i32, i32, i32
  }
  func.func @transform_12(%arg0: i32) -> (i32, i32, i32) {
    %c0_i32 = arith.constant 0 : i32
    %c0_i32_0 = arith.constant 0 : i32
    %c0_i32_1 = arith.constant 0 : i32
    %c0_i32_2 = arith.constant 0 : i32
    return %c0_i32, %c0_i32_0, %c0_i32_1 : i32, i32, i32
  }
  func.func @transform_13(%arg0: i32) -> (i32, i32, i32) {
    %c0_i32 = arith.constant 0 : i32
    %c0_i32_0 = arith.constant 0 : i32
    %c0_i32_1 = arith.constant 0 : i32
    %c0_i32_2 = arith.constant 0 : i32
    return %c0_i32, %c0_i32_0, %c0_i32_1 : i32, i32, i32
  }
}

</mosaic_0001>

<llo_original>
// kernel: lsnn_forward.1
$region0: #{lsnn_forward.1}
  #allocation0 [shape = 'u32[]', space=smem, size = 0x4, offset = 0x4, fixed_abs, tag = 'smem constant byte address 0x4 - core index']
  #allocation1 [shape = 'u32[144,128]{1,0:T(1,128)}', space=vmem, size = 0x12000, scoped, tag = 'internal scratch']
  #allocation2 [shape = 'f32[64,256]{1,0:T(8,128)}', space=vmem, size = 0x10000, scoped, tag = 'scratch operand']
  #allocation3 [shape = 'f32[256,512]{1,0:T(8,128)}', space=vmem, size = 0x80000, scoped, tag = 'scratch operand']
  #allocation4 [shape = 'f32[256,128]{1,0:T(8,128)}', space=vmem, size = 0x20000, scoped, tag = 'scratch operand']
  #allocation5 [shape = 'f32[128,256]{1,0:T(8,128)}', space=vmem, size = 0x20000, scoped, tag = 'scratch operand']
  #allocation6 [shape = 'f32[128,128]{1,0:T(8,128)}', space=vmem, size = 0x10000, scoped, tag = 'scratch operand']
  #allocation7 [shape = 'f32[128,256]{1,0:T(8,128)}', space=vmem, size = 0x20000, scoped, tag = 'scratch operand']
  %s0 = inlined_call_operand.vmem [shape: f32[64,768], index: 0, kind: input, shape index: {}]
  %s1 = inlined_call_operand.hbm [shape: bf16[768,256], index: 1, kind: input, shape index: {}]
  %s2 = inlined_call_operand.hbm [shape: bf16[256,512], index: 2, kind: input, shape index: {}]
  %s3 = inlined_call_operand.vmem [shape: f32[8,512], index: 3, kind: input, shape index: {}]
  %s4 = inlined_call_operand.vmem [shape: bf16[256,128], index: 4, kind: input, shape index: {}]
  %s5 = inlined_call_operand.vmem [shape: bf16[128,256], index: 5, kind: input, shape index: {}]
  %s6 = inlined_call_operand.hbm [shape: f32[8,256], index: 6, kind: input, shape index: {}]
  %s7 = inlined_call_operand.vmem [shape: bf16[128,128], index: 7, kind: input, shape index: {}]
  %s8 = inlined_call_operand.vmem [shape: bf16[128,256], index: 8, kind: input, shape index: {}]
  %s9 = inlined_call_operand.vmem [shape: f32[8,256], index: 9, kind: input, shape index: {}]
  %s10 = inlined_call_operand.vmem [shape: f32[8,8,128], index: 10, kind: output, shape index: {0}]
  %s11 = inlined_call_operand.vmem [shape: f32[3,8,256], index: 11, kind: output, shape index: {1}]
  %s12 = inlined_call_operand.vmem [shape: f32[3,8,128], index: 12, kind: output, shape index: {2}]
  %s13 = inlined_call_operand.vmem [shape: f32[3,8,128], index: 13, kind: output, shape index: {3}]
  %14 = xla_tuple %s10, %s11, %s12, %s13
  %s15 = sld [smem:[#allocation0]]
  $region113: #{lsnn_forward.1} parent=0
    _
  %s17 = ssub.s32 1, %s15
  %s18 = scalar_select 0, %s17, %s15
  $region1: #{lsnn_forward.1} parent=0
    #allocation8 [shape = 'u8[393216]{0}', space=vmem, size = 0x60000, scoped, tag = 'input window, operand 1, single buffered']
    #allocation9 [shape = 's32[2]{0}', space=sflag, size = 0x8, scoped, tag = 'scoped memory for lsnn_forward.1']
    #allocation10 [shape = 'u8[262144]{0}', space=vmem, size = 0x40000, scoped, tag = 'input window, operand 2, single buffered']
    #allocation11 [shape = 's32[1]{0}', space=sflag, size = 0x4, scoped, tag = 'scoped memory for lsnn_forward.1']
    #allocation12 [shape = 'u8[8192]{0}', space=vmem, size = 0x2000, scoped, tag = 'input window, operand 6, single buffered']
    %19 = vsyncpa [#allocation9], 0
    %20 = vsyncpa [#allocation11], 0
    loop: start=0, step=1, limit=10
    $region2: #{lsnn_forward.1} parent=1 // loop_pre_header
      _
    $region3: #{lsnn_forward.1} parent=1 // loop_header
      %s22 = sphi 0, %s26
      %p23 = scmp.ge.s32.totalorder %s22, 10
      %s30 = sphi 0, %s30
      %s32 = sphi 0, %s30
      %s33 = sphi 0, %s32
      %s47 = sphi 0, %s33
      %s51 = sphi 0, %s51
      %s53 = sphi 0, %s51
      %s54 = sphi 0, %s53
      %s68 = sphi 0, %s54
      %s72 = sphi 0, %s72
      %s74 = sphi 0, %s72
      %s75 = sphi 0, %s74
      %s89 = sphi 0, %s75
      %s93 = sphi 0, %s93
      %s95 = sphi 0, %s93
      %s96 = sphi 0, %s95
      %s110 = sphi 0, %s96
      %s114 = sphi 0, %s114
      %s116 = sphi 0, %s114
      %s117 = sphi 0, %s116
      %s131 = sphi 0, %s117
      %s135 = sphi 0, %s135
      %s137 = sphi 0, %s135
      %s138 = sphi 0, %s137
      %s152 = sphi 0, %s138
      %s156 = sphi 0, %s156
      %s158 = sphi 0, %s156
      %s159 = sphi 0, %s158
      %s173 = sphi 0, %s159
      %s177 = sphi 0, %s177
      %s179 = sphi 0, %s177
      %s180 = sphi 0, %s179
      %s194 = sphi 0, %s180
      %s198 = sphi 0, %s198
      %s200 = sphi 0, %s198
      %s201 = sphi 0, %s200
      %s215 = sphi 0, %s201
      %s219 = sphi 0, %s219
      %s221 = sphi 0, %s219
      %s222 = sphi 0, %s221
      %s236 = sphi 0, %s222
      %s242 = sphi 0, %s244
      %s245 = sphi 0, %s242
      %s246 = sphi 0, %s245
      %s262 = sphi 0, %s246
      %s266 = sphi 0, %s266
      %s268 = sphi 0, %s266
      %s269 = sphi 0, %s268
      %s283 = sphi 0, %s269
      %s287 = sphi 0, %s287
      %s289 = sphi 0, %s287
      %s290 = sphi 0, %s289
      %s304 = sphi 0, %s290
      %s308 = sphi 0, %s308
      %s310 = sphi 0, %s308
      %s311 = sphi 0, %s310
      %s325 = sphi 0, %s311
    $region4: #{lsnn_forward.1} parent=1 // loop_header_branch
      %25 = sbr.rel (%p23) target = $region8
    $region5: #{lsnn_forward.1} parent=1 // loop_body
      %s27 = ssub.s32 %s22, 1
      %s28 = ssub.s32 %s22, 2
      %s29 = sadd.s32 %s22, 1
      %s31 = sadd.s32 %s30, 1
      %p34 = scmp.eq.s32.totalorder %s22, 7
      %p35 = scmp.ne.s32.totalorder %s30, %s32
      %p36 = scmp.eq.s32.totalorder %s22, 0
      %p37 = por %p35, %p36
      %p38 = scmp.ne.s32.totalorder %s30, %s32
      %p39 = scmp.eq.s32.totalorder %s27, 7
      %p40 = por %p38, %p39
      %p41 = scmp.ne.s32.totalorder %s32, %s33
      %p42 = scmp.eq.s32.totalorder %s27, 0
      %p43 = por %p41, %p42
      %p44 = scmp.ne.s32.totalorder %s32, %s33
      %p45 = scmp.eq.s32.totalorder %s28, 7
      %p46 = por %p44, %p45
      %p48 = scmp.ne.s32.totalorder %s33, %s47
      %p49 = scmp.eq.s32.totalorder %s28, 0
      %p50 = por %p48, %p49
      %s52 = sadd.s32 %s51, 1
      %p55 = scmp.eq.s32.totalorder %s22, 7
      %p56 = scmp.ne.s32.totalorder %s51, %s53
      %p57 = scmp.eq.s32.totalorder %s22, 0
      %p58 = por %p56, %p57
      %p59 = scmp.ne.s32.totalorder %s51, %s53
      %p60 = scmp.eq.s32.totalorder %s27, 7
      %p61 = por %p59, %p60
      %p62 = scmp.ne.s32.totalorder %s53, %s54
      %p63 = scmp.eq.s32.totalorder %s27, 0
      %p64 = por %p62, %p63
      %p65 = scmp.ne.s32.totalorder %s53, %s54
      %p66 = scmp.eq.s32.totalorder %s28, 7
      %p67 = por %p65, %p66
      %p69 = scmp.ne.s32.totalorder %s54, %s68
      %p70 = scmp.eq.s32.totalorder %s28, 0
      %p71 = por %p69, %p70
      %s73 = sadd.s32 %s72, 1
      %p76 = scmp.eq.s32.totalorder %s22, 7
      %p77 = scmp.ne.s32.totalorder %s72, %s74
      %p78 = scmp.eq.s32.totalorder %s22, 0
      %p79 = por %p77, %p78
      %p80 = scmp.ne.s32.totalorder %s72, %s74
      %p81 = scmp.eq.s32.totalorder %s27, 7
      %p82 = por %p80, %p81
      %p83 = scmp.ne.s32.totalorder %s74, %s75
      %p84 = scmp.eq.s32.totalorder %s27, 0
      %p85 = por %p83, %p84
      %p86 = scmp.ne.s32.totalorder %s74, %s75
      %p87 = scmp.eq.s32.totalorder %s28, 7
      %p88 = por %p86, %p87
      %p90 = scmp.ne.s32.totalorder %s75, %s89
      %p91 = scmp.eq.s32.totalorder %s28, 0
      %p92 = por %p90, %p91
      %s94 = sadd.s32 %s93, 1
      %p97 = scmp.eq.s32.totalorder %s22, 7
      %p98 = scmp.ne.s32.totalorder %s93, %s95
      %p99 = scmp.eq.s32.totalorder %s22, 0
      %p100 = por %p98, %p99
      %p101 = scmp.ne.s32.totalorder %s93, %s95
      %p102 = scmp.eq.s32.totalorder %s27, 7
      %p103 = por %p101, %p102
      %p104 = scmp.ne.s32.totalorder %s95, %s96
      %p105 = scmp.eq.s32.totalorder %s27, 0
      %p106 = por %p104, %p105
      %p107 = scmp.ne.s32.totalorder %s95, %s96
      %p108 = scmp.eq.s32.totalorder %s28, 7
      %p109 = por %p107, %p108
      %p111 = scmp.ne.s32.totalorder %s96, %s110
      %p112 = scmp.eq.s32.totalorder %s28, 0
      %p113 = por %p111, %p112
      %s115 = sadd.s32 %s114, 1
      %p118 = scmp.eq.s32.totalorder %s22, 7
      %p119 = scmp.ne.s32.totalorder %s114, %s116
      %p120 = scmp.eq.s32.totalorder %s22, 0
      %p121 = por %p119, %p120
      %p122 = scmp.ne.s32.totalorder %s114, %s116
      %p123 = scmp.eq.s32.totalorder %s27, 7
      %p124 = por %p122, %p123
      %p125 = scmp.ne.s32.totalorder %s116, %s117
      %p126 = scmp.eq.s32.totalorder %s27, 0
      %p127 = por %p125, %p126
      %p128 = scmp.ne.s32.totalorder %s116, %s117
      %p129 = scmp.eq.s32.totalorder %s28, 7
      %p130 = por %p128, %p129
      %p132 = scmp.ne.s32.totalorder %s117, %s131
      %p133 = scmp.eq.s32.totalorder %s28, 0
      %p134 = por %p132, %p133
      %s136 = sadd.s32 %s135, 1
      %p139 = scmp.eq.s32.totalorder %s22, 7
      %p140 = scmp.ne.s32.totalorder %s135, %s137
      %p141 = scmp.eq.s32.totalorder %s22, 0
      %p142 = por %p140, %p141
      %p143 = scmp.ne.s32.totalorder %s135, %s137
      %p144 = scmp.eq.s32.totalorder %s27, 7
      %p145 = por %p143, %p144
      %p146 = scmp.ne.s32.totalorder %s137, %s138
      %p147 = scmp.eq.s32.totalorder %s27, 0
      %p148 = por %p146, %p147
      %p149 = scmp.ne.s32.totalorder %s137, %s138
      %p150 = scmp.eq.s32.totalorder %s28, 7
      %p151 = por %p149, %p150
      %p153 = scmp.ne.s32.totalorder %s138, %s152
      %p154 = scmp.eq.s32.totalorder %s28, 0
      %p155 = por %p153, %p154
      %s157 = sadd.s32 %s156, 1
      %p160 = scmp.eq.s32.totalorder %s22, 7
      %p161 = scmp.ne.s32.totalorder %s156, %s158
      %p162 = scmp.eq.s32.totalorder %s22, 0
      %p163 = por %p161, %p162
      %p164 = scmp.ne.s32.totalorder %s156, %s158
      %p165 = scmp.eq.s32.totalorder %s27, 7
      %p166 = por %p164, %p165
      %p167 = scmp.ne.s32.totalorder %s158, %s159
      %p168 = scmp.eq.s32.totalorder %s27, 0
      %p169 = por %p167, %p168
      %p170 = scmp.ne.s32.totalorder %s158, %s159
      %p171 = scmp.eq.s32.totalorder %s28, 7
      %p172 = por %p170, %p171
      %p174 = scmp.ne.s32.totalorder %s159, %s173
      %p175 = scmp.eq.s32.totalorder %s28, 0
      %p176 = por %p174, %p175
      %s178 = sadd.s32 %s177, 1
      %p181 = scmp.eq.s32.totalorder %s22, 7
      %p182 = scmp.ne.s32.totalorder %s177, %s179
      %p183 = scmp.eq.s32.totalorder %s22, 0
      %p184 = por %p182, %p183
      %p185 = scmp.ne.s32.totalorder %s177, %s179
      %p186 = scmp.eq.s32.totalorder %s27, 7
      %p187 = por %p185, %p186
      %p188 = scmp.ne.s32.totalorder %s179, %s180
      %p189 = scmp.eq.s32.totalorder %s27, 0
      %p190 = por %p188, %p189
      %p191 = scmp.ne.s32.totalorder %s179, %s180
      %p192 = scmp.eq.s32.totalorder %s28, 7
      %p193 = por %p191, %p192
      %p195 = scmp.ne.s32.totalorder %s180, %s194
      %p196 = scmp.eq.s32.totalorder %s28, 0
      %p197 = por %p195, %p196
      %s199 = sadd.s32 %s198, 1
      %p202 = scmp.eq.s32.totalorder %s22, 7
      %p203 = scmp.ne.s32.totalorder %s198, %s200
      %p204 = scmp.eq.s32.totalorder %s22, 0
      %p205 = por %p203, %p204
      %p206 = scmp.ne.s32.totalorder %s198, %s200
      %p207 = scmp.eq.s32.totalorder %s27, 7
      %p208 = por %p206, %p207
      %p209 = scmp.ne.s32.totalorder %s200, %s201
      %p210 = scmp.eq.s32.totalorder %s27, 0
      %p211 = por %p209, %p210
      %p212 = scmp.ne.s32.totalorder %s200, %s201
      %p213 = scmp.eq.s32.totalorder %s28, 7
      %p214 = por %p212, %p213
      %p216 = scmp.ne.s32.totalorder %s201, %s215
      %p217 = scmp.eq.s32.totalorder %s28, 0
      %p218 = por %p216, %p217
      %s220 = sadd.s32 %s219, 1
      %p223 = scmp.eq.s32.totalorder %s22, 7
      %p224 = scmp.ne.s32.totalorder %s219, %s221
      %p225 = scmp.eq.s32.totalorder %s22, 0
      %p226 = por %p224, %p225
      %p227 = scmp.ne.s32.totalorder %s219, %s221
      %p228 = scmp.eq.s32.totalorder %s27, 7
      %p229 = por %p227, %p228
      %p230 = scmp.ne.s32.totalorder %s221, %s222
      %p231 = scmp.eq.s32.totalorder %s27, 0
      %p232 = por %p230, %p231
      %p233 = scmp.ne.s32.totalorder %s221, %s222
      %p234 = scmp.eq.s32.totalorder %s28, 7
      %p235 = por %p233, %p234
      %p237 = scmp.ne.s32.totalorder %s222, %s236
      %p238 = scmp.eq.s32.totalorder %s28, 0
      %p239 = por %p237, %p238
      %s240 = ssub.s32 %s22, %s29
      %p241 = scmp.eq.s32.totalorder %s240, 0
      %s243 = sadd.s32 %s242, 1
      %s244 = scalar_select %p241, %s242, %s243
      %p247 = pneg %p241
      %p248 = scmp.eq.s32.totalorder %s22, 7
      %p249 = por %p247, %p248
      %p250 = scmp.ne.s32.totalorder %s242, %s245
      %p251 = scmp.eq.s32.totalorder %s22, 0
      %p252 = por %p250, %p251
      %p253 = scmp.ne.s32.totalorder %s242, %s245
      %p254 = scmp.eq.s32.totalorder %s27, 7
      %p255 = por %p253, %p254
      %p256 = scmp.ne.s32.totalorder %s245, %s246
      %p257 = scmp.eq.s32.totalorder %s27, 0
      %p258 = por %p256, %p257
      %p259 = scmp.ne.s32.totalorder %s245, %s246
      %p260 = scmp.eq.s32.totalorder %s28, 7
      %p261 = por %p259, %p260
      %p263 = scmp.ne.s32.totalorder %s246, %s262
      %p264 = scmp.eq.s32.totalorder %s28, 0
      %p265 = por %p263, %p264
      %s267 = sadd.s32 %s266, 1
      %p270 = scmp.eq.s32.totalorder %s22, 7
      %p271 = scmp.ne.s32.totalorder %s266, %s268
      %p272 = scmp.eq.s32.totalorder %s22, 0
      %p273 = por %p271, %p272
      %p274 = scmp.ne.s32.totalorder %s266, %s268
      %p275 = scmp.eq.s32.totalorder %s27, 7
      %p276 = por %p274, %p275
      %p277 = scmp.ne.s32.totalorder %s268, %s269
      %p278 = scmp.eq.s32.totalorder %s27, 0
      %p279 = por %p277, %p278
      %p280 = scmp.ne.s32.totalorder %s268, %s269
      %p281 = scmp.eq.s32.totalorder %s28, 7
      %p282 = por %p280, %p281
      %p284 = scmp.ne.s32.totalorder %s269, %s283
      %p285 = scmp.eq.s32.totalorder %s28, 0
      %p286 = por %p284, %p285
      %s288 = sadd.s32 %s287, 1
      %p291 = scmp.eq.s32.totalorder %s22, 7
      %p292 = scmp.ne.s32.totalorder %s287, %s289
      %p293 = scmp.eq.s32.totalorder %s22, 0
      %p294 = por %p292, %p293
      %p295 = scmp.ne.s32.totalorder %s287, %s289
      %p296 = scmp.eq.s32.totalorder %s27, 7
      %p297 = por %p295, %p296
      %p298 = scmp.ne.s32.totalorder %s289, %s290
      %p299 = scmp.eq.s32.totalorder %s27, 0
      %p300 = por %p298, %p299
      %p301 = scmp.ne.s32.totalorder %s289, %s290
      %p302 = scmp.eq.s32.totalorder %s28, 7
      %p303 = por %p301, %p302
      %p305 = scmp.ne.s32.totalorder %s290, %s304
      %p306 = scmp.eq.s32.totalorder %s28, 0
      %p307 = por %p305, %p306
      %s309 = sadd.s32 %s308, 1
      %p312 = scmp.eq.s32.totalorder %s22, 7
      %p313 = scmp.ne.s32.totalorder %s308, %s310
      %p314 = scmp.eq.s32.totalorder %s22, 0
      %p315 = por %p313, %p314
      %p316 = scmp.ne.s32.totalorder %s308, %s310
      %p317 = scmp.eq.s32.totalorder %s27, 7
      %p318 = por %p316, %p317
      %p319 = scmp.ne.s32.totalorder %s310, %s311
      %p320 = scmp.eq.s32.totalorder %s27, 0
      %p321 = por %p319, %p320
      %p322 = scmp.ne.s32.totalorder %s310, %s311
      %p323 = scmp.eq.s32.totalorder %s28, 7
      %p324 = por %p322, %p323
      %p326 = scmp.ne.s32.totalorder %s311, %s325
      %p327 = scmp.eq.s32.totalorder %s28, 0
      %p328 = por %p326, %p327
      %p329 = scmp.le.s32.totalorder 1, %s22
      %p330 = scmp.lt.s32.totalorder %s22, 9
      %p331 = pnand %p329, %p330
      %p332 = pneg %p331
      // Predicated region
      $region9: #{lsnn_forward.1} parent=5 // pred_check
        _
      $region10: #{lsnn_forward.1} parent=5 // pred_check_branch
        %334 = sbr.rel (%p331) target = $region12
      $region11: #{lsnn_forward.1} parent=5 // pred_region
        %s335 = ssub.s32 %s22, 1
        // Predicated region
        $region13: #{lsnn_forward.1} parent=11 // pred_check
          %p336 = pneg %p43
        $region14: #{lsnn_forward.1} parent=11 // pred_check_branch
          %338 = sbr.rel (%p336) target = $region16
        $region15: #{lsnn_forward.1} parent=11 // pred_region
          _
        $region16: #{lsnn_forward.1} parent=11 // pred_fallthru
          _
        // Predicated region
        $region17: #{lsnn_forward.1} parent=11 // pred_check
          %p339 = pneg %p64
        $region18: #{lsnn_forward.1} parent=11 // pred_check_branch
          %341 = sbr.rel (%p339) target = $region20
        $region19: #{lsnn_forward.1} parent=11 // pred_region
          %s343 = ssub.s32 12288, 12288
          %344 = vsyncadd [#allocation9], %s343
          %s345 = sshll.u32 [#allocation8], 4
          %s346 = int_to_ptr.vmem [resolvable:$true] %s345
          %351 = dma.hbm_to_vmem [thread:$0]  %s1, 12288, %s346, [#allocation9], 128, 128, 8
        $region20: #{lsnn_forward.1} parent=11 // pred_fallthru
          _
        // Predicated region
        $region21: #{lsnn_forward.1} parent=11 // pred_check
          %p352 = pneg %p85
        $region22: #{lsnn_forward.1} parent=11 // pred_check_branch
          %354 = sbr.rel (%p352) target = $region24
        $region23: #{lsnn_forward.1} parent=11 // pred_region
          %s356 = ssub.s32 8192, 8192
          %357 = vsyncadd [#allocation11], %s356
          %s358 = sshll.u32 [#allocation10], 4
          %s359 = int_to_ptr.vmem [resolvable:$true] %s358
          %364 = dma.hbm_to_vmem [thread:$0]  %s2, 8192, %s359, [#allocation11], 256, 256, 16
        $region24: #{lsnn_forward.1} parent=11 // pred_fallthru
          _
        // Predicated region
        $region25: #{lsnn_forward.1} parent=11 // pred_check
          %p365 = pneg %p106
        $region26: #{lsnn_forward.1} parent=11 // pred_check_branch
          %367 = sbr.rel (%p365) target = $region28
        $region27: #{lsnn_forward.1} parent=11 // pred_region
          _
        $region28: #{lsnn_forward.1} parent=11 // pred_fallthru
          _
        // Predicated region
        $region29: #{lsnn_forward.1} parent=11 // pred_check
          %p368 = pneg %p127
        $region30: #{lsnn_forward.1} parent=11 // pred_check_branch
          %370 = sbr.rel (%p368) target = $region32
        $region31: #{lsnn_forward.1} parent=11 // pred_region
          _
        $region32: #{lsnn_forward.1} parent=11 // pred_fallthru
          _
        // Predicated region
        $region33: #{lsnn_forward.1} parent=11 // pred_check
          %p371 = pneg %p148
        $region34: #{lsnn_forward.1} parent=11 // pred_check_branch
          %373 = sbr.rel (%p371) target = $region36
        $region35: #{lsnn_forward.1} parent=11 // pred_region
          _
        $region36: #{lsnn_forward.1} parent=11 // pred_fallthru
          _
        // Predicated region
        $region37: #{lsnn_forward.1} parent=11 // pred_check
          %p374 = pneg %p169
        $region38: #{lsnn_forward.1} parent=11 // pred_check_branch
          %376 = sbr.rel (%p374) target = $region40
        $region39: #{lsnn_forward.1} parent=11 // pred_region
          %s378 = ssub.s32 256, 256
          %379 = vsyncadd [#allocation11], %s378
          %s381 = sshll.u32 [#allocation12], 4
          %s382 = int_to_ptr.vmem [resolvable:$true] %s381
          %384 = dma.hbm_to_vmem [thread:$0]  %s6, 256, %s382, [#allocation11]
        $region40: #{lsnn_forward.1} parent=11 // pred_fallthru
          _
        // Predicated region
        $region41: #{lsnn_forward.1} parent=11 // pred_check
          %p385 = pneg %p190
        $region42: #{lsnn_forward.1} parent=11 // pred_check_branch
          %387 = sbr.rel (%p385) target = $region44
        $region43: #{lsnn_forward.1} parent=11 // pred_region
          _
        $region44: #{lsnn_forward.1} parent=11 // pred_fallthru
          _
        // Predicated region
        $region45: #{lsnn_forward.1} parent=11 // pred_check
          %p388 = pneg %p211
        $region46: #{lsnn_forward.1} parent=11 // pred_check_branch
          %390 = sbr.rel (%p388) target = $region48
        $region47: #{lsnn_forward.1} parent=11 // pred_region
          _
        $region48: #{lsnn_forward.1} parent=11 // pred_fallthru
          _
        // Predicated region
        $region49: #{lsnn_forward.1} parent=11 // pred_check
          %p391 = pneg %p232
        $region50: #{lsnn_forward.1} parent=11 // pred_check_branch
          %393 = sbr.rel (%p391) target = $region52
        $region51: #{lsnn_forward.1} parent=11 // pred_region
          _
        $region52: #{lsnn_forward.1} parent=11 // pred_fallthru
          _
      $region12: #{lsnn_forward.1} parent=5 // pred_fallthru
        _
      %p394 = scmp.lt.s32.totalorder %s22, 8
      // Predicated region
      $region53: #{lsnn_forward.1} parent=5 // pred_check
        %p395 = pneg %p394
      $region54: #{lsnn_forward.1} parent=5 // pred_check_branch
        %397 = sbr.rel (%p395) target = $region56
      $region55: #{lsnn_forward.1} parent=5 // pred_region
        _
      $region56: #{lsnn_forward.1} parent=5 // pred_fallthru
        _
      %p398 = scmp.le.s32.totalorder 1, %s22
      %p399 = scmp.lt.s32.totalorder %s22, 9
      %p400 = pnand %p398, %p399
      %p401 = pneg %p400
      // Predicated region
      $region57: #{lsnn_forward.1} parent=5 // pred_check
        _
      $region58: #{lsnn_forward.1} parent=5 // pred_check_branch
        %403 = sbr.rel (%p400) target = $region60
      $region59: #{lsnn_forward.1} parent=5 // pred_region
        %s404 = ssub.s32 %s22, 1
        // Predicated region
        $region61: #{lsnn_forward.1} parent=59 // pred_check
          %p405 = pneg %p64
        $region62: #{lsnn_forward.1} parent=59 // pred_check_branch
          %407 = sbr.rel (%p405) target = $region64
        $region63: #{lsnn_forward.1} parent=59 // pred_region
          %408 = dma.done [#allocation9], 12288
        $region64: #{lsnn_forward.1} parent=59 // pred_fallthru
          _
        // Predicated region
        $region65: #{lsnn_forward.1} parent=59 // pred_check
          %p409 = pneg %p85
        $region66: #{lsnn_forward.1} parent=59 // pred_check_branch
          %411 = sbr.rel (%p409) target = $region68
        $region67: #{lsnn_forward.1} parent=59 // pred_region
          %412 = dma.done [#allocation11], 8192
        $region68: #{lsnn_forward.1} parent=59 // pred_fallthru
          _
        // Predicated region
        $region69: #{lsnn_forward.1} parent=59 // pred_check
          %p413 = pneg %p169
        $region70: #{lsnn_forward.1} parent=59 // pred_check_branch
          %415 = sbr.rel (%p413) target = $region72
        $region71: #{lsnn_forward.1} parent=59 // pred_region
          %416 = dma.done [#allocation11], 256
        $region72: #{lsnn_forward.1} parent=59 // pred_fallthru
          _
        %p417 = pneg %p43
        %p418 = pneg %p40
        %p419 = pneg %p64
        %p420 = pneg %p61
        %p421 = pneg %p85
        %p422 = pneg %p82
        %p423 = pneg %p106
        %p424 = pneg %p103
        %p425 = pneg %p127
        %p426 = pneg %p124
        %p427 = pneg %p148
        %p428 = pneg %p145
        %p429 = pneg %p169
        %p430 = pneg %p166
        %p431 = pneg %p190
        %p432 = pneg %p187
        %p433 = pneg %p211
        %p434 = pneg %p208
        %p435 = pneg %p232
        %p436 = pneg %p229
        %p437 = pneg %p258
        %p438 = pneg %p255
        %p439 = scmp.lt.s32.totalorder %s27, 7
        %s440 = scalar_select %p439, %s27, 7
        %s441 = smul.addr %s440, 8
        %s442 = scalar_lea.vmem %s10, %s441
        %p443 = pneg %p279
        %p444 = pneg %p276
        %p445 = pneg %p300
        %p446 = pneg %p297
        %p447 = pneg %p321
        %p448 = pneg %p318
        %p449 = scmp.lt.s32.totalorder %s27, 7
        %s450 = scalar_select %p449, %s27, 7
        %s451 = smul.addr %s450, 8
        %s452 = scalar_lea.vmem %s10, %s451
        %p453 = scmp.eq.s32.totalorder %s27, 0
        // Predicated region
        $region73: #{lsnn_forward.1} parent=59 // pred_check
          %p454 = pneg %p453
        $region74: #{lsnn_forward.1} parent=59 // pred_check_branch
          %456 = sbr.rel (%p454) target = $region76
        $region75: #{lsnn_forward.1} parent=59 // pred_region
          %v457 = vld [vmem:[#allocation10] sm:$0xff]
          %v458 = vld [vmem:[#allocation10 + $0x8] sm:$0xff]
          %v459 = vld [vmem:[#allocation10 + $0x10] sm:$0xff]
          %v460 = vld [vmem:[#allocation10 + $0x18] sm:$0xff]
          %v461 = vld [vmem:[#allocation10 + $0x20] sm:$0xff]
          %v462 = vld [vmem:[#allocation10 + $0x28] sm:$0xff]
          %v463 = vld [vmem:[#allocation10 + $0x30] sm:$0xff]
          %v464 = vld [vmem:[#allocation10 + $0x38] sm:$0xff]
          %v465 = vld [vmem:[#allocation10 + $0x40] sm:$0xff]
          %v466 = vld [vmem:[#allocation10 + $0x48] sm:$0xff]
          %v467 = vld [vmem:[#allocation10 + $0x50] sm:$0xff]
          %v468 = vld [vmem:[#allocation10 + $0x58] sm:$0xff]
          %v469 = vld [vmem:[#allocation10 + $0x60] sm:$0xff]
          %v470 = vld [vmem:[#allocation10 + $0x68] sm:$0xff]
          %v471 = vld [vmem:[#allocation10 + $0x70] sm:$0xff]
          %v472 = vld [vmem:[#allocation10 + $0x78] sm:$0xff]
          %v473 = vld [vmem:[#allocation10 + $0x80] sm:$0xff]
          %v474 = vld [vmem:[#allocation10 + $0x88] sm:$0xff]
          %v475 = vld [vmem:[#allocation10 + $0x90] sm:$0xff]
          %v476 = vld [vmem:[#allocation10 + $0x98] sm:$0xff]
          %v477 = vld [vmem:[#allocation10 + $0xa0] sm:$0xff]
          %v478 = vld [vmem:[#allocation10 + $0xa8] sm:$0xff]
          %v479 = vld [vmem:[#allocation10 + $0xb0] sm:$0xff]
          %v480 = vld [vmem:[#allocation10 + $0xb8] sm:$0xff]
          %v481 = vld [vmem:[#allocation10 + $0xc0] sm:$0xff]
          %v482 = vld [vmem:[#allocation10 + $0xc8] sm:$0xff]
          %v483 = vld [vmem:[#allocation10 + $0xd0] sm:$0xff]
          %v484 = vld [vmem:[#allocation10 + $0xd8] sm:$0xff]
          %v485 = vld [vmem:[#allocation10 + $0xe0] sm:$0xff]
          %v486 = vld [vmem:[#allocation10 + $0xe8] sm:$0xff]
          %v487 = vld [vmem:[#allocation10 + $0xf0] sm:$0xff]
          %v488 = vld [vmem:[#allocation10 + $0xf8] sm:$0xff]
          %v489 = vld [vmem:[#allocation10 + $0x100] sm:$0xff]
          %v490 = vld [vmem:[#allocation10 + $0x108] sm:$0xff]
          %v491 = vld [vmem:[#allocation10 + $0x110] sm:$0xff]
          %v492 = vld [vmem:[#allocation10 + $0x118] sm:$0xff]
          %v493 = vld [vmem:[#allocation10 + $0x120] sm:$0xff]
          %v494 = vld [vmem:[#allocation10 + $0x128] sm:$0xff]
          %v495 = vld [vmem:[#allocation10 + $0x130] sm:$0xff]
          %v496 = vld [vmem:[#allocation10 + $0x138] sm:$0xff]
          %v497 = vld [vmem:[#allocation10 + $0x140] sm:$0xff]
          %v498 = vld [vmem:[#allocation10 + $0x148] sm:$0xff]
          %v499 = vld [vmem:[#allocation10 + $0x150] sm:$0xff]
          %v500 = vld [vmem:[#allocation10 + $0x158] sm:$0xff]
          %v501 = vld [vmem:[#allocation10 + $0x160] sm:$0xff]
          %v502 = vld [vmem:[#allocation10 + $0x168] sm:$0xff]
          %v503 = vld [vmem:[#allocation10 + $0x170] sm:$0xff]
          %v504 = vld [vmem:[#allocation10 + $0x178] sm:$0xff]
          %v505 = vld [vmem:[#allocation10 + $0x180] sm:$0xff]
          %v506 = vld [vmem:[#allocation10 + $0x188] sm:$0xff]
          %v507 = vld [vmem:[#allocation10 + $0x190] sm:$0xff]
          %v508 = vld [vmem:[#allocation10 + $0x198] sm:$0xff]
          %v509 = vld [vmem:[#allocation10 + $0x1a0] sm:$0xff]
          %v510 = vld [vmem:[#allocation10 + $0x1a8] sm:$0xff]
          %v511 = vld [vmem:[#allocation10 + $0x1b0] sm:$0xff]
          %v512 = vld [vmem:[#allocation10 + $0x1b8] sm:$0xff]
          %v513 = vld [vmem:[#allocation10 + $0x1c0] sm:$0xff]
          %v514 = vld [vmem:[#allocation10 + $0x1c8] sm:$0xff]
          %v515 = vld [vmem:[#allocation10 + $0x1d0] sm:$0xff]
          %v516 = vld [vmem:[#allocation10 + $0x1d8] sm:$0xff]
          %v517 = vld [vmem:[#allocation10 + $0x1e0] sm:$0xff]
          %v518 = vld [vmem:[#allocation10 + $0x1e8] sm:$0xff]
          %v519 = vld [vmem:[#allocation10 + $0x1f0] sm:$0xff]
          %v520 = vld [vmem:[#allocation10 + $0x1f8] sm:$0xff]
          %v521 = vunpack.c.l.bf16 %v457
          %v522 = vunpack.c.h.bf16 %v457
          %v523 = vunpack.c.l.bf16 %v458
          %v524 = vunpack.c.h.bf16 %v458
          %v525 = vunpack.c.l.bf16 %v459
          %v526 = vunpack.c.h.bf16 %v459
          %v527 = vunpack.c.l.bf16 %v460
          %v528 = vunpack.c.h.bf16 %v460
          %v529 = vunpack.c.l.bf16 %v461
          %v530 = vunpack.c.h.bf16 %v461
          %v531 = vunpack.c.l.bf16 %v462
          %v532 = vunpack.c.h.bf16 %v462
          %v533 = vunpack.c.l.bf16 %v463
          %v534 = vunpack.c.h.bf16 %v463
          %v535 = vunpack.c.l.bf16 %v464
          %v536 = vunpack.c.h.bf16 %v464
          %v537 = vunpack.c.l.bf16 %v465
          %v538 = vunpack.c.h.bf16 %v465
          %v539 = vunpack.c.l.bf16 %v466
          %v540 = vunpack.c.h.bf16 %v466
          %v541 = vunpack.c.l.bf16 %v467
          %v542 = vunpack.c.h.bf16 %v467
          %v543 = vunpack.c.l.bf16 %v468
          %v544 = vunpack.c.h.bf16 %v468
          %v545 = vunpack.c.l.bf16 %v469
          %v546 = vunpack.c.h.bf16 %v469
          %v547 = vunpack.c.l.bf16 %v470
          %v548 = vunpack.c.h.bf16 %v470
          %v549 = vunpack.c.l.bf16 %v471
          %v550 = vunpack.c.h.bf16 %v471
          %v551 = vunpack.c.l.bf16 %v472
          %v552 = vunpack.c.h.bf16 %v472
          %v553 = vunpack.c.l.bf16 %v473
          %v554 = vunpack.c.h.bf16 %v473
          %v555 = vunpack.c.l.bf16 %v474
          %v556 = vunpack.c.h.bf16 %v474
          %v557 = vunpack.c.l.bf16 %v475
          %v558 = vunpack.c.h.bf16 %v475
          %v559 = vunpack.c.l.bf16 %v476
          %v560 = vunpack.c.h.bf16 %v476
          %v561 = vunpack.c.l.bf16 %v477
          %v562 = vunpack.c.h.bf16 %v477
          %v563 = vunpack.c.l.bf16 %v478
          %v564 = vunpack.c.h.bf16 %v478
          %v565 = vunpack.c.l.bf16 %v479
          %v566 = vunpack.c.h.bf16 %v479
          %v567 = vunpack.c.l.bf16 %v480
          %v568 = vunpack.c.h.bf16 %v480
          %v569 = vunpack.c.l.bf16 %v481
          %v570 = vunpack.c.h.bf16 %v481
          %v571 = vunpack.c.l.bf16 %v482
          %v572 = vunpack.c.h.bf16 %v482
          %v573 = vunpack.c.l.bf16 %v483
          %v574 = vunpack.c.h.bf16 %v483
          %v575 = vunpack.c.l.bf16 %v484
          %v576 = vunpack.c.h.bf16 %v484
          %v577 = vunpack.c.l.bf16 %v485
          %v578 = vunpack.c.h.bf16 %v485
          %v579 = vunpack.c.l.bf16 %v486
          %v580 = vunpack.c.h.bf16 %v486
          %v581 = vunpack.c.l.bf16 %v487
          %v582 = vunpack.c.h.bf16 %v487
          %v583 = vunpack.c.l.bf16 %v488
          %v584 = vunpack.c.h.bf16 %v488
          %v585 = vunpack.c.l.bf16 %v489
          %v586 = vunpack.c.h.bf16 %v489
          %v587 = vunpack.c.l.bf16 %v490
          %v588 = vunpack.c.h.bf16 %v490
          %v589 = vunpack.c.l.bf16 %v491
          %v590 = vunpack.c.h.bf16 %v491
          %v591 = vunpack.c.l.bf16 %v492
          %v592 = vunpack.c.h.bf16 %v492
          %v593 = vunpack.c.l.bf16 %v493
          %v594 = vunpack.c.h.bf16 %v493
          %v595 = vunpack.c.l.bf16 %v494
          %v596 = vunpack.c.h.bf16 %v494
          %v597 = vunpack.c.l.bf16 %v495
          %v598 = vunpack.c.h.bf16 %v495
          %v599 = vunpack.c.l.bf16 %v496
          %v600 = vunpack.c.h.bf16 %v496
          %v601 = vunpack.c.l.bf16 %v497
          %v602 = vunpack.c.h.bf16 %v497
          %v603 = vunpack.c.l.bf16 %v498
          %v604 = vunpack.c.h.bf16 %v498
          %v605 = vunpack.c.l.bf16 %v499
          %v606 = vunpack.c.h.bf16 %v499
          %v607 = vunpack.c.l.bf16 %v500
          %v608 = vunpack.c.h.bf16 %v500
          %v609 = vunpack.c.l.bf16 %v501
          %v610 = vunpack.c.h.bf16 %v501
          %v611 = vunpack.c.l.bf16 %v502
          %v612 = vunpack.c.h.bf16 %v502
          %v613 = vunpack.c.l.bf16 %v503
          %v614 = vunpack.c.h.bf16 %v503
          %v615 = vunpack.c.l.bf16 %v504
          %v616 = vunpack.c.h.bf16 %v504
          %v617 = vunpack.c.l.bf16 %v505
          %v618 = vunpack.c.h.bf16 %v505
          %v619 = vunpack.c.l.bf16 %v506
          %v620 = vunpack.c.h.bf16 %v506
          %v621 = vunpack.c.l.bf16 %v507
          %v622 = vunpack.c.h.bf16 %v507
          %v623 = vunpack.c.l.bf16 %v508
          %v624 = vunpack.c.h.bf16 %v508
          %v625 = vunpack.c.l.bf16 %v509
          %v626 = vunpack.c.h.bf16 %v509
          %v627 = vunpack.c.l.bf16 %v510
          %v628 = vunpack.c.h.bf16 %v510
          %v629 = vunpack.c.l.bf16 %v511
          %v630 = vunpack.c.h.bf16 %v511
          %v631 = vunpack.c.l.bf16 %v512
          %v632 = vunpack.c.h.bf16 %v512
          %v633 = vunpack.c.l.bf16 %v513
          %v634 = vunpack.c.h.bf16 %v513
          %v635 = vunpack.c.l.bf16 %v514
          %v636 = vunpack.c.h.bf16 %v514
          %v637 = vunpack.c.l.bf16 %v515
          %v638 = vunpack.c.h.bf16 %v515
          %v639 = vunpack.c.l.bf16 %v516
          %v640 = vunpack.c.h.bf16 %v516
          %v641 = vunpack.c.l.bf16 %v517
          %v642 = vunpack.c.h.bf16 %v517
          %v643 = vunpack.c.l.bf16 %v518
          %v644 = vunpack.c.h.bf16 %v518
          %v645 = vunpack.c.l.bf16 %v519
          %v646 = vunpack.c.h.bf16 %v519
          %v647 = vunpack.c.l.bf16 %v520
          %v648 = vunpack.c.h.bf16 %v520
          %649 = vst [vmem:[#allocation3] sm:$0xff] %v521
          %650 = vst [vmem:[#allocation3 + $0x8] sm:$0xff] %v522
          %651 = vst [vmem:[#allocation3 + $0x10] sm:$0xff] %v523
          %652 = vst [vmem:[#allocation3 + $0x18] sm:$0xff] %v524
          %653 = vst [vmem:[#allocation3 + $0x20] sm:$0xff] %v525
          %654 = vst [vmem:[#allocation3 + $0x28] sm:$0xff] %v526
          %655 = vst [vmem:[#allocation3 + $0x30] sm:$0xff] %v527
          %656 = vst [vmem:[#allocation3 + $0x38] sm:$0xff] %v528
          %657 = vst [vmem:[#allocation3 + $0x40] sm:$0xff] %v529
          %658 = vst [vmem:[#allocation3 + $0x48] sm:$0xff] %v530
          %659 = vst [vmem:[#allocation3 + $0x50] sm:$0xff] %v531
          %660 = vst [vmem:[#allocation3 + $0x58] sm:$0xff] %v532
          %661 = vst [vmem:[#allocation3 + $0x60] sm:$0xff] %v533
          %662 = vst [vmem:[#allocation3 + $0x68] sm:$0xff] %v534
          %663 = vst [vmem:[#allocation3 + $0x70] sm:$0xff] %v535
          %664 = vst [vmem:[#allocation3 + $0x78] sm:$0xff] %v536
          %665 = vst [vmem:[#allocation3 + $0x80] sm:$0xff] %v537
          %666 = vst [vmem:[#allocation3 + $0x88] sm:$0xff] %v538
          %667 = vst [vmem:[#allocation3 + $0x90] sm:$0xff] %v539
          %668 = vst [vmem:[#allocation3 + $0x98] sm:$0xff] %v540
          %669 = vst [vmem:[#allocation3 + $0xa0] sm:$0xff] %v541
          %670 = vst [vmem:[#allocation3 + $0xa8] sm:$0xff] %v542
          %671 = vst [vmem:[#allocation3 + $0xb0] sm:$0xff] %v543
          %672 = vst [vmem:[#allocation3 + $0xb8] sm:$0xff] %v544
          %673 = vst [vmem:[#allocation3 + $0xc0] sm:$0xff] %v545
          %674 = vst [vmem:[#allocation3 + $0xc8] sm:$0xff] %v546
          %675 = vst [vmem:[#allocation3 + $0xd0] sm:$0xff] %v547
          %676 = vst [vmem:[#allocation3 + $0xd8] sm:$0xff] %v548
          %677 = vst [vmem:[#allocation3 + $0xe0] sm:$0xff] %v549
          %678 = vst [vmem:[#allocation3 + $0xe8] sm:$0xff] %v550
          %679 = vst [vmem:[#allocation3 + $0xf0] sm:$0xff] %v551
          %680 = vst [vmem:[#allocation3 + $0xf8] sm:$0xff] %v552
          %681 = vst [vmem:[#allocation3 + $0x100] sm:$0xff] %v553
          %682 = vst [vmem:[#allocation3 + $0x108] sm:$0xff] %v554
          %683 = vst [vmem:[#allocation3 + $0x110] sm:$0xff] %v555
          %684 = vst [vmem:[#allocation3 + $0x118] sm:$0xff] %v556
          %685 = vst [vmem:[#allocation3 + $0x120] sm:$0xff] %v557
          %686 = vst [vmem:[#allocation3 + $0x128] sm:$0xff] %v558
          %687 = vst [vmem:[#allocation3 + $0x130] sm:$0xff] %v559
          %688 = vst [vmem:[#allocation3 + $0x138] sm:$0xff] %v560
          %689 = vst [vmem:[#allocation3 + $0x140] sm:$0xff] %v561
          %690 = vst [vmem:[#allocation3 + $0x148] sm:$0xff] %v562
          %691 = vst [vmem:[#allocation3 + $0x150] sm:$0xff] %v563
          %692 = vst [vmem:[#allocation3 + $0x158] sm:$0xff] %v564
          %693 = vst [vmem:[#allocation3 + $0x160] sm:$0xff] %v565
          %694 = vst [vmem:[#allocation3 + $0x168] sm:$0xff] %v566
          %695 = vst [vmem:[#allocation3 + $0x170] sm:$0xff] %v567
          %696 = vst [vmem:[#allocation3 + $0x178] sm:$0xff] %v568
          %697 = vst [vmem:[#allocation3 + $0x180] sm:$0xff] %v569
          %698 = vst [vmem:[#allocation3 + $0x188] sm:$0xff] %v570
          %699 = vst [vmem:[#allocation3 + $0x190] sm:$0xff] %v571
          %700 = vst [vmem:[#allocation3 + $0x198] sm:$0xff] %v572
          %701 = vst [vmem:[#allocation3 + $0x1a0] sm:$0xff] %v573
          %702 = vst [vmem:[#allocation3 + $0x1a8] sm:$0xff] %v574
          %703 = vst [vmem:[#allocation3 + $0x1b0] sm:$0xff] %v575
          %704 = vst [vmem:[#allocation3 + $0x1b8] sm:$0xff] %v576
          %705 = vst [vmem:[#allocation3 + $0x1c0] sm:$0xff] %v577
          %706 = vst [vmem:[#allocation3 + $0x1c8] sm:$0xff] %v578
          %707 = vst [vmem:[#allocation3 + $0x1d0] sm:$0xff] %v579
          %708 = vst [vmem:[#allocation3 + $0x1d8] sm:$0xff] %v580
          %709 = vst [vmem:[#allocation3 + $0x1e0] sm:$0xff] %v581
          %710 = vst [vmem:[#allocation3 + $0x1e8] sm:$0xff] %v582
          %711 = vst [vmem:[#allocation3 + $0x1f0] sm:$0xff] %v583
          %712 = vst [vmem:[#allocation3 + $0x1f8] sm:$0xff] %v584
          %713 = vst [vmem:[#allocation3 + $0x200] sm:$0xff] %v585
          %714 = vst [vmem:[#allocation3 + $0x208] sm:$0xff] %v586
          %715 = vst [vmem:[#allocation3 + $0x210] sm:$0xff] %v587
          %716 = vst [vmem:[#allocation3 + $0x218] sm:$0xff] %v588
          %717 = vst [vmem:[#allocation3 + $0x220] sm:$0xff] %v589
          %718 = vst [vmem:[#allocation3 + $0x228] sm:$0xff] %v590
          %719 = vst [vmem:[#allocation3 + $0x230] sm:$0xff] %v591
          %720 = vst [vmem:[#allocation3 + $0x238] sm:$0xff] %v592
          %721 = vst [vmem:[#allocation3 + $0x240] sm:$0xff] %v593
          %722 = vst [vmem:[#allocation3 + $0x248] sm:$0xff] %v594
          %723 = vst [vmem:[#allocation3 + $0x250] sm:$0xff] %v595
          %724 = vst [vmem:[#allocation3 + $0x258] sm:$0xff] %v596
          %725 = vst [vmem:[#allocation3 + $0x260] sm:$0xff] %v597
          %726 = vst [vmem:[#allocation3 + $0x268] sm:$0xff] %v598
          %727 = vst [vmem:[#allocation3 + $0x270] sm:$0xff] %v599
          %728 = vst [vmem:[#allocation3 + $0x278] sm:$0xff] %v600
          %729 = vst [vmem:[#allocation3 + $0x280] sm:$0xff] %v601
          %730 = vst [vmem:[#allocation3 + $0x288] sm:$0xff] %v602
          %731 = vst [vmem:[#allocation3 + $0x290] sm:$0xff] %v603
          %732 = vst [vmem:[#allocation3 + $0x298] sm:$0xff] %v604
          %733 = vst [vmem:[#allocation3 + $0x2a0] sm:$0xff] %v605
          %734 = vst [vmem:[#allocation3 + $0x2a8] sm:$0xff] %v606
          %735 = vst [vmem:[#allocation3 + $0x2b0] sm:$0xff] %v607
          %736 = vst [vmem:[#allocation3 + $0x2b8] sm:$0xff] %v608
          %737 = vst [vmem:[#allocation3 + $0x2c0] sm:$0xff] %v609
          %738 = vst [vmem:[#allocation3 + $0x2c8] sm:$0xff] %v610
          %739 = vst [vmem:[#allocation3 + $0x2d0] sm:$0xff] %v611
          %740 = vst [vmem:[#allocation3 + $0x2d8] sm:$0xff] %v612
          %741 = vst [vmem:[#allocation3 + $0x2e0] sm:$0xff] %v613
          %742 = vst [vmem:[#allocation3 + $0x2e8] sm:$0xff] %v614
          %743 = vst [vmem:[#allocation3 + $0x2f0] sm:$0xff] %v615
          %744 = vst [vmem:[#allocation3 + $0x2f8] sm:$0xff] %v616
          %745 = vst [vmem:[#allocation3 + $0x300] sm:$0xff] %v617
          %746 = vst [vmem:[#allocation3 + $0x308] sm:$0xff] %v618
          %747 = vst [vmem:[#allocation3 + $0x310] sm:$0xff] %v619
          %748 = vst [vmem:[#allocation3 + $0x318] sm:$0xff] %v620
          %749 = vst [vmem:[#allocation3 + $0x320] sm:$0xff] %v621
          %750 = vst [vmem:[#allocation3 + $0x328] sm:$0xff] %v622
          %751 = vst [vmem:[#allocation3 + $0x330] sm:$0xff] %v623
          %752 = vst [vmem:[#allocation3 + $0x338] sm:$0xff] %v624
          %753 = vst [vmem:[#allocation3 + $0x340] sm:$0xff] %v625
          %754 = vst [vmem:[#allocation3 + $0x348] sm:$0xff] %v626
          %755 = vst [vmem:[#allocation3 + $0x350] sm:$0xff] %v627
          %756 = vst [vmem:[#allocation3 + $0x358] sm:$0xff] %v628
          %757 = vst [vmem:[#allocation3 + $0x360] sm:$0xff] %v629
          %758 = vst [vmem:[#allocation3 + $0x368] sm:$0xff] %v630
          %759 = vst [vmem:[#allocation3 + $0x370] sm:$0xff] %v631
          %760 = vst [vmem:[#allocation3 + $0x378] sm:$0xff] %v632
          %761 = vst [vmem:[#allocation3 + $0x380] sm:$0xff] %v633
          %762 = vst [vmem:[#allocation3 + $0x388] sm:$0xff] %v634
          %763 = vst [vmem:[#allocation3 + $0x390] sm:$0xff] %v635
          %764 = vst [vmem:[#allocation3 + $0x398] sm:$0xff] %v636
          %765 = vst [vmem:[#allocation3 + $0x3a0] sm:$0xff] %v637
          %766 = vst [vmem:[#allocation3 + $0x3a8] sm:$0xff] %v638
          %767 = vst [vmem:[#allocation3 + $0x3b0] sm:$0xff] %v639
          %768 = vst [vmem:[#allocation3 + $0x3b8] sm:$0xff] %v640
          %769 = vst [vmem:[#allocation3 + $0x3c0] sm:$0xff] %v641
          %770 = vst [vmem:[#allocation3 + $0x3c8] sm:$0xff] %v642
          %771 = vst [vmem:[#allocation3 + $0x3d0] sm:$0xff] %v643
          %772 = vst [vmem:[#allocation3 + $0x3d8] sm:$0xff] %v644
          %773 = vst [vmem:[#allocation3 + $0x3e0] sm:$0xff] %v645
          %774 = vst [vmem:[#allocation3 + $0x3e8] sm:$0xff] %v646
          %775 = vst [vmem:[#allocation3 + $0x3f0] sm:$0xff] %v647
          %776 = vst [vmem:[#allocation3 + $0x3f8] sm:$0xff] %v648
          %v777 = vld [vmem:[%s4] sm:$0xf]
          %v778 = vld [vmem:[%s4 + $0x4] sm:$0xf]
          %v779 = vld [vmem:[%s4 + $0x8] sm:$0xf]
          %v780 = vld [vmem:[%s4 + $0xc] sm:$0xf]
          %v781 = vld [vmem:[%s4 + $0x10] sm:$0xf]
          %v782 = vld [vmem:[%s4 + $0x14] sm:$0xf]
          %v783 = vld [vmem:[%s4 + $0x18] sm:$0xf]
          %v784 = vld [vmem:[%s4 + $0x1c] sm:$0xf]
          %v785 = vld [vmem:[%s4 + $0x20] sm:$0xf]
          %v786 = vld [vmem:[%s4 + $0x24] sm:$0xf]
          %v787 = vld [vmem:[%s4 + $0x28] sm:$0xf]
          %v788 = vld [vmem:[%s4 + $0x2c] sm:$0xf]
          %v789 = vld [vmem:[%s4 + $0x30] sm:$0xf]
          %v790 = vld [vmem:[%s4 + $0x34] sm:$0xf]
          %v791 = vld [vmem:[%s4 + $0x38] sm:$0xf]
          %v792 = vld [vmem:[%s4 + $0x3c] sm:$0xf]
          %v793 = vld [vmem:[%s4 + $0x40] sm:$0xf]
          %v794 = vld [vmem:[%s4 + $0x44] sm:$0xf]
          %v795 = vld [vmem:[%s4 + $0x48] sm:$0xf]
          %v796 = vld [vmem:[%s4 + $0x4c] sm:$0xf]
          %v797 = vld [vmem:[%s4 + $0x50] sm:$0xf]
          %v798 = vld [vmem:[%s4 + $0x54] sm:$0xf]
          %v799 = vld [vmem:[%s4 + $0x58] sm:$0xf]
          %v800 = vld [vmem:[%s4 + $0x5c] sm:$0xf]
          %v801 = vld [vmem:[%s4 + $0x60] sm:$0xf]
          %v802 = vld [vmem:[%s4 + $0x64] sm:$0xf]
          %v803 = vld [vmem:[%s4 + $0x68] sm:$0xf]
          %v804 = vld [vmem:[%s4 + $0x6c] sm:$0xf]
          %v805 = vld [vmem:[%s4 + $0x70] sm:$0xf]
          %v806 = vld [vmem:[%s4 + $0x74] sm:$0xf]
          %v807 = vld [vmem:[%s4 + $0x78] sm:$0xf]
          %v808 = vld [vmem:[%s4 + $0x7c] sm:$0xf]
          %v809 = vunpack.c.l.bf16 %v777
          %v810 = vunpack.c.l.bf16 %v778
          %v811 = vunpack.c.l.bf16 %v779
          %v812 = vunpack.c.l.bf16 %v780
          %v813 = vunpack.c.l.bf16 %v781
          %v814 = vunpack.c.l.bf16 %v782
          %v815 = vunpack.c.l.bf16 %v783
          %v816 = vunpack.c.l.bf16 %v784
          %v817 = vunpack.c.l.bf16 %v785
          %v818 = vunpack.c.l.bf16 %v786
          %v819 = vunpack.c.l.bf16 %v787
          %v820 = vunpack.c.l.bf16 %v788
          %v821 = vunpack.c.l.bf16 %v789
          %v822 = vunpack.c.l.bf16 %v790
          %v823 = vunpack.c.l.bf16 %v791
          %v824 = vunpack.c.l.bf16 %v792
          %v825 = vunpack.c.l.bf16 %v793
          %v826 = vunpack.c.l.bf16 %v794
          %v827 = vunpack.c.l.bf16 %v795
          %v828 = vunpack.c.l.bf16 %v796
          %v829 = vunpack.c.l.bf16 %v797
          %v830 = vunpack.c.l.bf16 %v798
          %v831 = vunpack.c.l.bf16 %v799
          %v832 = vunpack.c.l.bf16 %v800
          %v833 = vunpack.c.l.bf16 %v801
          %v834 = vunpack.c.l.bf16 %v802
          %v835 = vunpack.c.l.bf16 %v803
          %v836 = vunpack.c.l.bf16 %v804
          %v837 = vunpack.c.l.bf16 %v805
          %v838 = vunpack.c.l.bf16 %v806
          %v839 = vunpack.c.l.bf16 %v807
          %v840 = vunpack.c.l.bf16 %v808
          %841 = vst [vmem:[#allocation4] sm:$0xff] %v809
          %842 = vst [vmem:[#allocation4 + $0x8] sm:$0xff] %v810
          %843 = vst [vmem:[#allocation4 + $0x10] sm:$0xff] %v811
          %844 = vst [vmem:[#allocation4 + $0x18] sm:$0xff] %v812
          %845 = vst [vmem:[#allocation4 + $0x20] sm:$0xff] %v813
          %846 = vst [vmem:[#allocation4 + $0x28] sm:$0xff] %v814
          %847 = vst [vmem:[#allocation4 + $0x30] sm:$0xff] %v815
          %848 = vst [vmem:[#allocation4 + $0x38] sm:$0xff] %v816
          %849 = vst [vmem:[#allocation4 + $0x40] sm:$0xff] %v817
          %850 = vst [vmem:[#allocation4 + $0x48] sm:$0xff] %v818
          %851 = vst [vmem:[#allocation4 + $0x50] sm:$0xff] %v819
          %852 = vst [vmem:[#allocation4 + $0x58] sm:$0xff] %v820
          %853 = vst [vmem:[#allocation4 + $0x60] sm:$0xff] %v821
          %854 = vst [vmem:[#allocation4 + $0x68] sm:$0xff] %v822
          %855 = vst [vmem:[#allocation4 + $0x70] sm:$0xff] %v823
          %856 = vst [vmem:[#allocation4 + $0x78] sm:$0xff] %v824
          %857 = vst [vmem:[#allocation4 + $0x80] sm:$0xff] %v825
          %858 = vst [vmem:[#allocation4 + $0x88] sm:$0xff] %v826
          %859 = vst [vmem:[#allocation4 + $0x90] sm:$0xff] %v827
          %860 = vst [vmem:[#allocation4 + $0x98] sm:$0xff] %v828
          %861 = vst [vmem:[#allocation4 + $0xa0] sm:$0xff] %v829
          %862 = vst [vmem:[#allocation4 + $0xa8] sm:$0xff] %v830
          %863 = vst [vmem:[#allocation4 + $0xb0] sm:$0xff] %v831
          %864 = vst [vmem:[#allocation4 + $0xb8] sm:$0xff] %v832
          %865 = vst [vmem:[#allocation4 + $0xc0] sm:$0xff] %v833
          %866 = vst [vmem:[#allocation4 + $0xc8] sm:$0xff] %v834
          %867 = vst [vmem:[#allocation4 + $0xd0] sm:$0xff] %v835
          %868 = vst [vmem:[#allocation4 + $0xd8] sm:$0xff] %v836
          %869 = vst [vmem:[#allocation4 + $0xe0] sm:$0xff] %v837
          %870 = vst [vmem:[#allocation4 + $0xe8] sm:$0xff] %v838
          %871 = vst [vmem:[#allocation4 + $0xf0] sm:$0xff] %v839
          %872 = vst [vmem:[#allocation4 + $0xf8] sm:$0xff] %v840
          %v873 = vld [vmem:[%s5] sm:$0xff]
          %v874 = vld [vmem:[%s5 + $0x8] sm:$0xff]
          %v875 = vld [vmem:[%s5 + $0x10] sm:$0xff]
          %v876 = vld [vmem:[%s5 + $0x18] sm:$0xff]
          %v877 = vld [vmem:[%s5 + $0x20] sm:$0xff]
          %v878 = vld [vmem:[%s5 + $0x28] sm:$0xff]
          %v879 = vld [vmem:[%s5 + $0x30] sm:$0xff]
          %v880 = vld [vmem:[%s5 + $0x38] sm:$0xff]
          %v881 = vld [vmem:[%s5 + $0x40] sm:$0xff]
          %v882 = vld [vmem:[%s5 + $0x48] sm:$0xff]
          %v883 = vld [vmem:[%s5 + $0x50] sm:$0xff]
          %v884 = vld [vmem:[%s5 + $0x58] sm:$0xff]
          %v885 = vld [vmem:[%s5 + $0x60] sm:$0xff]
          %v886 = vld [vmem:[%s5 + $0x68] sm:$0xff]
          %v887 = vld [vmem:[%s5 + $0x70] sm:$0xff]
          %v888 = vld [vmem:[%s5 + $0x78] sm:$0xff]
          %v889 = vunpack.c.l.bf16 %v873
          %v890 = vunpack.c.h.bf16 %v873
          %v891 = vunpack.c.l.bf16 %v874
          %v892 = vunpack.c.h.bf16 %v874
          %v893 = vunpack.c.l.bf16 %v875
          %v894 = vunpack.c.h.bf16 %v875
          %v895 = vunpack.c.l.bf16 %v876
          %v896 = vunpack.c.h.bf16 %v876
          %v897 = vunpack.c.l.bf16 %v877
          %v898 = vunpack.c.h.bf16 %v877
          %v899 = vunpack.c.l.bf16 %v878
          %v900 = vunpack.c.h.bf16 %v878
          %v901 = vunpack.c.l.bf16 %v879
          %v902 = vunpack.c.h.bf16 %v879
          %v903 = vunpack.c.l.bf16 %v880
          %v904 = vunpack.c.h.bf16 %v880
          %v905 = vunpack.c.l.bf16 %v881
          %v906 = vunpack.c.h.bf16 %v881
          %v907 = vunpack.c.l.bf16 %v882
          %v908 = vunpack.c.h.bf16 %v882
          %v909 = vunpack.c.l.bf16 %v883
          %v910 = vunpack.c.h.bf16 %v883
          %v911 = vunpack.c.l.bf16 %v884
          %v912 = vunpack.c.h.bf16 %v884
          %v913 = vunpack.c.l.bf16 %v885
          %v914 = vunpack.c.h.bf16 %v885
          %v915 = vunpack.c.l.bf16 %v886
          %v916 = vunpack.c.h.bf16 %v886
          %v917 = vunpack.c.l.bf16 %v887
          %v918 = vunpack.c.h.bf16 %v887
          %v919 = vunpack.c.l.bf16 %v888
          %v920 = vunpack.c.h.bf16 %v888
          %921 = vst [vmem:[#allocation5] sm:$0xff] %v889
          %922 = vst [vmem:[#allocation5 + $0x8] sm:$0xff] %v890
          %923 = vst [vmem:[#allocation5 + $0x10] sm:$0xff] %v891
          %924 = vst [vmem:[#allocation5 + $0x18] sm:$0xff] %v892
          %925 = vst [vmem:[#allocation5 + $0x20] sm:$0xff] %v893
          %926 = vst [vmem:[#allocation5 + $0x28] sm:$0xff] %v894
          %927 = vst [vmem:[#allocation5 + $0x30] sm:$0xff] %v895
          %928 = vst [vmem:[#allocation5 + $0x38] sm:$0xff] %v896
          %929 = vst [vmem:[#allocation5 + $0x40] sm:$0xff] %v897
          %930 = vst [vmem:[#allocation5 + $0x48] sm:$0xff] %v898
          %931 = vst [vmem:[#allocation5 + $0x50] sm:$0xff] %v899
          %932 = vst [vmem:[#allocation5 + $0x58] sm:$0xff] %v900
          %933 = vst [vmem:[#allocation5 + $0x60] sm:$0xff] %v901
          %934 = vst [vmem:[#allocation5 + $0x68] sm:$0xff] %v902
          %935 = vst [vmem:[#allocation5 + $0x70] sm:$0xff] %v903
          %936 = vst [vmem:[#allocation5 + $0x78] sm:$0xff] %v904
          %937 = vst [vmem:[#allocation5 + $0x80] sm:$0xff] %v905
          %938 = vst [vmem:[#allocation5 + $0x88] sm:$0xff] %v906
          %939 = vst [vmem:[#allocation5 + $0x90] sm:$0xff] %v907
          %940 = vst [vmem:[#allocation5 + $0x98] sm:$0xff] %v908
          %941 = vst [vmem:[#allocation5 + $0xa0] sm:$0xff] %v909
          %942 = vst [vmem:[#allocation5 + $0xa8] sm:$0xff] %v910
          %943 = vst [vmem:[#allocation5 + $0xb0] sm:$0xff] %v911
          %944 = vst [vmem:[#allocation5 + $0xb8] sm:$0xff] %v912
          %945 = vst [vmem:[#allocation5 + $0xc0] sm:$0xff] %v913
          %946 = vst [vmem:[#allocation5 + $0xc8] sm:$0xff] %v914
          %947 = vst [vmem:[#allocation5 + $0xd0] sm:$0xff] %v915
          %948 = vst [vmem:[#allocation5 + $0xd8] sm:$0xff] %v916
          %949 = vst [vmem:[#allocation5 + $0xe0] sm:$0xff] %v917
          %950 = vst [vmem:[#allocation5 + $0xe8] sm:$0xff] %v918
          %951 = vst [vmem:[#allocation5 + $0xf0] sm:$0xff] %v919
          %952 = vst [vmem:[#allocation5 + $0xf8] sm:$0xff] %v920
          %v953 = vld [vmem:[%s7] sm:$0xf]
          %v954 = vld [vmem:[%s7 + $0x4] sm:$0xf]
          %v955 = vld [vmem:[%s7 + $0x8] sm:$0xf]
          %v956 = vld [vmem:[%s7 + $0xc] sm:$0xf]
          %v957 = vld [vmem:[%s7 + $0x10] sm:$0xf]
          %v958 = vld [vmem:[%s7 + $0x14] sm:$0xf]
          %v959 = vld [vmem:[%s7 + $0x18] sm:$0xf]
          %v960 = vld [vmem:[%s7 + $0x1c] sm:$0xf]
          %v961 = vld [vmem:[%s7 + $0x20] sm:$0xf]
          %v962 = vld [vmem:[%s7 + $0x24] sm:$0xf]
          %v963 = vld [vmem:[%s7 + $0x28] sm:$0xf]
          %v964 = vld [vmem:[%s7 + $0x2c] sm:$0xf]
          %v965 = vld [vmem:[%s7 + $0x30] sm:$0xf]
          %v966 = vld [vmem:[%s7 + $0x34] sm:$0xf]
          %v967 = vld [vmem:[%s7 + $0x38] sm:$0xf]
          %v968 = vld [vmem:[%s7 + $0x3c] sm:$0xf]
          %v969 = vunpack.c.l.bf16 %v953
          %v970 = vunpack.c.l.bf16 %v954
          %v971 = vunpack.c.l.bf16 %v955
          %v972 = vunpack.c.l.bf16 %v956
          %v973 = vunpack.c.l.bf16 %v957
          %v974 = vunpack.c.l.bf16 %v958
          %v975 = vunpack.c.l.bf16 %v959
          %v976 = vunpack.c.l.bf16 %v960
          %v977 = vunpack.c.l.bf16 %v961
          %v978 = vunpack.c.l.bf16 %v962
          %v979 = vunpack.c.l.bf16 %v963
          %v980 = vunpack.c.l.bf16 %v964
          %v981 = vunpack.c.l.bf16 %v965
          %v982 = vunpack.c.l.bf16 %v966
          %v983 = vunpack.c.l.bf16 %v967
          %v984 = vunpack.c.l.bf16 %v968
          %985 = vst [vmem:[#allocation6] sm:$0xff] %v969
          %986 = vst [vmem:[#allocation6 + $0x8] sm:$0xff] %v970
          %987 = vst [vmem:[#allocation6 + $0x10] sm:$0xff] %v971
          %988 = vst [vmem:[#allocation6 + $0x18] sm:$0xff] %v972
          %989 = vst [vmem:[#allocation6 + $0x20] sm:$0xff] %v973
          %990 = vst [vmem:[#allocation6 + $0x28] sm:$0xff] %v974
          %991 = vst [vmem:[#allocation6 + $0x30] sm:$0xff] %v975
          %992 = vst [vmem:[#allocation6 + $0x38] sm:$0xff] %v976
          %993 = vst [vmem:[#allocation6 + $0x40] sm:$0xff] %v977
          %994 = vst [vmem:[#allocation6 + $0x48] sm:$0xff] %v978
          %995 = vst [vmem:[#allocation6 + $0x50] sm:$0xff] %v979
          %996 = vst [vmem:[#allocation6 + $0x58] sm:$0xff] %v980
          %997 = vst [vmem:[#allocation6 + $0x60] sm:$0xff] %v981
          %998 = vst [vmem:[#allocation6 + $0x68] sm:$0xff] %v982
          %999 = vst [vmem:[#allocation6 + $0x70] sm:$0xff] %v983
          %1000 = vst [vmem:[#allocation6 + $0x78] sm:$0xff] %v984
          %v1001 = vld [vmem:[%s8] sm:$0xff]
          %v1002 = vld [vmem:[%s8 + $0x8] sm:$0xff]
          %v1003 = vld [vmem:[%s8 + $0x10] sm:$0xff]
          %v1004 = vld [vmem:[%s8 + $0x18] sm:$0xff]
          %v1005 = vld [vmem:[%s8 + $0x20] sm:$0xff]
          %v1006 = vld [vmem:[%s8 + $0x28] sm:$0xff]
          %v1007 = vld [vmem:[%s8 + $0x30] sm:$0xff]
          %v1008 = vld [vmem:[%s8 + $0x38] sm:$0xff]
          %v1009 = vld [vmem:[%s8 + $0x40] sm:$0xff]
          %v1010 = vld [vmem:[%s8 + $0x48] sm:$0xff]
          %v1011 = vld [vmem:[%s8 + $0x50] sm:$0xff]
          %v1012 = vld [vmem:[%s8 + $0x58] sm:$0xff]
          %v1013 = vld [vmem:[%s8 + $0x60] sm:$0xff]
          %v1014 = vld [vmem:[%s8 + $0x68] sm:$0xff]
          %v1015 = vld [vmem:[%s8 + $0x70] sm:$0xff]
          %v1016 = vld [vmem:[%s8 + $0x78] sm:$0xff]
          %v1017 = vunpack.c.l.bf16 %v1001
          %v1018 = vunpack.c.h.bf16 %v1001
          %v1019 = vunpack.c.l.bf16 %v1002
          %v1020 = vunpack.c.h.bf16 %v1002
          %v1021 = vunpack.c.l.bf16 %v1003
          %v1022 = vunpack.c.h.bf16 %v1003
          %v1023 = vunpack.c.l.bf16 %v1004
          %v1024 = vunpack.c.h.bf16 %v1004
          %v1025 = vunpack.c.l.bf16 %v1005
          %v1026 = vunpack.c.h.bf16 %v1005
          %v1027 = vunpack.c.l.bf16 %v1006
          %v1028 = vunpack.c.h.bf16 %v1006
          %v1029 = vunpack.c.l.bf16 %v1007
          %v1030 = vunpack.c.h.bf16 %v1007
          %v1031 = vunpack.c.l.bf16 %v1008
          %v1032 = vunpack.c.h.bf16 %v1008
          %v1033 = vunpack.c.l.bf16 %v1009
          %v1034 = vunpack.c.h.bf16 %v1009
          %v1035 = vunpack.c.l.bf16 %v1010
          %v1036 = vunpack.c.h.bf16 %v1010
          %v1037 = vunpack.c.l.bf16 %v1011
          %v1038 = vunpack.c.h.bf16 %v1011
          %v1039 = vunpack.c.l.bf16 %v1012
          %v1040 = vunpack.c.h.bf16 %v1012
          %v1041 = vunpack.c.l.bf16 %v1013
          %v1042 = vunpack.c.h.bf16 %v1013
          %v1043 = vunpack.c.l.bf16 %v1014
          %v1044 = vunpack.c.h.bf16 %v1014
          %v1045 = vunpack.c.l.bf16 %v1015
          %v1046 = vunpack.c.h.bf16 %v1015
          %v1047 = vunpack.c.l.bf16 %v1016
          %v1048 = vunpack.c.h.bf16 %v1016
          %1049 = vst [vmem:[#allocation7] sm:$0xff] %v1017
          %1050 = vst [vmem:[#allocation7 + $0x8] sm:$0xff] %v1018
          %1051 = vst [vmem:[#allocation7 + $0x10] sm:$0xff] %v1019
          %1052 = vst [vmem:[#allocation7 + $0x18] sm:$0xff] %v1020
          %1053 = vst [vmem:[#allocation7 + $0x20] sm:$0xff] %v1021
          %1054 = vst [vmem:[#allocation7 + $0x28] sm:$0xff] %v1022
          %1055 = vst [vmem:[#allocation7 + $0x30] sm:$0xff] %v1023
          %1056 = vst [vmem:[#allocation7 + $0x38] sm:$0xff] %v1024
          %1057 = vst [vmem:[#allocation7 + $0x40] sm:$0xff] %v1025
          %1058 = vst [vmem:[#allocation7 + $0x48] sm:$0xff] %v1026
          %1059 = vst [vmem:[#allocation7 + $0x50] sm:$0xff] %v1027
          %1060 = vst [vmem:[#allocation7 + $0x58] sm:$0xff] %v1028
          %1061 = vst [vmem:[#allocation7 + $0x60] sm:$0xff] %v1029
          %1062 = vst [vmem:[#allocation7 + $0x68] sm:$0xff] %v1030
          %1063 = vst [vmem:[#allocation7 + $0x70] sm:$0xff] %v1031
          %1064 = vst [vmem:[#allocation7 + $0x78] sm:$0xff] %v1032
          %1065 = vst [vmem:[#allocation7 + $0x80] sm:$0xff] %v1033
          %1066 = vst [vmem:[#allocation7 + $0x88] sm:$0xff] %v1034
          %1067 = vst [vmem:[#allocation7 + $0x90] sm:$0xff] %v1035
          %1068 = vst [vmem:[#allocation7 + $0x98] sm:$0xff] %v1036
          %1069 = vst [vmem:[#allocation7 + $0xa0] sm:$0xff] %v1037
          %1070 = vst [vmem:[#allocation7 + $0xa8] sm:$0xff] %v1038
          %1071 = vst [vmem:[#allocation7 + $0xb0] sm:$0xff] %v1039
          %1072 = vst [vmem:[#allocation7 + $0xb8] sm:$0xff] %v1040
          %1073 = vst [vmem:[#allocation7 + $0xc0] sm:$0xff] %v1041
          %1074 = vst [vmem:[#allocation7 + $0xc8] sm:$0xff] %v1042
          %1075 = vst [vmem:[#allocation7 + $0xd0] sm:$0xff] %v1043
          %1076 = vst [vmem:[#allocation7 + $0xd8] sm:$0xff] %v1044
          %1077 = vst [vmem:[#allocation7 + $0xe0] sm:$0xff] %v1045
          %1078 = vst [vmem:[#allocation7 + $0xe8] sm:$0xff] %v1046
          %1079 = vst [vmem:[#allocation7 + $0xf0] sm:$0xff] %v1047
          %1080 = vst [vmem:[#allocation7 + $0xf8] sm:$0xff] %v1048
          %v1081 = vld [vmem:[%s0] sm:$0xff]
          %v1082 = vld [vmem:[%s0 + $0x8] sm:$0xff]
          %v1083 = vld [vmem:[%s0 + $0x10] sm:$0xff]
          %v1084 = vld [vmem:[%s0 + $0x18] sm:$0xff]
          %v1085 = vld [vmem:[%s0 + $0x20] sm:$0xff]
          %v1086 = vld [vmem:[%s0 + $0x28] sm:$0xff]
          %v1087 = vld [vmem:[%s0 + $0x30] sm:$0xff]
          %v1088 = vld [vmem:[%s0 + $0x38] sm:$0xff]
          %v1089 = vld [vmem:[%s0 + $0x40] sm:$0xff]
          %v1090 = vld [vmem:[%s0 + $0x48] sm:$0xff]
          %v1091 = vld [vmem:[%s0 + $0x50] sm:$0xff]
          %v1092 = vld [vmem:[%s0 + $0x58] sm:$0xff]
          %v1093 = vld [vmem:[%s0 + $0x60] sm:$0xff]
          %v1094 = vld [vmem:[%s0 + $0x68] sm:$0xff]
          %v1095 = vld [vmem:[%s0 + $0x70] sm:$0xff]
          %v1096 = vld [vmem:[%s0 + $0x78] sm:$0xff]
          %v1097 = vld [vmem:[%s0 + $0x80] sm:$0xff]
          %v1098 = vld [vmem:[%s0 + $0x88] sm:$0xff]
          %v1099 = vld [vmem:[%s0 + $0x90] sm:$0xff]
          %v1100 = vld [vmem:[%s0 + $0x98] sm:$0xff]
          %v1101 = vld [vmem:[%s0 + $0xa0] sm:$0xff]
          %v1102 = vld [vmem:[%s0 + $0xa8] sm:$0xff]
          %v1103 = vld [vmem:[%s0 + $0xb0] sm:$0xff]
          %v1104 = vld [vmem:[%s0 + $0xb8] sm:$0xff]
          %v1105 = vld [vmem:[%s0 + $0xc0] sm:$0xff]
          %v1106 = vld [vmem:[%s0 + $0xc8] sm:$0xff]
          %v1107 = vld [vmem:[%s0 + $0xd0] sm:$0xff]
          %v1108 = vld [vmem:[%s0 + $0xd8] sm:$0xff]
          %v1109 = vld [vmem:[%s0 + $0xe0] sm:$0xff]
          %v1110 = vld [vmem:[%s0 + $0xe8] sm:$0xff]
          %v1111 = vld [vmem:[%s0 + $0xf0] sm:$0xff]
          %v1112 = vld [vmem:[%s0 + $0xf8] sm:$0xff]
          %v1113 = vld [vmem:[%s0 + $0x100] sm:$0xff]
          %v1114 = vld [vmem:[%s0 + $0x108] sm:$0xff]
          %v1115 = vld [vmem:[%s0 + $0x110] sm:$0xff]
          %v1116 = vld [vmem:[%s0 + $0x118] sm:$0xff]
          %v1117 = vld [vmem:[%s0 + $0x120] sm:$0xff]
          %v1118 = vld [vmem:[%s0 + $0x128] sm:$0xff]
          %v1119 = vld [vmem:[%s0 + $0x130] sm:$0xff]
          %v1120 = vld [vmem:[%s0 + $0x138] sm:$0xff]
          %v1121 = vld [vmem:[%s0 + $0x140] sm:$0xff]
          %v1122 = vld [vmem:[%s0 + $0x148] sm:$0xff]
          %v1123 = vld [vmem:[%s0 + $0x150] sm:$0xff]
          %v1124 = vld [vmem:[%s0 + $0x158] sm:$0xff]
          %v1125 = vld [vmem:[%s0 + $0x160] sm:$0xff]
          %v1126 = vld [vmem:[%s0 + $0x168] sm:$0xff]
          %v1127 = vld [vmem:[%s0 + $0x170] sm:$0xff]
          %v1128 = vld [vmem:[%s0 + $0x178] sm:$0xff]
          %v1129 = vld [vmem:[#allocation8] sm:$0xff]
          %v1130 = vld [vmem:[#allocation8 + $0x8] sm:$0xff]
          %v1131 = vld [vmem:[#allocation8 + $0x10] sm:$0xff]
          %v1132 = vld [vmem:[#allocation8 + $0x18] sm:$0xff]
          %v1133 = vld [vmem:[#allocation8 + $0x20] sm:$0xff]
          %v1134 = vld [vmem:[#allocation8 + $0x28] sm:$0xff]
          %v1135 = vld [vmem:[#allocation8 + $0x30] sm:$0xff]
          %v1136 = vld [vmem:[#allocation8 + $0x38] sm:$0xff]
          %v1137 = vld [vmem:[#allocation8 + $0x40] sm:$0xff]
          %v1138 = vld [vmem:[#allocation8 + $0x48] sm:$0xff]
          %v1139 = vld [vmem:[#allocation8 + $0x50] sm:$0xff]
          %v1140 = vld [vmem:[#allocation8 + $0x58] sm:$0xff]
          %v1141 = vld [vmem:[#allocation8 + $0x60] sm:$0xff]
          %v1142 = vld [vmem:[#allocation8 + $0x68] sm:$0xff]
          %v1143 = vld [vmem:[#allocation8 + $0x70] sm:$0xff]
          %v1144 = vld [vmem:[#allocation8 + $0x78] sm:$0xff]
          %v1145 = vld [vmem:[#allocation8 + $0x80] sm:$0xff]
          %v1146 = vld [vmem:[#allocation8 + $0x88] sm:$0xff]
          %v1147 = vld [vmem:[#allocation8 + $0x90] sm:$0xff]
          %v1148 = vld [vmem:[#allocation8 + $0x98] sm:$0xff]
          %v1149 = vld [vmem:[#allocation8 + $0xa0] sm:$0xff]
          %v1150 = vld [vmem:[#allocation8 + $0xa8] sm:$0xff]
          %v1151 = vld [vmem:[#allocation8 + $0xb0] sm:$0xff]
          %v1152 = vld [vmem:[#allocation8 + $0xb8] sm:$0xff]
          %v1153 = vld [vmem:[#allocation8 + $0xc0] sm:$0xff]
          %v1154 = vld [vmem:[#allocation8 + $0xc8] sm:$0xff]
          %v1155 = vld [vmem:[#allocation8 + $0xd0] sm:$0xff]
          %v1156 = vld [vmem:[#allocation8 + $0xd8] sm:$0xff]
          %v1157 = vld [vmem:[#allocation8 + $0xe0] sm:$0xff]
          %v1158 = vld [vmem:[#allocation8 + $0xe8] sm:$0xff]
          %v1159 = vld [vmem:[#allocation8 + $0xf0] sm:$0xff]
          %v1160 = vld [vmem:[#allocation8 + $0xf8] sm:$0xff]
          %v1161 = vld [vmem:[#allocation8 + $0x100] sm:$0xff]
          %v1162 = vld [vmem:[#allocation8 + $0x108] sm:$0xff]
          %v1163 = vld [vmem:[#allocation8 + $0x110] sm:$0xff]
          %v1164 = vld [vmem:[#allocation8 + $0x118] sm:$0xff]
          %v1165 = vld [vmem:[#allocation8 + $0x120] sm:$0xff]
          %v1166 = vld [vmem:[#allocation8 + $0x128] sm:$0xff]
          %v1167 = vld [vmem:[#allocation8 + $0x130] sm:$0xff]
          %v1168 = vld [vmem:[#allocation8 + $0x138] sm:$0xff]
          %v1169 = vld [vmem:[#allocation8 + $0x140] sm:$0xff]
          %v1170 = vld [vmem:[#allocation8 + $0x148] sm:$0xff]
          %v1171 = vld [vmem:[#allocation8 + $0x150] sm:$0xff]
          %v1172 = vld [vmem:[#allocation8 + $0x158] sm:$0xff]
          %v1173 = vld [vmem:[#allocation8 + $0x160] sm:$0xff]
          %v1174 = vld [vmem:[#allocation8 + $0x168] sm:$0xff]
          %v1175 = vld [vmem:[#allocation8 + $0x170] sm:$0xff]
          %v1176 = vld [vmem:[#allocation8 + $0x178] sm:$0xff]
          %v1177 = vld [vmem:[#allocation8 + $0x180] sm:$0xff]
          %v1178 = vld [vmem:[#allocation8 + $0x188] sm:$0xff]
          %v1179 = vld [vmem:[#allocation8 + $0x190] sm:$0xff]
          %v1180 = vld [vmem:[#allocation8 + $0x198] sm:$0xff]
          %v1181 = vld [vmem:[#allocation8 + $0x1a0] sm:$0xff]
          %v1182 = vld [vmem:[#allocation8 + $0x1a8] sm:$0xff]
          %v1183 = vld [vmem:[#allocation8 + $0x1b0] sm:$0xff]
          %v1184 = vld [vmem:[#allocation8 + $0x1b8] sm:$0xff]
          %v1185 = vld [vmem:[#allocation8 + $0x1c0] sm:$0xff]
          %v1186 = vld [vmem:[#allocation8 + $0x1c8] sm:$0xff]
          %v1187 = vld [vmem:[#allocation8 + $0x1d0] sm:$0xff]
          %v1188 = vld [vmem:[#allocation8 + $0x1d8] sm:$0xff]
          %v1189 = vld [vmem:[#allocation8 + $0x1e0] sm:$0xff]
          %v1190 = vld [vmem:[#allocation8 + $0x1e8] sm:$0xff]
          %v1191 = vld [vmem:[#allocation8 + $0x1f0] sm:$0xff]
          %v1192 = vld [vmem:[#allocation8 + $0x1f8] sm:$0xff]
          %v1193 = vld [vmem:[#allocation8 + $0x200] sm:$0xff]
          %v1194 = vld [vmem:[#allocation8 + $0x208] sm:$0xff]
          %v1195 = vld [vmem:[#allocation8 + $0x210] sm:$0xff]
          %v1196 = vld [vmem:[#allocation8 + $0x218] sm:$0xff]
          %v1197 = vld [vmem:[#allocation8 + $0x220] sm:$0xff]
          %v1198 = vld [vmem:[#allocation8 + $0x228] sm:$0xff]
          %v1199 = vld [vmem:[#allocation8 + $0x230] sm:$0xff]
          %v1200 = vld [vmem:[#allocation8 + $0x238] sm:$0xff]
          %v1201 = vld [vmem:[#allocation8 + $0x240] sm:$0xff]
          %v1202 = vld [vmem:[#allocation8 + $0x248] sm:$0xff]
          %v1203 = vld [vmem:[#allocation8 + $0x250] sm:$0xff]
          %v1204 = vld [vmem:[#allocation8 + $0x258] sm:$0xff]
          %v1205 = vld [vmem:[#allocation8 + $0x260] sm:$0xff]
          %v1206 = vld [vmem:[#allocation8 + $0x268] sm:$0xff]
          %v1207 = vld [vmem:[#allocation8 + $0x270] sm:$0xff]
          %v1208 = vld [vmem:[#allocation8 + $0x278] sm:$0xff]
          %v1209 = vld [vmem:[#allocation8 + $0x280] sm:$0xff]
          %v1210 = vld [vmem:[#allocation8 + $0x288] sm:$0xff]
          %v1211 = vld [vmem:[#allocation8 + $0x290] sm:$0xff]
          %v1212 = vld [vmem:[#allocation8 + $0x298] sm:$0xff]
          %v1213 = vld [vmem:[#allocation8 + $0x2a0] sm:$0xff]
          %v1214 = vld [vmem:[#allocation8 + $0x2a8] sm:$0xff]
          %v1215 = vld [vmem:[#allocation8 + $0x2b0] sm:$0xff]
          %v1216 = vld [vmem:[#allocation8 + $0x2b8] sm:$0xff]
          %v1217 = vld [vmem:[#allocation8 + $0x2c0] sm:$0xff]
          %v1218 = vld [vmem:[#allocation8 + $0x2c8] sm:$0xff]
          %v1219 = vld [vmem:[#allocation8 + $0x2d0] sm:$0xff]
          %v1220 = vld [vmem:[#allocation8 + $0x2d8] sm:$0xff]
          %v1221 = vld [vmem:[#allocation8 + $0x2e0] sm:$0xff]
          %v1222 = vld [vmem:[#allocation8 + $0x2e8] sm:$0xff]
          %v1223 = vld [vmem:[#allocation8 + $0x2f0] sm:$0xff]
          %v1224 = vld [vmem:[#allocation8 + $0x2f8] sm:$0xff]
          %v1225 = vunpack.c.l.bf16 %v1129
          %v1226 = vunpack.c.h.bf16 %v1129
          %v1227 = vunpack.c.l.bf16 %v1130
          %v1228 = vunpack.c.h.bf16 %v1130
          %v1229 = vunpack.c.l.bf16 %v1131
          %v1230 = vunpack.c.h.bf16 %v1131
          %v1231 = vunpack.c.l.bf16 %v1132
          %v1232 = vunpack.c.h.bf16 %v1132
          %v1233 = vunpack.c.l.bf16 %v1133
          %v1234 = vunpack.c.h.bf16 %v1133
          %v1235 = vunpack.c.l.bf16 %v1134
          %v1236 = vunpack.c.h.bf16 %v1134
          %v1237 = vunpack.c.l.bf16 %v1135
          %v1238 = vunpack.c.h.bf16 %v1135
          %v1239 = vunpack.c.l.bf16 %v1136
          %v1240 = vunpack.c.h.bf16 %v1136
          %v1241 = vunpack.c.l.bf16 %v1137
          %v1242 = vunpack.c.h.bf16 %v1137
          %v1243 = vunpack.c.l.bf16 %v1138
          %v1244 = vunpack.c.h.bf16 %v1138
          %v1245 = vunpack.c.l.bf16 %v1139
          %v1246 = vunpack.c.h.bf16 %v1139
          %v1247 = vunpack.c.l.bf16 %v1140
          %v1248 = vunpack.c.h.bf16 %v1140
          %v1249 = vunpack.c.l.bf16 %v1141
          %v1250 = vunpack.c.h.bf16 %v1141
          %v1251 = vunpack.c.l.bf16 %v1142
          %v1252 = vunpack.c.h.bf16 %v1142
          %v1253 = vunpack.c.l.bf16 %v1143
          %v1254 = vunpack.c.h.bf16 %v1143
          %v1255 = vunpack.c.l.bf16 %v1144
          %v1256 = vunpack.c.h.bf16 %v1144
          %v1257 = vunpack.c.l.bf16 %v1145
          %v1258 = vunpack.c.h.bf16 %v1145
          %v1259 = vunpack.c.l.bf16 %v1146
          %v1260 = vunpack.c.h.bf16 %v1146
          %v1261 = vunpack.c.l.bf16 %v1147
          %v1262 = vunpack.c.h.bf16 %v1147
          %v1263 = vunpack.c.l.bf16 %v1148
          %v1264 = vunpack.c.h.bf16 %v1148
          %v1265 = vunpack.c.l.bf16 %v1149
          %v1266 = vunpack.c.h.bf16 %v1149
          %v1267 = vunpack.c.l.bf16 %v1150
          %v1268 = vunpack.c.h.bf16 %v1150
          %v1269 = vunpack.c.l.bf16 %v1151
          %v1270 = vunpack.c.h.bf16 %v1151
          %v1271 = vunpack.c.l.bf16 %v1152
          %v1272 = vunpack.c.h.bf16 %v1152
          %v1273 = vunpack.c.l.bf16 %v1153
          %v1274 = vunpack.c.h.bf16 %v1153
          %v1275 = vunpack.c.l.bf16 %v1154
          %v1276 = vunpack.c.h.bf16 %v1154
          %v1277 = vunpack.c.l.bf16 %v1155
          %v1278 = vunpack.c.h.bf16 %v1155
          %v1279 = vunpack.c.l.bf16 %v1156
          %v1280 = vunpack.c.h.bf16 %v1156
          %v1281 = vunpack.c.l.bf16 %v1157
          %v1282 = vunpack.c.h.bf16 %v1157
          %v1283 = vunpack.c.l.bf16 %v1158
          %v1284 = vunpack.c.h.bf16 %v1158
          %v1285 = vunpack.c.l.bf16 %v1159
          %v1286 = vunpack.c.h.bf16 %v1159
          %v1287 = vunpack.c.l.bf16 %v1160
          %v1288 = vunpack.c.h.bf16 %v1160
          %v1289 = vunpack.c.l.bf16 %v1161
          %v1290 = vunpack.c.h.bf16 %v1161
          %v1291 = vunpack.c.l.bf16 %v1162
          %v1292 = vunpack.c.h.bf16 %v1162
          %v1293 = vunpack.c.l.bf16 %v1163
          %v1294 = vunpack.c.h.bf16 %v1163
          %v1295 = vunpack.c.l.bf16 %v1164
          %v1296 = vunpack.c.h.bf16 %v1164
          %v1297 = vunpack.c.l.bf16 %v1165
          %v1298 = vunpack.c.h.bf16 %v1165
          %v1299 = vunpack.c.l.bf16 %v1166
          %v1300 = vunpack.c.h.bf16 %v1166
          %v1301 = vunpack.c.l.bf16 %v1167
          %v1302 = vunpack.c.h.bf16 %v1167
          %v1303 = vunpack.c.l.bf16 %v1168
          %v1304 = vunpack.c.h.bf16 %v1168
          %v1305 = vunpack.c.l.bf16 %v1169
          %v1306 = vunpack.c.h.bf16 %v1169
          %v1307 = vunpack.c.l.bf16 %v1170
          %v1308 = vunpack.c.h.bf16 %v1170
          %v1309 = vunpack.c.l.bf16 %v1171
          %v1310 = vunpack.c.h.bf16 %v1171
          %v1311 = vunpack.c.l.bf16 %v1172
          %v1312 = vunpack.c.h.bf16 %v1172
          %v1313 = vunpack.c.l.bf16 %v1173
          %v1314 = vunpack.c.h.bf16 %v1173
          %v1315 = vunpack.c.l.bf16 %v1174
          %v1316 = vunpack.c.h.bf16 %v1174
          %v1317 = vunpack.c.l.bf16 %v1175
          %v1318 = vunpack.c.h.bf16 %v1175
          %v1319 = vunpack.c.l.bf16 %v1176
          %v1320 = vunpack.c.h.bf16 %v1176
          %v1321 = vunpack.c.l.bf16 %v1177
          %v1322 = vunpack.c.h.bf16 %v1177
          %v1323 = vunpack.c.l.bf16 %v1178
          %v1324 = vunpack.c.h.bf16 %v1178
          %v1325 = vunpack.c.l.bf16 %v1179
          %v1326 = vunpack.c.h.bf16 %v1179
          %v1327 = vunpack.c.l.bf16 %v1180
          %v1328 = vunpack.c.h.bf16 %v1180
          %v1329 = vunpack.c.l.bf16 %v1181
          %v1330 = vunpack.c.h.bf16 %v1181
          %v1331 = vunpack.c.l.bf16 %v1182
          %v1332 = vunpack.c.h.bf16 %v1182
          %v1333 = vunpack.c.l.bf16 %v1183
          %v1334 = vunpack.c.h.bf16 %v1183
          %v1335 = vunpack.c.l.bf16 %v1184
          %v1336 = vunpack.c.h.bf16 %v1184
          %v1337 = vunpack.c.l.bf16 %v1185
          %v1338 = vunpack.c.h.bf16 %v1185
          %v1339 = vunpack.c.l.bf16 %v1186
          %v1340 = vunpack.c.h.bf16 %v1186
          %v1341 = vunpack.c.l.bf16 %v1187
          %v1342 = vunpack.c.h.bf16 %v1187
          %v1343 = vunpack.c.l.bf16 %v1188
          %v1344 = vunpack.c.h.bf16 %v1188
          %v1345 = vunpack.c.l.bf16 %v1189
          %v1346 = vunpack.c.h.bf16 %v1189
          %v1347 = vunpack.c.l.bf16 %v1190
          %v1348 = vunpack.c.h.bf16 %v1190
          %v1349 = vunpack.c.l.bf16 %v1191
          %v1350 = vunpack.c.h.bf16 %v1191
          %v1351 = vunpack.c.l.bf16 %v1192
          %v1352 = vunpack.c.h.bf16 %v1192
          %v1353 = vunpack.c.l.bf16 %v1193
          %v1354 = vunpack.c.h.bf16 %v1193
          %v1355 = vunpack.c.l.bf16 %v1194
          %v1356 = vunpack.c.h.bf16 %v1194
          %v1357 = vunpack.c.l.bf16 %v1195
          %v1358 = vunpack.c.h.bf16 %v1195
          %v1359 = vunpack.c.l.bf16 %v1196
          %v1360 = vunpack.c.h.bf16 %v1196
          %v1361 = vunpack.c.l.bf16 %v1197
          %v1362 = vunpack.c.h.bf16 %v1197
          %v1363 = vunpack.c.l.bf16 %v1198
          %v1364 = vunpack.c.h.bf16 %v1198
          %v1365 = vunpack.c.l.bf16 %v1199
          %v1366 = vunpack.c.h.bf16 %v1199
          %v1367 = vunpack.c.l.bf16 %v1200
          %v1368 = vunpack.c.h.bf16 %v1200
          %v1369 = vunpack.c.l.bf16 %v1201
          %v1370 = vunpack.c.h.bf16 %v1201
          %v1371 = vunpack.c.l.bf16 %v1202
          %v1372 = vunpack.c.h.bf16 %v1202
          %v1373 = vunpack.c.l.bf16 %v1203
          %v1374 = vunpack.c.h.bf16 %v1203
          %v1375 = vunpack.c.l.bf16 %v1204
          %v1376 = vunpack.c.h.bf16 %v1204
          %v1377 = vunpack.c.l.bf16 %v1205
          %v1378 = vunpack.c.h.bf16 %v1205
          %v1379 = vunpack.c.l.bf16 %v1206
          %v1380 = vunpack.c.h.bf16 %v1206
          %v1381 = vunpack.c.l.bf16 %v1207
          %v1382 = vunpack.c.h.bf16 %v1207
          %v1383 = vunpack.c.l.bf16 %v1208
          %v1384 = vunpack.c.h.bf16 %v1208
          %v1385 = vunpack.c.l.bf16 %v1209
          %v1386 = vunpack.c.h.bf16 %v1209
          %v1387 = vunpack.c.l.bf16 %v1210
          %v1388 = vunpack.c.h.bf16 %v1210
          %v1389 = vunpack.c.l.bf16 %v1211
          %v1390 = vunpack.c.h.bf16 %v1211
          %v1391 = vunpack.c.l.bf16 %v1212
          %v1392 = vunpack.c.h.bf16 %v1212
          %v1393 = vunpack.c.l.bf16 %v1213
          %v1394 = vunpack.c.h.bf16 %v1213
          %v1395 = vunpack.c.l.bf16 %v1214
          %v1396 = vunpack.c.h.bf16 %v1214
          %v1397 = vunpack.c.l.bf16 %v1215
          %v1398 = vunpack.c.h.bf16 %v1215
          %v1399 = vunpack.c.l.bf16 %v1216
          %v1400 = vunpack.c.h.bf16 %v1216
          %v1401 = vunpack.c.l.bf16 %v1217
          %v1402 = vunpack.c.h.bf16 %v1217
          %v1403 = vunpack.c.l.bf16 %v1218
          %v1404 = vunpack.c.h.bf16 %v1218
          %v1405 = vunpack.c.l.bf16 %v1219
          %v1406 = vunpack.c.h.bf16 %v1219
          %v1407 = vunpack.c.l.bf16 %v1220
          %v1408 = vunpack.c.h.bf16 %v1220
          %v1409 = vunpack.c.l.bf16 %v1221
          %v1410 = vunpack.c.h.bf16 %v1221
          %v1411 = vunpack.c.l.bf16 %v1222
          %v1412 = vunpack.c.h.bf16 %v1222
          %v1413 = vunpack.c.l.bf16 %v1223
          %v1414 = vunpack.c.h.bf16 %v1223
          %v1415 = vunpack.c.l.bf16 %v1224
          %v1416 = vunpack.c.h.bf16 %v1224
          %v1417 = vld [vmem:[%s3] ss:$8 sm:$0x3]
          %v1419 = vlaneseq
          %v1420 = vshrl.u32 %v1419, 7
          %v1421 = vsub.s32 0, %v1420
          %v1422 = vrot.slane %v1417, %v1421
          %v1423 = vlaneseq
          %v1424 = vshrl.u32 %v1423, 7
          %v1425 = vsub.s32 1, %v1424
          %v1426 = vrot.slane %v1417, %v1425
          %1429 = vmatprep.subr.mxu0 %v1226
          %1430 = vmatpush1.msra.mxu0 %v1225
          %1431 = vmatprep.subr.mxu0 %v1228
          %1432 = vmatpush1.msra.mxu0 %v1227
          %1433 = vmatprep.subr.mxu0 %v1230
          %1434 = vmatpush1.msra.mxu0 %v1229
          %1435 = vmatprep.subr.mxu0 %v1232
          %1436 = vmatpush1.msra.mxu0 %v1231
          %1437 = vmatprep.subr.mxu0 %v1234
          %1438 = vmatpush1.msra.mxu0 %v1233
          %1439 = vmatprep.subr.mxu0 %v1236
          %1440 = vmatpush1.msra.mxu0 %v1235
          %1441 = vmatprep.subr.mxu0 %v1238
          %1442 = vmatpush1.msra.mxu0 %v1237
          %1443 = vmatprep.subr.mxu0 %v1240
          %1444 = vmatpush1.msra.mxu0 %v1239
          %1445 = vmatprep.subr.mxu0 %v1242
          %1446 = vmatpush1.msra.mxu0 %v1241
          %1447 = vmatprep.subr.mxu0 %v1244
          %1448 = vmatpush1.msra.mxu0 %v1243
          %1449 = vmatprep.subr.mxu0 %v1246
          %1450 = vmatpush1.msra.mxu0 %v1245
          %1451 = vmatprep.subr.mxu0 %v1248
          %1452 = vmatpush1.msra.mxu0 %v1247
          %1453 = vmatprep.subr.mxu0 %v1250
          %1454 = vmatpush1.msra.mxu0 %v1249
          %1455 = vmatprep.subr.mxu0 %v1252
          %1456 = vmatpush1.msra.mxu0 %v1251
          %1457 = vmatprep.subr.mxu0 %v1254
          %1458 = vmatpush1.msra.mxu0 %v1253
          %1459 = vmatprep.subr.mxu0 %v1256
          %1460 = vmatpush1.msra.mxu0 %v1255
          %1461 = vmatprep.subr.mxu0 %v1258
          %1462 = vmatpush1.msra.mxu0 %v1257
          %1463 = vmatprep.subr.mxu0 %v1260
          %1464 = vmatpush1.msra.mxu0 %v1259
          %1465 = vmatprep.subr.mxu0 %v1262
          %1466 = vmatpush1.msra.mxu0 %v1261
          %1467 = vmatprep.subr.mxu0 %v1264
          %1468 = vmatpush1.msra.mxu0 %v1263
          %1469 = vmatprep.subr.mxu0 %v1266
          %1470 = vmatpush1.msra.mxu0 %v1265
          %1471 = vmatprep.subr.mxu0 %v1268
          %1472 = vmatpush1.msra.mxu0 %v1267
          %1473 = vmatprep.subr.mxu0 %v1270
          %1474 = vmatpush1.msra.mxu0 %v1269
          %1475 = vmatprep.subr.mxu0 %v1272
          %1476 = vmatpush1.msra.mxu0 %v1271
          %1477 = vmatprep.subr.mxu0 %v1274
          %1478 = vmatpush1.msra.mxu0 %v1273
          %1479 = vmatprep.subr.mxu0 %v1276
          %1480 = vmatpush1.msra.mxu0 %v1275
          %1481 = vmatprep.subr.mxu0 %v1278
          %1482 = vmatpush1.msra.mxu0 %v1277
          %1483 = vmatprep.subr.mxu0 %v1280
          %1484 = vmatpush1.msra.mxu0 %v1279
          %1485 = vmatprep.subr.mxu0 %v1282
          %1486 = vmatpush1.msra.mxu0 %v1281
          %1487 = vmatprep.subr.mxu0 %v1284
          %1488 = vmatpush1.msra.mxu0 %v1283
          %1489 = vmatprep.subr.mxu0 %v1286
          %1490 = vmatpush1.msra.mxu0 %v1285
          %1491 = vmatprep.subr.mxu0 %v1288
          %1492 = vmatpush1.msra.mxu0 %v1287
          %1493 = vmatprep.mubr.f32.mxu0 %v1082
          %1494 = vmatmul.mubr.f32.gmra.mrb[0].mxu0 %v1081
          %v1495 = vpop.f32.mrb[0].mxu0
          %v1496 = vadd.f32 %v1422, %v1495
          %v1497 = vpop.f32.mrb[0].mxu0
          %v1498 = vadd.f32 %v1426, %v1497
          %1499 = vmatprep.mubr.f32.mxu0 %v1088
          %1500 = vmatmul.mubr.f32.gmra.mrb[0].mxu0 %v1087
          %v1501 = vpop.f32.mrb[0].mxu0
          %v1502 = vadd.f32 %v1422, %v1501
          %v1503 = vpop.f32.mrb[0].mxu0
          %v1504 = vadd.f32 %v1426, %v1503
          %1505 = vmatprep.mubr.f32.mxu0 %v1094
          %1506 = vmatmul.mubr.f32.gmra.mrb[0].mxu0 %v1093
          %v1507 = vpop.f32.mrb[0].mxu0
          %v1508 = vadd.f32 %v1422, %v1507
          %v1509 = vpop.f32.mrb[0].mxu0
          %v1510 = vadd.f32 %v1426, %v1509
          %1511 = vmatprep.mubr.f32.mxu0 %v1100
          %1512 = vmatmul.mubr.f32.gmra.mrb[0].mxu0 %v1099
          %v1513 = vpop.f32.mrb[0].mxu0
          %v1514 = vadd.f32 %v1422, %v1513
          %v1515 = vpop.f32.mrb[0].mxu0
          %v1516 = vadd.f32 %v1426, %v1515
          %1517 = vmatprep.mubr.f32.mxu0 %v1106
          %1518 = vmatmul.mubr.f32.gmra.mrb[0].mxu0 %v1105
          %v1519 = vpop.f32.mrb[0].mxu0
          %v1520 = vadd.f32 %v1422, %v1519
          %v1521 = vpop.f32.mrb[0].mxu0
          %v1522 = vadd.f32 %v1426, %v1521
          %1523 = vmatprep.mubr.f32.mxu0 %v1112
          %1524 = vmatmul.mubr.f32.gmra.mrb[0].mxu0 %v1111
          %v1525 = vpop.f32.mrb[0].mxu0
          %v1526 = vadd.f32 %v1422, %v1525
          %v1527 = vpop.f32.mrb[0].mxu0
          %v1528 = vadd.f32 %v1426, %v1527
          %1529 = vmatprep.mubr.f32.mxu0 %v1118
          %1530 = vmatmul.mubr.f32.gmra.mrb[0].mxu0 %v1117
          %v1531 = vpop.f32.mrb[0].mxu0
          %v1532 = vadd.f32 %v1422, %v1531
          %v1533 = vpop.f32.mrb[0].mxu0
          %v1534 = vadd.f32 %v1426, %v1533
          %1535 = vmatprep.mubr.f32.mxu0 %v1124
          %1536 = vmatmul.mubr.f32.gmra.mrb[0].mxu0 %v1123
          %v1537 = vpop.f32.mrb[0].mxu0
          %v1538 = vadd.f32 %v1422, %v1537
          %v1539 = vpop.f32.mrb[0].mxu0
          %v1540 = vadd.f32 %v1426, %v1539
          %1541 = vdwg.mxu0
          %1542 = vmatprep.subr.mxu0 %v1290
          %1543 = vmatpush1.msra.mxu0 %v1289
          %1544 = vmatprep.subr.mxu0 %v1292
          %1545 = vmatpush1.msra.mxu0 %v1291
          %1546 = vmatprep.subr.mxu0 %v1294
          %1547 = vmatpush1.msra.mxu0 %v1293
          %1548 = vmatprep.subr.mxu0 %v1296
          %1549 = vmatpush1.msra.mxu0 %v1295
          %1550 = vmatprep.subr.mxu0 %v1298
          %1551 = vmatpush1.msra.mxu0 %v1297
          %1552 = vmatprep.subr.mxu0 %v1300
          %1553 = vmatpush1.msra.mxu0 %v1299
          %1554 = vmatprep.subr.mxu0 %v1302
          %1555 = vmatpush1.msra.mxu0 %v1301
          %1556 = vmatprep.subr.mxu0 %v1304
          %1557 = vmatpush1.msra.mxu0 %v1303
          %1558 = vmatprep.subr.mxu0 %v1306
          %1559 = vmatpush1.msra.mxu0 %v1305
          %1560 = vmatprep.subr.mxu0 %v1308
          %1561 = vmatpush1.msra.mxu0 %v1307
          %1562 = vmatprep.subr.mxu0 %v1310
          %1563 = vmatpush1.msra.mxu0 %v1309
          %1564 = vmatprep.subr.mxu0 %v1312
          %1565 = vmatpush1.msra.mxu0 %v1311
          %1566 = vmatprep.subr.mxu0 %v1314
          %1567 = vmatpush1.msra.mxu0 %v1313
          %1568 = vmatprep.subr.mxu0 %v1316
          %1569 = vmatpush1.msra.mxu0 %v1315
          %1570 = vmatprep.subr.mxu0 %v1318
          %1571 = vmatpush1.msra.mxu0 %v1317
          %1572 = vmatprep.subr.mxu0 %v1320
          %1573 = vmatpush1.msra.mxu0 %v1319
          %1574 = vmatprep.subr.mxu0 %v1322
          %1575 = vmatpush1.msra.mxu0 %v1321
          %1576 = vmatprep.subr.mxu0 %v1324
          %1577 = vmatpush1.msra.mxu0 %v1323
          %1578 = vmatprep.subr.mxu0 %v1326
          %1579 = vmatpush1.msra.mxu0 %v1325
          %1580 = vmatprep.subr.mxu0 %v1328
          %1581 = vmatpush1.msra.mxu0 %v1327
          %1582 = vmatprep.subr.mxu0 %v1330
          %1583 = vmatpush1.msra.mxu0 %v1329
          %1584 = vmatprep.subr.mxu0 %v1332
          %1585 = vmatpush1.msra.mxu0 %v1331
          %1586 = vmatprep.subr.mxu0 %v1334
          %1587 = vmatpush1.msra.mxu0 %v1333
          %1588 = vmatprep.subr.mxu0 %v1336
          %1589 = vmatpush1.msra.mxu0 %v1335
          %1590 = vmatprep.subr.mxu0 %v1338
          %1591 = vmatpush1.msra.mxu0 %v1337
          %1592 = vmatprep.subr.mxu0 %v1340
          %1593 = vmatpush1.msra.mxu0 %v1339
          %1594 = vmatprep.subr.mxu0 %v1342
          %1595 = vmatpush1.msra.mxu0 %v1341
          %1596 = vmatprep.subr.mxu0 %v1344
          %1597 = vmatpush1.msra.mxu0 %v1343
          %1598 = vmatprep.subr.mxu0 %v1346
          %1599 = vmatpush1.msra.mxu0 %v1345
          %1600 = vmatprep.subr.mxu0 %v1348
          %1601 = vmatpush1.msra.mxu0 %v1347
          %1602 = vmatprep.subr.mxu0 %v1350
          %1603 = vmatpush1.msra.mxu0 %v1349
          %1604 = vmatprep.subr.mxu0 %v1352
          %1605 = vmatpush1.msra.mxu0 %v1351
          %1606 = vmatprep.mubr.f32.mxu0 %v1084
          %1607 = vmatmul.mubr.f32.gmra.mrb[0].mxu0 %v1083
          %v1608 = vpop.f32.mrb[0].mxu0
          %v1609 = vadd.f32 %v1496, %v1608
          %v1610 = vpop.f32.mrb[0].mxu0
          %v1611 = vadd.f32 %v1498, %v1610
          %1612 = vmatprep.mubr.f32.mxu0 %v1090
          %1613 = vmatmul.mubr.f32.gmra.mrb[0].mxu0 %v1089
          %v1614 = vpop.f32.mrb[0].mxu0
          %v1615 = vadd.f32 %v1502, %v1614
          %v1616 = vpop.f32.mrb[0].mxu0
          %v1617 = vadd.f32 %v1504, %v1616
          %1618 = vmatprep.mubr.f32.mxu0 %v1096
          %1619 = vmatmul.mubr.f32.gmra.mrb[0].mxu0 %v1095
          %v1620 = vpop.f32.mrb[0].mxu0
          %v1621 = vadd.f32 %v1508, %v1620
          %v1622 = vpop.f32.mrb[0].mxu0
          %v1623 = vadd.f32 %v1510, %v1622
          %1624 = vmatprep.mubr.f32.mxu0 %v1102
          %1625 = vmatmul.mubr.f32.gmra.mrb[0].mxu0 %v1101
          %v1626 = vpop.f32.mrb[0].mxu0
          %v1627 = vadd.f32 %v1514, %v1626
          %v1628 = vpop.f32.mrb[0].mxu0
          %v1629 = vadd.f32 %v1516, %v1628
          %1630 = vmatprep.mubr.f32.mxu0 %v1108
          %1631 = vmatmul.mubr.f32.gmra.mrb[0].mxu0 %v1107
          %v1632 = vpop.f32.mrb[0].mxu0
          %v1633 = vadd.f32 %v1520, %v1632
          %v1634 = vpop.f32.mrb[0].mxu0
          %v1635 = vadd.f32 %v1522, %v1634
          %1636 = vmatprep.mubr.f32.mxu0 %v1114
          %1637 = vmatmul.mubr.f32.gmra.mrb[0].mxu0 %v1113
          %v1638 = vpop.f32.mrb[0].mxu0
          %v1639 = vadd.f32 %v1526, %v1638
          %v1640 = vpop.f32.mrb[0].mxu0
          %v1641 = vadd.f32 %v1528, %v1640
          %1642 = vmatprep.mubr.f32.mxu0 %v1120
          %1643 = vmatmul.mubr.f32.gmra.mrb[0].mxu0 %v1119
          %v1644 = vpop.f32.mrb[0].mxu0
          %v1645 = vadd.f32 %v1532, %v1644
          %v1646 = vpop.f32.mrb[0].mxu0
          %v1647 = vadd.f32 %v1534, %v1646
          %1648 = vmatprep.mubr.f32.mxu0 %v1126
          %1649 = vmatmul.mubr.f32.gmra.mrb[0].mxu0 %v1125
          %v1650 = vpop.f32.mrb[0].mxu0
          %v1651 = vadd.f32 %v1538, %v1650
          %v1652 = vpop.f32.mrb[0].mxu0
          %v1653 = vadd.f32 %v1540, %v1652
          %1654 = vdwg.mxu0
          %1655 = vmatprep.subr.mxu0 %v1354
          %1656 = vmatpush1.msra.mxu0 %v1353
          %1657 = vmatprep.subr.mxu0 %v1356
          %1658 = vmatpush1.msra.mxu0 %v1355
          %1659 = vmatprep.subr.mxu0 %v1358
          %1660 = vmatpush1.msra.mxu0 %v1357
          %1661 = vmatprep.subr.mxu0 %v1360
          %1662 = vmatpush1.msra.mxu0 %v1359
          %1663 = vmatprep.subr.mxu0 %v1362
          %1664 = vmatpush1.msra.mxu0 %v1361
          %1665 = vmatprep.subr.mxu0 %v1364
          %1666 = vmatpush1.msra.mxu0 %v1363
          %1667 = vmatprep.subr.mxu0 %v1366
          %1668 = vmatpush1.msra.mxu0 %v1365
          %1669 = vmatprep.subr.mxu0 %v1368
          %1670 = vmatpush1.msra.mxu0 %v1367
          %1671 = vmatprep.subr.mxu0 %v1370
          %1672 = vmatpush1.msra.mxu0 %v1369
          %1673 = vmatprep.subr.mxu0 %v1372
          %1674 = vmatpush1.msra.mxu0 %v1371
          %1675 = vmatprep.subr.mxu0 %v1374
          %1676 = vmatpush1.msra.mxu0 %v1373
          %1677 = vmatprep.subr.mxu0 %v1376
          %1678 = vmatpush1.msra.mxu0 %v1375
          %1679 = vmatprep.subr.mxu0 %v1378
          %1680 = vmatpush1.msra.mxu0 %v1377
          %1681 = vmatprep.subr.mxu0 %v1380
          %1682 = vmatpush1.msra.mxu0 %v1379
          %1683 = vmatprep.subr.mxu0 %v1382
          %1684 = vmatpush1.msra.mxu0 %v1381
          %1685 = vmatprep.subr.mxu0 %v1384
          %1686 = vmatpush1.msra.mxu0 %v1383
          %1687 = vmatprep.subr.mxu0 %v1386
          %1688 = vmatpush1.msra.mxu0 %v1385
          %1689 = vmatprep.subr.mxu0 %v1388
          %1690 = vmatpush1.msra.mxu0 %v1387
          %1691 = vmatprep.subr.mxu0 %v1390
          %1692 = vmatpush1.msra.mxu0 %v1389
          %1693 = vmatprep.subr.mxu0 %v1392
          %1694 = vmatpush1.msra.mxu0 %v1391
          %1695 = vmatprep.subr.mxu0 %v1394
          %1696 = vmatpush1.msra.mxu0 %v1393
          %1697 = vmatprep.subr.mxu0 %v1396
          %1698 = vmatpush1.msra.mxu0 %v1395
          %1699 = vmatprep.subr.mxu0 %v1398
          %1700 = vmatpush1.msra.mxu0 %v1397
          %1701 = vmatprep.subr.mxu0 %v1400
          %1702 = vmatpush1.msra.mxu0 %v1399
          %1703 = vmatprep.subr.mxu0 %v1402
          %1704 = vmatpush1.msra.mxu0 %v1401
          %1705 = vmatprep.subr.mxu0 %v1404
          %1706 = vmatpush1.msra.mxu0 %v1403
          %1707 = vmatprep.subr.mxu0 %v1406
          %1708 = vmatpush1.msra.mxu0 %v1405
          %1709 = vmatprep.subr.mxu0 %v1408
          %1710 = vmatpush1.msra.mxu0 %v1407
          %1711 = vmatprep.subr.mxu0 %v1410
          %1712 = vmatpush1.msra.mxu0 %v1409
          %1713 = vmatprep.subr.mxu0 %v1412
          %1714 = vmatpush1.msra.mxu0 %v1411
          %1715 = vmatprep.subr.mxu0 %v1414
          %1716 = vmatpush1.msra.mxu0 %v1413
          %1717 = vmatprep.subr.mxu0 %v1416
          %1718 = vmatpush1.msra.mxu0 %v1415
          %1719 = vmatprep.mubr.f32.mxu0 %v1086
          %1720 = vmatmul.mubr.f32.gmra.mrb[0].mxu0 %v1085
          %v1721 = vpop.f32.mrb[0].mxu0
          %v1722 = vadd.f32 %v1609, %v1721
          %v1723 = vpop.f32.mrb[0].mxu0
          %v1724 = vadd.f32 %v1611, %v1723
          %1725 = vmatprep.mubr.f32.mxu0 %v1092
          %1726 = vmatmul.mubr.f32.gmra.mrb[0].mxu0 %v1091
          %v1727 = vpop.f32.mrb[0].mxu0
          %v1728 = vadd.f32 %v1615, %v1727
          %v1729 = vpop.f32.mrb[0].mxu0
          %v1730 = vadd.f32 %v1617, %v1729
          %1731 = vmatprep.mubr.f32.mxu0 %v1098
          %1732 = vmatmul.mubr.f32.gmra.mrb[0].mxu0 %v1097
          %v1733 = vpop.f32.mrb[0].mxu0
          %v1734 = vadd.f32 %v1621, %v1733
          %v1735 = vpop.f32.mrb[0].mxu0
          %v1736 = vadd.f32 %v1623, %v1735
          %1737 = vmatprep.mubr.f32.mxu0 %v1104
          %1738 = vmatmul.mubr.f32.gmra.mrb[0].mxu0 %v1103
          %v1739 = vpop.f32.mrb[0].mxu0
          %v1740 = vadd.f32 %v1627, %v1739
          %v1741 = vpop.f32.mrb[0].mxu0
          %v1742 = vadd.f32 %v1629, %v1741
          %1743 = vmatprep.mubr.f32.mxu0 %v1110
          %1744 = vmatmul.mubr.f32.gmra.mrb[0].mxu0 %v1109
          %v1745 = vpop.f32.mrb[0].mxu0
          %v1746 = vadd.f32 %v1633, %v1745
          %v1747 = vpop.f32.mrb[0].mxu0
          %v1748 = vadd.f32 %v1635, %v1747
          %1749 = vmatprep.mubr.f32.mxu0 %v1116
          %1750 = vmatmul.mubr.f32.gmra.mrb[0].mxu0 %v1115
          %v1751 = vpop.f32.mrb[0].mxu0
          %v1752 = vadd.f32 %v1639, %v1751
          %v1753 = vpop.f32.mrb[0].mxu0
          %v1754 = vadd.f32 %v1641, %v1753
          %1755 = vmatprep.mubr.f32.mxu0 %v1122
          %1756 = vmatmul.mubr.f32.gmra.mrb[0].mxu0 %v1121
          %v1757 = vpop.f32.mrb[0].mxu0
          %v1758 = vadd.f32 %v1645, %v1757
          %v1759 = vpop.f32.mrb[0].mxu0
          %v1760 = vadd.f32 %v1647, %v1759
          %1761 = vmatprep.mubr.f32.mxu0 %v1128
          %1762 = vmatmul.mubr.f32.gmra.mrb[0].mxu0 %v1127
          %v1763 = vpop.f32.mrb[0].mxu0
          %v1764 = vadd.f32 %v1651, %v1763
          %v1765 = vpop.f32.mrb[0].mxu0
          %v1766 = vadd.f32 %v1653, %v1765
          %1767 = vdwg.mxu0
          %1768 = vst [vmem:[#allocation2] sm:$0xff] %v1722
          %1769 = vst [vmem:[#allocation2 + $0x8] sm:$0xff] %v1724
          %1770 = vst [vmem:[#allocation2 + $0x10] sm:$0xff] %v1728
          %1771 = vst [vmem:[#allocation2 + $0x18] sm:$0xff] %v1730
          %1772 = vst [vmem:[#allocation2 + $0x20] sm:$0xff] %v1734
          %1773 = vst [vmem:[#allocation2 + $0x28] sm:$0xff] %v1736
          %1774 = vst [vmem:[#allocation2 + $0x30] sm:$0xff] %v1740
          %1775 = vst [vmem:[#allocation2 + $0x38] sm:$0xff] %v1742
          %1776 = vst [vmem:[#allocation2 + $0x40] sm:$0xff] %v1746
          %1777 = vst [vmem:[#allocation2 + $0x48] sm:$0xff] %v1748
          %1778 = vst [vmem:[#allocation2 + $0x50] sm:$0xff] %v1752
          %1779 = vst [vmem:[#allocation2 + $0x58] sm:$0xff] %v1754
          %1780 = vst [vmem:[#allocation2 + $0x60] sm:$0xff] %v1758
          %1781 = vst [vmem:[#allocation2 + $0x68] sm:$0xff] %v1760
          %1782 = vst [vmem:[#allocation2 + $0x70] sm:$0xff] %v1764
          %1783 = vst [vmem:[#allocation2 + $0x78] sm:$0xff] %v1766
          %s1784 = scalar_lea.vmem %s3, 2
          %v1785 = vld [vmem:[%s1784] ss:$8 sm:$0x3]
          %v1787 = vlaneseq
          %v1788 = vshrl.u32 %v1787, 7
          %v1789 = vsub.s32 0, %v1788
          %v1790 = vrot.slane %v1785, %v1789
          %v1791 = vlaneseq
          %v1792 = vshrl.u32 %v1791, 7
          %v1793 = vsub.s32 1, %v1792
          %v1794 = vrot.slane %v1785, %v1793
          %1797 = vst [vmem:[%s11] sm:$0xff] %v1790
          %1798 = vst [vmem:[%s11 + $0x8] sm:$0xff] %v1794
          %s1799 = scalar_lea.vmem %s3, 3
          %v1800 = vld [vmem:[%s1799] ss:$8 sm:$0x3]
          %v1802 = vlaneseq
          %v1803 = vshrl.u32 %v1802, 7
          %v1804 = vsub.s32 0, %v1803
          %v1805 = vrot.slane %v1800, %v1804
          %v1806 = vlaneseq
          %v1807 = vshrl.u32 %v1806, 7
          %v1808 = vsub.s32 1, %v1807
          %v1809 = vrot.slane %v1800, %v1808
          %s1812 = scalar_lea.vmem %s11, 16
          %1813 = vst [vmem:[%s1812] sm:$0xff] %v1805
          %1814 = vst [vmem:[%s1812 + $0x8] sm:$0xff] %v1809
          %s1815 = scalar_lea.vmem %s3, 4
          %v1816 = vld [vmem:[%s1815] ss:$8 sm:$0x3]
          %v1818 = vlaneseq
          %v1819 = vshrl.u32 %v1818, 7
          %v1820 = vsub.s32 0, %v1819
          %v1821 = vrot.slane %v1816, %v1820
          %v1822 = vlaneseq
          %v1823 = vshrl.u32 %v1822, 7
          %v1824 = vsub.s32 1, %v1823
          %v1825 = vrot.slane %v1816, %v1824
          %s1828 = scalar_lea.vmem %s11, 32
          %1829 = vst [vmem:[%s1828] sm:$0xff] %v1821
          %1830 = vst [vmem:[%s1828 + $0x8] sm:$0xff] %v1825
          %v1831 = vld [vmem:[#allocation12 + $0x2] ss:$0 sm:$0xff]
          %1832 = vst [vmem:[%s12] sm:$0xff] %v1831
          %v1833 = vld [vmem:[#allocation12 + $0x3] ss:$0 sm:$0xff]
          %s1834 = scalar_lea.vmem %s12, 8
          %1835 = vst [vmem:[%s1834] sm:$0xff] %v1833
          %v1836 = vld [vmem:[#allocation12 + $0x4] ss:$0 sm:$0xff]
          %s1837 = scalar_lea.vmem %s12, 16
          %1838 = vst [vmem:[%s1837] sm:$0xff] %v1836
          %v1839 = vld [vmem:[%s9 + $0x2] ss:$0 sm:$0xff]
          %1840 = vst [vmem:[%s13] sm:$0xff] %v1839
          %v1841 = vld [vmem:[%s9 + $0x3] ss:$0 sm:$0xff]
          %s1842 = scalar_lea.vmem %s13, 8
          %1843 = vst [vmem:[%s1842] sm:$0xff] %v1841
          %v1844 = vld [vmem:[%s9 + $0x4] ss:$0 sm:$0xff]
          %s1845 = scalar_lea.vmem %s13, 16
          %1846 = vst [vmem:[%s1845] sm:$0xff] %v1844
        $region76: #{lsnn_forward.1} parent=59 // pred_fallthru
          _
        %s1847 = smul.u32 %s27, 8
        %s1848 = sshra.s32 %s1847, 3
        %s1849 = sand.u32 %s1847, 7
        %s1850 = smul.u32 %s1848, 2
        %s1851 = smul.addr %s1850, 8
        %s1852 = scalar_lea.vmem [#allocation2], %s1851
        %v1853 = vld [vmem:[%s1852] sm:$0xff]
        %v1854 = vld [vmem:[%s1852 + $0x8] sm:$0xff]
        %v1855 = vld [vmem:[%s11] sm:$0xff]
        %v1856 = vld [vmem:[%s11 + $0x8] sm:$0xff]
        %s1857 = scalar_lea.vmem %s11, 16
        %v1858 = vld [vmem:[%s1857] sm:$0xff]
        %v1859 = vld [vmem:[%s1857 + $0x8] sm:$0xff]
        %s1860 = scalar_lea.vmem %s11, 32
        %v1861 = vld [vmem:[%s1860] sm:$0xff]
        %v1862 = vld [vmem:[%s1860 + $0x8] sm:$0xff]
        %v1863 = vld [vmem:[#allocation3] sm:$0xff]
        %v1864 = vld [vmem:[#allocation3 + $0x8] sm:$0xff]
        %v1865 = vld [vmem:[#allocation3 + $0x20] sm:$0xff]
        %v1866 = vld [vmem:[#allocation3 + $0x28] sm:$0xff]
        %v1867 = vld [vmem:[#allocation3 + $0x40] sm:$0xff]
        %v1868 = vld [vmem:[#allocation3 + $0x48] sm:$0xff]
        %v1869 = vld [vmem:[#allocation3 + $0x60] sm:$0xff]
        %v1870 = vld [vmem:[#allocation3 + $0x68] sm:$0xff]
        %v1871 = vld [vmem:[#allocation3 + $0x80] sm:$0xff]
        %v1872 = vld [vmem:[#allocation3 + $0x88] sm:$0xff]
        %v1873 = vld [vmem:[#allocation3 + $0xa0] sm:$0xff]
        %v1874 = vld [vmem:[#allocation3 + $0xa8] sm:$0xff]
        %v1875 = vld [vmem:[#allocation3 + $0xc0] sm:$0xff]
        %v1876 = vld [vmem:[#allocation3 + $0xc8] sm:$0xff]
        %v1877 = vld [vmem:[#allocation3 + $0xe0] sm:$0xff]
        %v1878 = vld [vmem:[#allocation3 + $0xe8] sm:$0xff]
        %v1879 = vld [vmem:[#allocation3 + $0x100] sm:$0xff]
        %v1880 = vld [vmem:[#allocation3 + $0x108] sm:$0xff]
        %v1881 = vld [vmem:[#allocation3 + $0x120] sm:$0xff]
        %v1882 = vld [vmem:[#allocation3 + $0x128] sm:$0xff]
        %v1883 = vld [vmem:[#allocation3 + $0x140] sm:$0xff]
        %v1884 = vld [vmem:[#allocation3 + $0x148] sm:$0xff]
        %v1885 = vld [vmem:[#allocation3 + $0x160] sm:$0xff]
        %v1886 = vld [vmem:[#allocation3 + $0x168] sm:$0xff]
        %v1887 = vld [vmem:[#allocation3 + $0x180] sm:$0xff]
        %v1888 = vld [vmem:[#allocation3 + $0x188] sm:$0xff]
        %v1889 = vld [vmem:[#allocation3 + $0x1a0] sm:$0xff]
        %v1890 = vld [vmem:[#allocation3 + $0x1a8] sm:$0xff]
        %v1891 = vld [vmem:[#allocation3 + $0x1c0] sm:$0xff]
        %v1892 = vld [vmem:[#allocation3 + $0x1c8] sm:$0xff]
        %v1893 = vld [vmem:[#allocation3 + $0x1e0] sm:$0xff]
        %v1894 = vld [vmem:[#allocation3 + $0x1e8] sm:$0xff]
        %v1895 = vld [vmem:[#allocation3 + $0x200] sm:$0xff]
        %v1896 = vld [vmem:[#allocation3 + $0x208] sm:$0xff]
        %v1897 = vld [vmem:[#allocation3 + $0x220] sm:$0xff]
        %v1898 = vld [vmem:[#allocation3 + $0x228] sm:$0xff]
        %v1899 = vld [vmem:[#allocation3 + $0x240] sm:$0xff]
        %v1900 = vld [vmem:[#allocation3 + $0x248] sm:$0xff]
        %v1901 = vld [vmem:[#allocation3 + $0x260] sm:$0xff]
        %v1902 = vld [vmem:[#allocation3 + $0x268] sm:$0xff]
        %v1903 = vld [vmem:[#allocation3 + $0x280] sm:$0xff]
        %v1904 = vld [vmem:[#allocation3 + $0x288] sm:$0xff]
        %v1905 = vld [vmem:[#allocation3 + $0x2a0] sm:$0xff]
        %v1906 = vld [vmem:[#allocation3 + $0x2a8] sm:$0xff]
        %v1907 = vld [vmem:[#allocation3 + $0x2c0] sm:$0xff]
        %v1908 = vld [vmem:[#allocation3 + $0x2c8] sm:$0xff]
        %v1909 = vld [vmem:[#allocation3 + $0x2e0] sm:$0xff]
        %v1910 = vld [vmem:[#allocation3 + $0x2e8] sm:$0xff]
        %v1911 = vld [vmem:[#allocation3 + $0x300] sm:$0xff]
        %v1912 = vld [vmem:[#allocation3 + $0x308] sm:$0xff]
        %v1913 = vld [vmem:[#allocation3 + $0x320] sm:$0xff]
        %v1914 = vld [vmem:[#allocation3 + $0x328] sm:$0xff]
        %v1915 = vld [vmem:[#allocation3 + $0x340] sm:$0xff]
        %v1916 = vld [vmem:[#allocation3 + $0x348] sm:$0xff]
        %v1917 = vld [vmem:[#allocation3 + $0x360] sm:$0xff]
        %v1918 = vld [vmem:[#allocation3 + $0x368] sm:$0xff]
        %v1919 = vld [vmem:[#allocation3 + $0x380] sm:$0xff]
        %v1920 = vld [vmem:[#allocation3 + $0x388] sm:$0xff]
        %v1921 = vld [vmem:[#allocation3 + $0x3a0] sm:$0xff]
        %v1922 = vld [vmem:[#allocation3 + $0x3a8] sm:$0xff]
        %v1923 = vld [vmem:[#allocation3 + $0x3c0] sm:$0xff]
        %v1924 = vld [vmem:[#allocation3 + $0x3c8] sm:$0xff]
        %v1925 = vld [vmem:[#allocation3 + $0x3e0] sm:$0xff]
        %v1926 = vld [vmem:[#allocation3 + $0x3e8] sm:$0xff]
        %v1927 = vld [vmem:[#allocation3 + $0x10] sm:$0xff]
        %v1928 = vld [vmem:[#allocation3 + $0x18] sm:$0xff]
        %v1929 = vld [vmem:[#allocation3 + $0x30] sm:$0xff]
        %v1930 = vld [vmem:[#allocation3 + $0x38] sm:$0xff]
        %v1931 = vld [vmem:[#allocation3 + $0x50] sm:$0xff]
        %v1932 = vld [vmem:[#allocation3 + $0x58] sm:$0xff]
        %v1933 = vld [vmem:[#allocation3 + $0x70] sm:$0xff]
        %v1934 = vld [vmem:[#allocation3 + $0x78] sm:$0xff]
        %v1935 = vld [vmem:[#allocation3 + $0x90] sm:$0xff]
        %v1936 = vld [vmem:[#allocation3 + $0x98] sm:$0xff]
        %v1937 = vld [vmem:[#allocation3 + $0xb0] sm:$0xff]
        %v1938 = vld [vmem:[#allocation3 + $0xb8] sm:$0xff]
        %v1939 = vld [vmem:[#allocation3 + $0xd0] sm:$0xff]
        %v1940 = vld [vmem:[#allocation3 + $0xd8] sm:$0xff]
        %v1941 = vld [vmem:[#allocation3 + $0xf0] sm:$0xff]
        %v1942 = vld [vmem:[#allocation3 + $0xf8] sm:$0xff]
        %v1943 = vld [vmem:[#allocation3 + $0x110] sm:$0xff]
        %v1944 = vld [vmem:[#allocation3 + $0x118] sm:$0xff]
        %v1945 = vld [vmem:[#allocation3 + $0x130] sm:$0xff]
        %v1946 = vld [vmem:[#allocation3 + $0x138] sm:$0xff]
        %v1947 = vld [vmem:[#allocation3 + $0x150] sm:$0xff]
        %v1948 = vld [vmem:[#allocation3 + $0x158] sm:$0xff]
        %v1949 = vld [vmem:[#allocation3 + $0x170] sm:$0xff]
        %v1950 = vld [vmem:[#allocation3 + $0x178] sm:$0xff]
        %v1951 = vld [vmem:[#allocation3 + $0x190] sm:$0xff]
        %v1952 = vld [vmem:[#allocation3 + $0x198] sm:$0xff]
        %v1953 = vld [vmem:[#allocation3 + $0x1b0] sm:$0xff]
        %v1954 = vld [vmem:[#allocation3 + $0x1b8] sm:$0xff]
        %v1955 = vld [vmem:[#allocation3 + $0x1d0] sm:$0xff]
        %v1956 = vld [vmem:[#allocation3 + $0x1d8] sm:$0xff]
        %v1957 = vld [vmem:[#allocation3 + $0x1f0] sm:$0xff]
        %v1958 = vld [vmem:[#allocation3 + $0x1f8] sm:$0xff]
        %v1959 = vld [vmem:[#allocation3 + $0x210] sm:$0xff]
        %v1960 = vld [vmem:[#allocation3 + $0x218] sm:$0xff]
        %v1961 = vld [vmem:[#allocation3 + $0x230] sm:$0xff]
        %v1962 = vld [vmem:[#allocation3 + $0x238] sm:$0xff]
        %v1963 = vld [vmem:[#allocation3 + $0x250] sm:$0xff]
        %v1964 = vld [vmem:[#allocation3 + $0x258] sm:$0xff]
        %v1965 = vld [vmem:[#allocation3 + $0x270] sm:$0xff]
        %v1966 = vld [vmem:[#allocation3 + $0x278] sm:$0xff]
        %v1967 = vld [vmem:[#allocation3 + $0x290] sm:$0xff]
        %v1968 = vld [vmem:[#allocation3 + $0x298] sm:$0xff]
        %v1969 = vld [vmem:[#allocation3 + $0x2b0] sm:$0xff]
        %v1970 = vld [vmem:[#allocation3 + $0x2b8] sm:$0xff]
        %v1971 = vld [vmem:[#allocation3 + $0x2d0] sm:$0xff]
        %v1972 = vld [vmem:[#allocation3 + $0x2d8] sm:$0xff]
        %v1973 = vld [vmem:[#allocation3 + $0x2f0] sm:$0xff]
        %v1974 = vld [vmem:[#allocation3 + $0x2f8] sm:$0xff]
        %v1975 = vld [vmem:[#allocation3 + $0x310] sm:$0xff]
        %v1976 = vld [vmem:[#allocation3 + $0x318] sm:$0xff]
        %v1977 = vld [vmem:[#allocation3 + $0x330] sm:$0xff]
        %v1978 = vld [vmem:[#allocation3 + $0x338] sm:$0xff]
        %v1979 = vld [vmem:[#allocation3 + $0x350] sm:$0xff]
        %v1980 = vld [vmem:[#allocation3 + $0x358] sm:$0xff]
        %v1981 = vld [vmem:[#allocation3 + $0x370] sm:$0xff]
        %v1982 = vld [vmem:[#allocation3 + $0x378] sm:$0xff]
        %v1983 = vld [vmem:[#allocation3 + $0x390] sm:$0xff]
        %v1984 = vld [vmem:[#allocation3 + $0x398] sm:$0xff]
        %v1985 = vld [vmem:[#allocation3 + $0x3b0] sm:$0xff]
        %v1986 = vld [vmem:[#allocation3 + $0x3b8] sm:$0xff]
        %v1987 = vld [vmem:[#allocation3 + $0x3d0] sm:$0xff]
        %v1988 = vld [vmem:[#allocation3 + $0x3d8] sm:$0xff]
        %v1989 = vld [vmem:[#allocation3 + $0x3f0] sm:$0xff]
        %v1990 = vld [vmem:[#allocation3 + $0x3f8] sm:$0xff]
        %s1991 = scalar_lea.vmem %s3, 1
        %v1992 = vld [vmem:[%s1991] ss:$8 sm:$0x3]
        %s1993 = scalar_lea.vmem %s3, 17
        %v1994 = vld [vmem:[%s1993] ss:$8 sm:$0x3]
        %v1995 = vadd.f32 %v1853, %v1855
        %v1996 = vadd.f32 %v1854, %v1856
        %v1998 = vlaneseq
        %v1999 = vshrl.u32 %v1998, 7
        %v2000 = vsub.s32 0, %v1999
        %v2001 = vrot.slane %v1992, %v2000
        %v2002 = vlaneseq
        %v2003 = vshrl.u32 %v2002, 7
        %v2004 = vsub.s32 1, %v2003
        %v2005 = vrot.slane %v1992, %v2004
        %2008 = vmatprep.subr.mxu0 %v1864
        %2009 = vmatpush1.msra.mxu0 %v1863
        %2010 = vmatprep.subr.mxu0 %v1866
        %2011 = vmatpush1.msra.mxu0 %v1865
        %2012 = vmatprep.subr.mxu0 %v1868
        %2013 = vmatpush1.msra.mxu0 %v1867
        %2014 = vmatprep.subr.mxu0 %v1870
        %2015 = vmatpush1.msra.mxu0 %v1869
        %2016 = vmatprep.subr.mxu0 %v1872
        %2017 = vmatpush1.msra.mxu0 %v1871
        %2018 = vmatprep.subr.mxu0 %v1874
        %2019 = vmatpush1.msra.mxu0 %v1873
        %2020 = vmatprep.subr.mxu0 %v1876
        %2021 = vmatpush1.msra.mxu0 %v1875
        %2022 = vmatprep.subr.mxu0 %v1878
        %2023 = vmatpush1.msra.mxu0 %v1877
        %2024 = vmatprep.subr.mxu0 %v1880
        %2025 = vmatpush1.msra.mxu0 %v1879
        %2026 = vmatprep.subr.mxu0 %v1882
        %2027 = vmatpush1.msra.mxu0 %v1881
        %2028 = vmatprep.subr.mxu0 %v1884
        %2029 = vmatpush1.msra.mxu0 %v1883
        %2030 = vmatprep.subr.mxu0 %v1886
        %2031 = vmatpush1.msra.mxu0 %v1885
        %2032 = vmatprep.subr.mxu0 %v1888
        %2033 = vmatpush1.msra.mxu0 %v1887
        %2034 = vmatprep.subr.mxu0 %v1890
        %2035 = vmatpush1.msra.mxu0 %v1889
        %2036 = vmatprep.subr.mxu0 %v1892
        %2037 = vmatpush1.msra.mxu0 %v1891
        %2038 = vmatprep.subr.mxu0 %v1894
        %2039 = vmatpush1.msra.mxu0 %v1893
        %2040 = vmatprep.subr.mxu0 %v1896
        %2041 = vmatpush1.msra.mxu0 %v1895
        %2042 = vmatprep.subr.mxu0 %v1898
        %2043 = vmatpush1.msra.mxu0 %v1897
        %2044 = vmatprep.subr.mxu0 %v1900
        %2045 = vmatpush1.msra.mxu0 %v1899
        %2046 = vmatprep.subr.mxu0 %v1902
        %2047 = vmatpush1.msra.mxu0 %v1901
        %2048 = vmatprep.subr.mxu0 %v1904
        %2049 = vmatpush1.msra.mxu0 %v1903
        %2050 = vmatprep.subr.mxu0 %v1906
        %2051 = vmatpush1.msra.mxu0 %v1905
        %2052 = vmatprep.subr.mxu0 %v1908
        %2053 = vmatpush1.msra.mxu0 %v1907
        %2054 = vmatprep.subr.mxu0 %v1910
        %2055 = vmatpush1.msra.mxu0 %v1909
        %2056 = vmatprep.subr.mxu0 %v1912
        %2057 = vmatpush1.msra.mxu0 %v1911
        %2058 = vmatprep.subr.mxu0 %v1914
        %2059 = vmatpush1.msra.mxu0 %v1913
        %2060 = vmatprep.subr.mxu0 %v1916
        %2061 = vmatpush1.msra.mxu0 %v1915
        %2062 = vmatprep.subr.mxu0 %v1918
        %2063 = vmatpush1.msra.mxu0 %v1917
        %2064 = vmatprep.subr.mxu0 %v1920
        %2065 = vmatpush1.msra.mxu0 %v1919
        %2066 = vmatprep.subr.mxu0 %v1922
        %2067 = vmatpush1.msra.mxu0 %v1921
        %2068 = vmatprep.subr.mxu0 %v1924
        %2069 = vmatpush1.msra.mxu0 %v1923
        %2070 = vmatprep.subr.mxu0 %v1926
        %2071 = vmatpush1.msra.mxu0 %v1925
        %2072 = vmatprep.mubr.f32.mxu0 %v1996
        %2073 = vmatmul.mubr.f32.gmra.mrb[0].mxu0 %v1995
        %v2074 = vpop.f32.mrb[0].mxu0
        %v2075 = vadd.f32 %v2001, %v2074
        %v2076 = vpop.f32.mrb[0].mxu0
        %v2077 = vadd.f32 %v2005, %v2076
        %2078 = vdwg.mxu0
        %v2079 = vxor.u32 %v2075, 2147483648
        %v2080 = vxor.u32 %v2077, 2147483648
        %v2081 = vmul.f32 %v2079, 1.442695
        %v2082 = vpow.pop %v2081
        %v2083 = vmul.f32 %v2080, 1.442695
        %v2084 = vpow.pop %v2083
        %v2085 = vadd.f32 %v2082, 1.0
        %v2086 = vadd.f32 %v2084, 1.0
        %v2087 = vrcp.pop %v2085
        %v2088 = vmul.f32 1.0, %v2087
        %v2089 = vrcp.pop %v2086
        %v2090 = vmul.f32 1.0, %v2089
        %v2091 = vadd.f32 %v1853, %v1858
        %v2092 = vadd.f32 %v1854, %v1859
        %v2094 = vlaneseq
        %v2095 = vshrl.u32 %v2094, 7
        %v2096 = vsub.s32 0, %v2095
        %v2097 = vrot.slane %v1994, %v2096
        %v2098 = vlaneseq
        %v2099 = vshrl.u32 %v2098, 7
        %v2100 = vsub.s32 1, %v2099
        %v2101 = vrot.slane %v1994, %v2100
        %2104 = vmatprep.subr.mxu0 %v1928
        %2105 = vmatpush1.msra.mxu0 %v1927
        %2106 = vmatprep.subr.mxu0 %v1930
        %2107 = vmatpush1.msra.mxu0 %v1929
        %2108 = vmatprep.subr.mxu0 %v1932
        %2109 = vmatpush1.msra.mxu0 %v1931
        %2110 = vmatprep.subr.mxu0 %v1934
        %2111 = vmatpush1.msra.mxu0 %v1933
        %2112 = vmatprep.subr.mxu0 %v1936
        %2113 = vmatpush1.msra.mxu0 %v1935
        %2114 = vmatprep.subr.mxu0 %v1938
        %2115 = vmatpush1.msra.mxu0 %v1937
        %2116 = vmatprep.subr.mxu0 %v1940
        %2117 = vmatpush1.msra.mxu0 %v1939
        %2118 = vmatprep.subr.mxu0 %v1942
        %2119 = vmatpush1.msra.mxu0 %v1941
        %2120 = vmatprep.subr.mxu0 %v1944
        %2121 = vmatpush1.msra.mxu0 %v1943
        %2122 = vmatprep.subr.mxu0 %v1946
        %2123 = vmatpush1.msra.mxu0 %v1945
        %2124 = vmatprep.subr.mxu0 %v1948
        %2125 = vmatpush1.msra.mxu0 %v1947
        %2126 = vmatprep.subr.mxu0 %v1950
        %2127 = vmatpush1.msra.mxu0 %v1949
        %2128 = vmatprep.subr.mxu0 %v1952
        %2129 = vmatpush1.msra.mxu0 %v1951
        %2130 = vmatprep.subr.mxu0 %v1954
        %2131 = vmatpush1.msra.mxu0 %v1953
        %2132 = vmatprep.subr.mxu0 %v1956
        %2133 = vmatpush1.msra.mxu0 %v1955
        %2134 = vmatprep.subr.mxu0 %v1958
        %2135 = vmatpush1.msra.mxu0 %v1957
        %2136 = vmatprep.subr.mxu0 %v1960
        %2137 = vmatpush1.msra.mxu0 %v1959
        %2138 = vmatprep.subr.mxu0 %v1962
        %2139 = vmatpush1.msra.mxu0 %v1961
        %2140 = vmatprep.subr.mxu0 %v1964
        %2141 = vmatpush1.msra.mxu0 %v1963
        %2142 = vmatprep.subr.mxu0 %v1966
        %2143 = vmatpush1.msra.mxu0 %v1965
        %2144 = vmatprep.subr.mxu0 %v1968
        %2145 = vmatpush1.msra.mxu0 %v1967
        %2146 = vmatprep.subr.mxu0 %v1970
        %2147 = vmatpush1.msra.mxu0 %v1969
        %2148 = vmatprep.subr.mxu0 %v1972
        %2149 = vmatpush1.msra.mxu0 %v1971
        %2150 = vmatprep.subr.mxu0 %v1974
        %2151 = vmatpush1.msra.mxu0 %v1973
        %2152 = vmatprep.subr.mxu0 %v1976
        %2153 = vmatpush1.msra.mxu0 %v1975
        %2154 = vmatprep.subr.mxu0 %v1978
        %2155 = vmatpush1.msra.mxu0 %v1977
        %2156 = vmatprep.subr.mxu0 %v1980
        %2157 = vmatpush1.msra.mxu0 %v1979
        %2158 = vmatprep.subr.mxu0 %v1982
        %2159 = vmatpush1.msra.mxu0 %v1981
        %2160 = vmatprep.subr.mxu0 %v1984
        %2161 = vmatpush1.msra.mxu0 %v1983
        %2162 = vmatprep.subr.mxu0 %v1986
        %2163 = vmatpush1.msra.mxu0 %v1985
        %2164 = vmatprep.subr.mxu0 %v1988
        %2165 = vmatpush1.msra.mxu0 %v1987
        %2166 = vmatprep.subr.mxu0 %v1990
        %2167 = vmatpush1.msra.mxu0 %v1989
        %2168 = vmatprep.mubr.f32.mxu0 %v2092
        %2169 = vmatmul.mubr.f32.gmra.mrb[0].mxu0 %v2091
        %v2170 = vpop.f32.mrb[0].mxu0
        %v2171 = vadd.f32 %v2097, %v2170
        %v2172 = vpop.f32.mrb[0].mxu0
        %v2173 = vadd.f32 %v2101, %v2172
        %2174 = vdwg.mxu0
        %v2175 = vxor.u32 %v2171, 2147483648
        %v2176 = vxor.u32 %v2173, 2147483648
        %v2177 = vmul.f32 %v2175, 1.442695
        %v2178 = vpow.pop %v2177
        %v2179 = vmul.f32 %v2176, 1.442695
        %v2180 = vpow.pop %v2179
        %v2181 = vadd.f32 %v2178, 1.0
        %v2182 = vadd.f32 %v2180, 1.0
        %v2183 = vrcp.pop %v2181
        %v2184 = vmul.f32 1.0, %v2183
        %v2185 = vrcp.pop %v2182
        %v2186 = vmul.f32 1.0, %v2185
        %v2187 = vmul.f32 %v2184, %v1858
        %v2188 = vmul.f32 %v2186, %v1859
        %v2189 = vsub.f32 1.0, %v2184
        %v2190 = vsub.f32 1.0, %v2186
        %v2191 = vmul.f32 %v2189, %v1861
        %v2192 = vmul.f32 %v2190, %v1862
        %v2193 = vadd.f32 %v2187, %v2191
        %v2194 = vadd.f32 %v2188, %v2192
        %v2195 = vmul.f32 %v2193, 1.8
        %v2196 = vmul.f32 %v2194, 1.8
        %v2197 = vadd.f32 %v2195, 0.1
        %v2198 = vadd.f32 %v2196, 0.1
        %v2199 = vsub.f32 %v1853, %v1855
        %v2200 = vsub.f32 %v1854, %v1856
        %v2201 = vrcp.pop %v2088
        %v2202 = vmul.f32 %v2199, %v2201
        %v2203 = vrcp.pop %v2090
        %v2204 = vmul.f32 %v2200, %v2203
        %v2205 = vadd.f32 %v1855, %v2202
        %v2206 = vadd.f32 %v1856, %v2204
        %v2207 = vsub.f32 %v2205, %v2197
        %v2208 = vsub.f32 %v2206, %v2198
        %vm2209 = vcmp.gt.f32.partialorder %v2207, 0.0
        %vm2210 = vcmp.gt.f32.partialorder %v2208, 0.0
        %v2211 = vsel %vm2209, 1, 0
        %v2212 = vsel %vm2210, 1, 0
        %v2213 = vcvt.s32.f32 %v2211
        %v2214 = vcvt.s32.f32 %v2212
        %v2215 = vsub.f32 1.0, %v2213
        %v2216 = vsub.f32 1.0, %v2214
        %v2217 = vmul.f32 %v2205, %v2215
        %v2218 = vmul.f32 %v2206, %v2216
        %v2219 = vmul.f32 %v2213, 0.0
        %v2220 = vmul.f32 %v2214, 0.0
        %v2221 = vadd.f32 %v2217, %v2219
        %v2222 = vadd.f32 %v2218, %v2220
        %2223 = vst [vmem:[%s11] sm:$0xff] %v2221
        %2224 = vst [vmem:[%s11 + $0x8] sm:$0xff] %v2222
        %2225 = vst [vmem:[%s1857] sm:$0xff] %v2193
        %2226 = vst [vmem:[%s1857 + $0x8] sm:$0xff] %v2194
        %2227 = vst [vmem:[%s1860] sm:$0xff] %v2213
        %2228 = vst [vmem:[%s1860 + $0x8] sm:$0xff] %v2214
        %v2229 = vld [vmem:[#allocation4] sm:$0xff]
        %v2230 = vld [vmem:[#allocation4 + $0x8] sm:$0xff]
        %v2231 = vld [vmem:[#allocation4 + $0x10] sm:$0xff]
        %v2232 = vld [vmem:[#allocation4 + $0x18] sm:$0xff]
        %v2233 = vld [vmem:[#allocation4 + $0x20] sm:$0xff]
        %v2234 = vld [vmem:[#allocation4 + $0x28] sm:$0xff]
        %v2235 = vld [vmem:[#allocation4 + $0x30] sm:$0xff]
        %v2236 = vld [vmem:[#allocation4 + $0x38] sm:$0xff]
        %v2237 = vld [vmem:[#allocation4 + $0x40] sm:$0xff]
        %v2238 = vld [vmem:[#allocation4 + $0x48] sm:$0xff]
        %v2239 = vld [vmem:[#allocation4 + $0x50] sm:$0xff]
        %v2240 = vld [vmem:[#allocation4 + $0x58] sm:$0xff]
        %v2241 = vld [vmem:[#allocation4 + $0x60] sm:$0xff]
        %v2242 = vld [vmem:[#allocation4 + $0x68] sm:$0xff]
        %v2243 = vld [vmem:[#allocation4 + $0x70] sm:$0xff]
        %v2244 = vld [vmem:[#allocation4 + $0x78] sm:$0xff]
        %v2245 = vld [vmem:[#allocation4 + $0x80] sm:$0xff]
        %v2246 = vld [vmem:[#allocation4 + $0x88] sm:$0xff]
        %v2247 = vld [vmem:[#allocation4 + $0x90] sm:$0xff]
        %v2248 = vld [vmem:[#allocation4 + $0x98] sm:$0xff]
        %v2249 = vld [vmem:[#allocation4 + $0xa0] sm:$0xff]
        %v2250 = vld [vmem:[#allocation4 + $0xa8] sm:$0xff]
        %v2251 = vld [vmem:[#allocation4 + $0xb0] sm:$0xff]
        %v2252 = vld [vmem:[#allocation4 + $0xb8] sm:$0xff]
        %v2253 = vld [vmem:[#allocation4 + $0xc0] sm:$0xff]
        %v2254 = vld [vmem:[#allocation4 + $0xc8] sm:$0xff]
        %v2255 = vld [vmem:[#allocation4 + $0xd0] sm:$0xff]
        %v2256 = vld [vmem:[#allocation4 + $0xd8] sm:$0xff]
        %v2257 = vld [vmem:[#allocation4 + $0xe0] sm:$0xff]
        %v2258 = vld [vmem:[#allocation4 + $0xe8] sm:$0xff]
        %v2259 = vld [vmem:[#allocation4 + $0xf0] sm:$0xff]
        %v2260 = vld [vmem:[#allocation4 + $0xf8] sm:$0xff]
        %v2261 = vld [vmem:[#allocation12] ss:$0 sm:$0xff]
        %2262 = vmatprep.subr.mxu0 0.0
        %2263 = vmatpush1.msra.mxu0 %v2229
        %2264 = vmatprep.subr.mxu0 0.0
        %2265 = vmatpush1.msra.mxu0 %v2230
        %2266 = vmatprep.subr.mxu0 0.0
        %2267 = vmatpush1.msra.mxu0 %v2231
        %2268 = vmatprep.subr.mxu0 0.0
        %2269 = vmatpush1.msra.mxu0 %v2232
        %2270 = vmatprep.subr.mxu0 0.0
        %2271 = vmatpush1.msra.mxu0 %v2233
        %2272 = vmatprep.subr.mxu0 0.0
        %2273 = vmatpush1.msra.mxu0 %v2234
        %2274 = vmatprep.subr.mxu0 0.0
        %2275 = vmatpush1.msra.mxu0 %v2235
        %2276 = vmatprep.subr.mxu0 0.0
        %2277 = vmatpush1.msra.mxu0 %v2236
        %2278 = vmatprep.subr.mxu0 0.0
        %2279 = vmatpush1.msra.mxu0 %v2237
        %2280 = vmatprep.subr.mxu0 0.0
        %2281 = vmatpush1.msra.mxu0 %v2238
        %2282 = vmatprep.subr.mxu0 0.0
        %2283 = vmatpush1.msra.mxu0 %v2239
        %2284 = vmatprep.subr.mxu0 0.0
        %2285 = vmatpush1.msra.mxu0 %v2240
        %2286 = vmatprep.subr.mxu0 0.0
        %2287 = vmatpush1.msra.mxu0 %v2241
        %2288 = vmatprep.subr.mxu0 0.0
        %2289 = vmatpush1.msra.mxu0 %v2242
        %2290 = vmatprep.subr.mxu0 0.0
        %2291 = vmatpush1.msra.mxu0 %v2243
        %2292 = vmatprep.subr.mxu0 0.0
        %2293 = vmatpush1.msra.mxu0 %v2244
        %2294 = vmatprep.subr.mxu0 0.0
        %2295 = vmatpush1.msra.mxu0 %v2245
        %2296 = vmatprep.subr.mxu0 0.0
        %2297 = vmatpush1.msra.mxu0 %v2246
        %2298 = vmatprep.subr.mxu0 0.0
        %2299 = vmatpush1.msra.mxu0 %v2247
        %2300 = vmatprep.subr.mxu0 0.0
        %2301 = vmatpush1.msra.mxu0 %v2248
        %2302 = vmatprep.subr.mxu0 0.0
        %2303 = vmatpush1.msra.mxu0 %v2249
        %2304 = vmatprep.subr.mxu0 0.0
        %2305 = vmatpush1.msra.mxu0 %v2250
        %2306 = vmatprep.subr.mxu0 0.0
        %2307 = vmatpush1.msra.mxu0 %v2251
        %2308 = vmatprep.subr.mxu0 0.0
        %2309 = vmatpush1.msra.mxu0 %v2252
        %2310 = vmatprep.subr.mxu0 0.0
        %2311 = vmatpush1.msra.mxu0 %v2253
        %2312 = vmatprep.subr.mxu0 0.0
        %2313 = vmatpush1.msra.mxu0 %v2254
        %2314 = vmatprep.subr.mxu0 0.0
        %2315 = vmatpush1.msra.mxu0 %v2255
        %2316 = vmatprep.subr.mxu0 0.0
        %2317 = vmatpush1.msra.mxu0 %v2256
        %2318 = vmatprep.subr.mxu0 0.0
        %2319 = vmatpush1.msra.mxu0 %v2257
        %2320 = vmatprep.subr.mxu0 0.0
        %2321 = vmatpush1.msra.mxu0 %v2258
        %2322 = vmatprep.subr.mxu0 0.0
        %2323 = vmatpush1.msra.mxu0 %v2259
        %2324 = vmatprep.subr.mxu0 0.0
        %2325 = vmatpush1.msra.mxu0 %v2260
        %2326 = vmatprep.mubr.f32.mxu0 %v2214
        %2327 = vmatmul.mubr.f32.gmra.mrb[0].mxu0 %v2213
        %v2328 = vpop.f32.mrb[0].mxu0
        %v2329 = vadd.f32 %v2261, %v2328
        %v2330 = vpop.f32.mrb[0].mxu0
        %2331 = vdwg.mxu0
        %v2332 = vld [vmem:[%s12] sm:$0xff]
        %s2333 = scalar_lea.vmem %s12, 8
        %v2334 = vld [vmem:[%s2333] sm:$0xff]
        %s2335 = scalar_lea.vmem %s12, 16
        %v2336 = vld [vmem:[%s2335] sm:$0xff]
        %v2337 = vld [vmem:[#allocation5] sm:$0xff]
        %v2338 = vld [vmem:[#allocation5 + $0x10] sm:$0xff]
        %v2339 = vld [vmem:[#allocation5 + $0x20] sm:$0xff]
        %v2340 = vld [vmem:[#allocation5 + $0x30] sm:$0xff]
        %v2341 = vld [vmem:[#allocation5 + $0x40] sm:$0xff]
        %v2342 = vld [vmem:[#allocation5 + $0x50] sm:$0xff]
        %v2343 = vld [vmem:[#allocation5 + $0x60] sm:$0xff]
        %v2344 = vld [vmem:[#allocation5 + $0x70] sm:$0xff]
        %v2345 = vld [vmem:[#allocation5 + $0x80] sm:$0xff]
        %v2346 = vld [vmem:[#allocation5 + $0x90] sm:$0xff]
        %v2347 = vld [vmem:[#allocation5 + $0xa0] sm:$0xff]
        %v2348 = vld [vmem:[#allocation5 + $0xb0] sm:$0xff]
        %v2349 = vld [vmem:[#allocation5 + $0xc0] sm:$0xff]
        %v2350 = vld [vmem:[#allocation5 + $0xd0] sm:$0xff]
        %v2351 = vld [vmem:[#allocation5 + $0xe0] sm:$0xff]
        %v2352 = vld [vmem:[#allocation5 + $0xf0] sm:$0xff]
        %v2353 = vld [vmem:[#allocation5 + $0x8] sm:$0xff]
        %v2354 = vld [vmem:[#allocation5 + $0x18] sm:$0xff]
        %v2355 = vld [vmem:[#allocation5 + $0x28] sm:$0xff]
        %v2356 = vld [vmem:[#allocation5 + $0x38] sm:$0xff]
        %v2357 = vld [vmem:[#allocation5 + $0x48] sm:$0xff]
        %v2358 = vld [vmem:[#allocation5 + $0x58] sm:$0xff]
        %v2359 = vld [vmem:[#allocation5 + $0x68] sm:$0xff]
        %v2360 = vld [vmem:[#allocation5 + $0x78] sm:$0xff]
        %v2361 = vld [vmem:[#allocation5 + $0x88] sm:$0xff]
        %v2362 = vld [vmem:[#allocation5 + $0x98] sm:$0xff]
        %v2363 = vld [vmem:[#allocation5 + $0xa8] sm:$0xff]
        %v2364 = vld [vmem:[#allocation5 + $0xb8] sm:$0xff]
        %v2365 = vld [vmem:[#allocation5 + $0xc8] sm:$0xff]
        %v2366 = vld [vmem:[#allocation5 + $0xd8] sm:$0xff]
        %v2367 = vld [vmem:[#allocation5 + $0xe8] sm:$0xff]
        %v2368 = vld [vmem:[#allocation5 + $0xf8] sm:$0xff]
        %v2369 = vld [vmem:[#allocation12 + $0x1] ss:$0 sm:$0xff]
        %v2370 = vld [vmem:[#allocation12 + $0x9] ss:$0 sm:$0xff]
        %v2371 = vadd.f32 %v2329, %v2332
        %2372 = vmatprep.subr.mxu0 0.0
        %2373 = vmatpush1.msra.mxu0 %v2337
        %2374 = vmatprep.subr.mxu0 0.0
        %2375 = vmatpush1.msra.mxu0 %v2338
        %2376 = vmatprep.subr.mxu0 0.0
        %2377 = vmatpush1.msra.mxu0 %v2339
        %2378 = vmatprep.subr.mxu0 0.0
        %2379 = vmatpush1.msra.mxu0 %v2340
        %2380 = vmatprep.subr.mxu0 0.0
        %2381 = vmatpush1.msra.mxu0 %v2341
        %2382 = vmatprep.subr.mxu0 0.0
        %2383 = vmatpush1.msra.mxu0 %v2342
        %2384 = vmatprep.subr.mxu0 0.0
        %2385 = vmatpush1.msra.mxu0 %v2343
        %2386 = vmatprep.subr.mxu0 0.0
        %2387 = vmatpush1.msra.mxu0 %v2344
        %2388 = vmatprep.subr.mxu0 0.0
        %2389 = vmatpush1.msra.mxu0 %v2345
        %2390 = vmatprep.subr.mxu0 0.0
        %2391 = vmatpush1.msra.mxu0 %v2346
        %2392 = vmatprep.subr.mxu0 0.0
        %2393 = vmatpush1.msra.mxu0 %v2347
        %2394 = vmatprep.subr.mxu0 0.0
        %2395 = vmatpush1.msra.mxu0 %v2348
        %2396 = vmatprep.subr.mxu0 0.0
        %2397 = vmatpush1.msra.mxu0 %v2349
        %2398 = vmatprep.subr.mxu0 0.0
        %2399 = vmatpush1.msra.mxu0 %v2350
        %2400 = vmatprep.subr.mxu0 0.0
        %2401 = vmatpush1.msra.mxu0 %v2351
        %2402 = vmatprep.subr.mxu0 0.0
        %2403 = vmatpush1.msra.mxu0 %v2352
        %2404 = vmatprep.subr.mxu0 0.0
        %2405 = vmatpush1.msra.mxu0 0.0
        %2406 = vmatprep.subr.mxu0 0.0
        %2407 = vmatpush1.msra.mxu0 0.0
        %2408 = vmatprep.subr.mxu0 0.0
        %2409 = vmatpush1.msra.mxu0 0.0
        %2410 = vmatprep.subr.mxu0 0.0
        %2411 = vmatpush1.msra.mxu0 0.0
        %2412 = vmatprep.subr.mxu0 0.0
        %2413 = vmatpush1.msra.mxu0 0.0
        %2414 = vmatprep.subr.mxu0 0.0
        %2415 = vmatpush1.msra.mxu0 0.0
        %2416 = vmatprep.subr.mxu0 0.0
        %2417 = vmatpush1.msra.mxu0 0.0
        %2418 = vmatprep.subr.mxu0 0.0
        %2419 = vmatpush1.msra.mxu0 0.0
        %2420 = vmatprep.subr.mxu0 0.0
        %2421 = vmatpush1.msra.mxu0 0.0
        %2422 = vmatprep.subr.mxu0 0.0
        %2423 = vmatpush1.msra.mxu0 0.0
        %2424 = vmatprep.subr.mxu0 0.0
        %2425 = vmatpush1.msra.mxu0 0.0
        %2426 = vmatprep.subr.mxu0 0.0
        %2427 = vmatpush1.msra.mxu0 0.0
        %2428 = vmatprep.subr.mxu0 0.0
        %2429 = vmatpush1.msra.mxu0 0.0
        %2430 = vmatprep.subr.mxu0 0.0
        %2431 = vmatpush1.msra.mxu0 0.0
        %2432 = vmatprep.subr.mxu0 0.0
        %2433 = vmatpush1.msra.mxu0 0.0
        %2434 = vmatprep.subr.mxu0 0.0
        %2435 = vmatpush1.msra.mxu0 0.0
        %2436 = vmatprep.mubr.f32.mxu0 0.0
        %2437 = vmatmul.mubr.f32.gmra.mrb[0].mxu0 %v2371
        %v2438 = vpop.f32.mrb[0].mxu0
        %v2439 = vadd.f32 %v2369, %v2438
        %v2440 = vpop.f32.mrb[0].mxu0
        %2441 = vdwg.mxu0
        %v2442 = vxor.u32 %v2439, 2147483648
        %v2443 = vmul.f32 %v2442, 1.442695
        %v2444 = vpow.pop %v2443
        %v2445 = vadd.f32 %v2444, 1.0
        %v2446 = vrcp.pop %v2445
        %v2447 = vmul.f32 1.0, %v2446
        %v2448 = vadd.f32 %v2329, %v2334
        %2449 = vmatprep.subr.mxu0 0.0
        %2450 = vmatpush1.msra.mxu0 %v2353
        %2451 = vmatprep.subr.mxu0 0.0
        %2452 = vmatpush1.msra.mxu0 %v2354
        %2453 = vmatprep.subr.mxu0 0.0
        %2454 = vmatpush1.msra.mxu0 %v2355
        %2455 = vmatprep.subr.mxu0 0.0
        %2456 = vmatpush1.msra.mxu0 %v2356
        %2457 = vmatprep.subr.mxu0 0.0
        %2458 = vmatpush1.msra.mxu0 %v2357
        %2459 = vmatprep.subr.mxu0 0.0
        %2460 = vmatpush1.msra.mxu0 %v2358
        %2461 = vmatprep.subr.mxu0 0.0
        %2462 = vmatpush1.msra.mxu0 %v2359
        %2463 = vmatprep.subr.mxu0 0.0
        %2464 = vmatpush1.msra.mxu0 %v2360
        %2465 = vmatprep.subr.mxu0 0.0
        %2466 = vmatpush1.msra.mxu0 %v2361
        %2467 = vmatprep.subr.mxu0 0.0
        %2468 = vmatpush1.msra.mxu0 %v2362
        %2469 = vmatprep.subr.mxu0 0.0
        %2470 = vmatpush1.msra.mxu0 %v2363
        %2471 = vmatprep.subr.mxu0 0.0
        %2472 = vmatpush1.msra.mxu0 %v2364
        %2473 = vmatprep.subr.mxu0 0.0
        %2474 = vmatpush1.msra.mxu0 %v2365
        %2475 = vmatprep.subr.mxu0 0.0
        %2476 = vmatpush1.msra.mxu0 %v2366
        %2477 = vmatprep.subr.mxu0 0.0
        %2478 = vmatpush1.msra.mxu0 %v2367
        %2479 = vmatprep.subr.mxu0 0.0
        %2480 = vmatpush1.msra.mxu0 %v2368
        %2481 = vmatprep.subr.mxu0 0.0
        %2482 = vmatpush1.msra.mxu0 0.0
        %2483 = vmatprep.subr.mxu0 0.0
        %2484 = vmatpush1.msra.mxu0 0.0
        %2485 = vmatprep.subr.mxu0 0.0
        %2486 = vmatpush1.msra.mxu0 0.0
        %2487 = vmatprep.subr.mxu0 0.0
        %2488 = vmatpush1.msra.mxu0 0.0
        %2489 = vmatprep.subr.mxu0 0.0
        %2490 = vmatpush1.msra.mxu0 0.0
        %2491 = vmatprep.subr.mxu0 0.0
        %2492 = vmatpush1.msra.mxu0 0.0
        %2493 = vmatprep.subr.mxu0 0.0
        %2494 = vmatpush1.msra.mxu0 0.0
        %2495 = vmatprep.subr.mxu0 0.0
        %2496 = vmatpush1.msra.mxu0 0.0
        %2497 = vmatprep.subr.mxu0 0.0
        %2498 = vmatpush1.msra.mxu0 0.0
        %2499 = vmatprep.subr.mxu0 0.0
        %2500 = vmatpush1.msra.mxu0 0.0
        %2501 = vmatprep.subr.mxu0 0.0
        %2502 = vmatpush1.msra.mxu0 0.0
        %2503 = vmatprep.subr.mxu0 0.0
        %2504 = vmatpush1.msra.mxu0 0.0
        %2505 = vmatprep.subr.mxu0 0.0
        %2506 = vmatpush1.msra.mxu0 0.0
        %2507 = vmatprep.subr.mxu0 0.0
        %2508 = vmatpush1.msra.mxu0 0.0
        %2509 = vmatprep.subr.mxu0 0.0
        %2510 = vmatpush1.msra.mxu0 0.0
        %2511 = vmatprep.subr.mxu0 0.0
        %2512 = vmatpush1.msra.mxu0 0.0
        %2513 = vmatprep.mubr.f32.mxu0 0.0
        %2514 = vmatmul.mubr.f32.gmra.mrb[0].mxu0 %v2448
        %v2515 = vpop.f32.mrb[0].mxu0
        %v2516 = vadd.f32 %v2370, %v2515
        %v2517 = vpop.f32.mrb[0].mxu0
        %2518 = vdwg.mxu0
        %v2519 = vxor.u32 %v2516, 2147483648
        %v2520 = vmul.f32 %v2519, 1.442695
        %v2521 = vpow.pop %v2520
        %v2522 = vadd.f32 %v2521, 1.0
        %v2523 = vrcp.pop %v2522
        %v2524 = vmul.f32 1.0, %v2523
        %v2525 = vmul.f32 %v2524, %v2334
        %v2526 = vsub.f32 1.0, %v2524
        %v2527 = vmul.f32 %v2526, %v2336
        %v2528 = vadd.f32 %v2525, %v2527
        %v2529 = vmul.f32 %v2528, 1.8
        %v2530 = vadd.f32 %v2529, 0.1
        %v2531 = vsub.f32 %v2329, %v2332
        %v2532 = vrcp.pop %v2447
        %v2533 = vmul.f32 %v2531, %v2532
        %v2534 = vadd.f32 %v2332, %v2533
        %v2535 = vsub.f32 %v2534, %v2530
        %vm2536 = vcmp.gt.f32.partialorder %v2535, 0.0
        %v2537 = vsel %vm2536, 1, 0
        %v2538 = vcvt.s32.f32 %v2537
        %v2539 = vsub.f32 1.0, %v2538
        %v2540 = vmul.f32 %v2534, %v2539
        %v2541 = vmul.f32 %v2538, 0.0
        %v2542 = vadd.f32 %v2540, %v2541
        %2543 = vst [vmem:[%s12] sm:$0xff] %v2542
        %2544 = vst [vmem:[%s2333] sm:$0xff] %v2528
        %2545 = vst [vmem:[%s2335] sm:$0xff] %v2538
        %v2546 = vld [vmem:[#allocation6] sm:$0xff]
        %v2547 = vld [vmem:[#allocation6 + $0x8] sm:$0xff]
        %v2548 = vld [vmem:[#allocation6 + $0x10] sm:$0xff]
        %v2549 = vld [vmem:[#allocation6 + $0x18] sm:$0xff]
        %v2550 = vld [vmem:[#allocation6 + $0x20] sm:$0xff]
        %v2551 = vld [vmem:[#allocation6 + $0x28] sm:$0xff]
        %v2552 = vld [vmem:[#allocation6 + $0x30] sm:$0xff]
        %v2553 = vld [vmem:[#allocation6 + $0x38] sm:$0xff]
        %v2554 = vld [vmem:[#allocation6 + $0x40] sm:$0xff]
        %v2555 = vld [vmem:[#allocation6 + $0x48] sm:$0xff]
        %v2556 = vld [vmem:[#allocation6 + $0x50] sm:$0xff]
        %v2557 = vld [vmem:[#allocation6 + $0x58] sm:$0xff]
        %v2558 = vld [vmem:[#allocation6 + $0x60] sm:$0xff]
        %v2559 = vld [vmem:[#allocation6 + $0x68] sm:$0xff]
        %v2560 = vld [vmem:[#allocation6 + $0x70] sm:$0xff]
        %v2561 = vld [vmem:[#allocation6 + $0x78] sm:$0xff]
        %v2562 = vld [vmem:[%s9] ss:$0 sm:$0xff]
        %2563 = vmatprep.subr.mxu0 0.0
        %2564 = vmatpush1.msra.mxu0 %v2546
        %2565 = vmatprep.subr.mxu0 0.0
        %2566 = vmatpush1.msra.mxu0 %v2547
        %2567 = vmatprep.subr.mxu0 0.0
        %2568 = vmatpush1.msra.mxu0 %v2548
        %2569 = vmatprep.subr.mxu0 0.0
        %2570 = vmatpush1.msra.mxu0 %v2549
        %2571 = vmatprep.subr.mxu0 0.0
        %2572 = vmatpush1.msra.mxu0 %v2550
        %2573 = vmatprep.subr.mxu0 0.0
        %2574 = vmatpush1.msra.mxu0 %v2551
        %2575 = vmatprep.subr.mxu0 0.0
        %2576 = vmatpush1.msra.mxu0 %v2552
        %2577 = vmatprep.subr.mxu0 0.0
        %2578 = vmatpush1.msra.mxu0 %v2553
        %2579 = vmatprep.subr.mxu0 0.0
        %2580 = vmatpush1.msra.mxu0 %v2554
        %2581 = vmatprep.subr.mxu0 0.0
        %2582 = vmatpush1.msra.mxu0 %v2555
        %2583 = vmatprep.subr.mxu0 0.0
        %2584 = vmatpush1.msra.mxu0 %v2556
        %2585 = vmatprep.subr.mxu0 0.0
        %2586 = vmatpush1.msra.mxu0 %v2557
        %2587 = vmatprep.subr.mxu0 0.0
        %2588 = vmatpush1.msra.mxu0 %v2558
        %2589 = vmatprep.subr.mxu0 0.0
        %2590 = vmatpush1.msra.mxu0 %v2559
        %2591 = vmatprep.subr.mxu0 0.0
        %2592 = vmatpush1.msra.mxu0 %v2560
        %2593 = vmatprep.subr.mxu0 0.0
        %2594 = vmatpush1.msra.mxu0 %v2561
        %2595 = vmatprep.subr.mxu0 0.0
        %2596 = vmatpush1.msra.mxu0 0.0
        %2597 = vmatprep.subr.mxu0 0.0
        %2598 = vmatpush1.msra.mxu0 0.0
        %2599 = vmatprep.subr.mxu0 0.0
        %2600 = vmatpush1.msra.mxu0 0.0
        %2601 = vmatprep.subr.mxu0 0.0
        %2602 = vmatpush1.msra.mxu0 0.0
        %2603 = vmatprep.subr.mxu0 0.0
        %2604 = vmatpush1.msra.mxu0 0.0
        %2605 = vmatprep.subr.mxu0 0.0
        %2606 = vmatpush1.msra.mxu0 0.0
        %2607 = vmatprep.subr.mxu0 0.0
        %2608 = vmatpush1.msra.mxu0 0.0
        %2609 = vmatprep.subr.mxu0 0.0
        %2610 = vmatpush1.msra.mxu0 0.0
        %2611 = vmatprep.subr.mxu0 0.0
        %2612 = vmatpush1.msra.mxu0 0.0
        %2613 = vmatprep.subr.mxu0 0.0
        %2614 = vmatpush1.msra.mxu0 0.0
        %2615 = vmatprep.subr.mxu0 0.0
        %2616 = vmatpush1.msra.mxu0 0.0
        %2617 = vmatprep.subr.mxu0 0.0
        %2618 = vmatpush1.msra.mxu0 0.0
        %2619 = vmatprep.subr.mxu0 0.0
        %2620 = vmatpush1.msra.mxu0 0.0
        %2621 = vmatprep.subr.mxu0 0.0
        %2622 = vmatpush1.msra.mxu0 0.0
        %2623 = vmatprep.subr.mxu0 0.0
        %2624 = vmatpush1.msra.mxu0 0.0
        %2625 = vmatprep.subr.mxu0 0.0
        %2626 = vmatpush1.msra.mxu0 0.0
        %2627 = vmatprep.mubr.f32.mxu0 0.0
        %2628 = vmatmul.mubr.f32.gmra.mrb[0].mxu0 %v2538
        %v2629 = vpop.f32.mrb[0].mxu0
        %v2630 = vadd.f32 %v2562, %v2629
        %v2631 = vpop.f32.mrb[0].mxu0
        %2632 = vdwg.mxu0
        %v2633 = vld [vmem:[%s13] sm:$0xff]
        %s2634 = scalar_lea.vmem %s13, 8
        %v2635 = vld [vmem:[%s2634] sm:$0xff]
        %s2636 = scalar_lea.vmem %s13, 16
        %v2637 = vld [vmem:[%s2636] sm:$0xff]
        %v2638 = vld [vmem:[#allocation7] sm:$0xff]
        %v2639 = vld [vmem:[#allocation7 + $0x10] sm:$0xff]
        %v2640 = vld [vmem:[#allocation7 + $0x20] sm:$0xff]
        %v2641 = vld [vmem:[#allocation7 + $0x30] sm:$0xff]
        %v2642 = vld [vmem:[#allocation7 + $0x40] sm:$0xff]
        %v2643 = vld [vmem:[#allocation7 + $0x50] sm:$0xff]
        %v2644 = vld [vmem:[#allocation7 + $0x60] sm:$0xff]
        %v2645 = vld [vmem:[#allocation7 + $0x70] sm:$0xff]
        %v2646 = vld [vmem:[#allocation7 + $0x80] sm:$0xff]
        %v2647 = vld [vmem:[#allocation7 + $0x90] sm:$0xff]
        %v2648 = vld [vmem:[#allocation7 + $0xa0] sm:$0xff]
        %v2649 = vld [vmem:[#allocation7 + $0xb0] sm:$0xff]
        %v2650 = vld [vmem:[#allocation7 + $0xc0] sm:$0xff]
        %v2651 = vld [vmem:[#allocation7 + $0xd0] sm:$0xff]
        %v2652 = vld [vmem:[#allocation7 + $0xe0] sm:$0xff]
        %v2653 = vld [vmem:[#allocation7 + $0xf0] sm:$0xff]
        %v2654 = vld [vmem:[#allocation7 + $0x8] sm:$0xff]
        %v2655 = vld [vmem:[#allocation7 + $0x18] sm:$0xff]
        %v2656 = vld [vmem:[#allocation7 + $0x28] sm:$0xff]
        %v2657 = vld [vmem:[#allocation7 + $0x38] sm:$0xff]
        %v2658 = vld [vmem:[#allocation7 + $0x48] sm:$0xff]
        %v2659 = vld [vmem:[#allocation7 + $0x58] sm:$0xff]
        %v2660 = vld [vmem:[#allocation7 + $0x68] sm:$0xff]
        %v2661 = vld [vmem:[#allocation7 + $0x78] sm:$0xff]
        %v2662 = vld [vmem:[#allocation7 + $0x88] sm:$0xff]
        %v2663 = vld [vmem:[#allocation7 + $0x98] sm:$0xff]
        %v2664 = vld [vmem:[#allocation7 + $0xa8] sm:$0xff]
        %v2665 = vld [vmem:[#allocation7 + $0xb8] sm:$0xff]
        %v2666 = vld [vmem:[#allocation7 + $0xc8] sm:$0xff]
        %v2667 = vld [vmem:[#allocation7 + $0xd8] sm:$0xff]
        %v2668 = vld [vmem:[#allocation7 + $0xe8] sm:$0xff]
        %v2669 = vld [vmem:[#allocation7 + $0xf8] sm:$0xff]
        %v2670 = vld [vmem:[%s9 + $0x1] ss:$0 sm:$0xff]
        %v2671 = vld [vmem:[%s9 + $0x9] ss:$0 sm:$0xff]
        %v2672 = vadd.f32 %v2630, %v2633
        %2673 = vmatprep.subr.mxu0 0.0
        %2674 = vmatpush1.msra.mxu0 %v2638
        %2675 = vmatprep.subr.mxu0 0.0
        %2676 = vmatpush1.msra.mxu0 %v2639
        %2677 = vmatprep.subr.mxu0 0.0
        %2678 = vmatpush1.msra.mxu0 %v2640
        %2679 = vmatprep.subr.mxu0 0.0
        %2680 = vmatpush1.msra.mxu0 %v2641
        %2681 = vmatprep.subr.mxu0 0.0
        %2682 = vmatpush1.msra.mxu0 %v2642
        %2683 = vmatprep.subr.mxu0 0.0
        %2684 = vmatpush1.msra.mxu0 %v2643
        %2685 = vmatprep.subr.mxu0 0.0
        %2686 = vmatpush1.msra.mxu0 %v2644
        %2687 = vmatprep.subr.mxu0 0.0
        %2688 = vmatpush1.msra.mxu0 %v2645
        %2689 = vmatprep.subr.mxu0 0.0
        %2690 = vmatpush1.msra.mxu0 %v2646
        %2691 = vmatprep.subr.mxu0 0.0
        %2692 = vmatpush1.msra.mxu0 %v2647
        %2693 = vmatprep.subr.mxu0 0.0
        %2694 = vmatpush1.msra.mxu0 %v2648
        %2695 = vmatprep.subr.mxu0 0.0
        %2696 = vmatpush1.msra.mxu0 %v2649
        %2697 = vmatprep.subr.mxu0 0.0
        %2698 = vmatpush1.msra.mxu0 %v2650
        %2699 = vmatprep.subr.mxu0 0.0
        %2700 = vmatpush1.msra.mxu0 %v2651
        %2701 = vmatprep.subr.mxu0 0.0
        %2702 = vmatpush1.msra.mxu0 %v2652
        %2703 = vmatprep.subr.mxu0 0.0
        %2704 = vmatpush1.msra.mxu0 %v2653
        %2705 = vmatprep.subr.mxu0 0.0
        %2706 = vmatpush1.msra.mxu0 0.0
        %2707 = vmatprep.subr.mxu0 0.0
        %2708 = vmatpush1.msra.mxu0 0.0
        %2709 = vmatprep.subr.mxu0 0.0
        %2710 = vmatpush1.msra.mxu0 0.0
        %2711 = vmatprep.subr.mxu0 0.0
        %2712 = vmatpush1.msra.mxu0 0.0
        %2713 = vmatprep.subr.mxu0 0.0
        %2714 = vmatpush1.msra.mxu0 0.0
        %2715 = vmatprep.subr.mxu0 0.0
        %2716 = vmatpush1.msra.mxu0 0.0
        %2717 = vmatprep.subr.mxu0 0.0
        %2718 = vmatpush1.msra.mxu0 0.0
        %2719 = vmatprep.subr.mxu0 0.0
        %2720 = vmatpush1.msra.mxu0 0.0
        %2721 = vmatprep.subr.mxu0 0.0
        %2722 = vmatpush1.msra.mxu0 0.0
        %2723 = vmatprep.subr.mxu0 0.0
        %2724 = vmatpush1.msra.mxu0 0.0
        %2725 = vmatprep.subr.mxu0 0.0
        %2726 = vmatpush1.msra.mxu0 0.0
        %2727 = vmatprep.subr.mxu0 0.0
        %2728 = vmatpush1.msra.mxu0 0.0
        %2729 = vmatprep.subr.mxu0 0.0
        %2730 = vmatpush1.msra.mxu0 0.0
        %2731 = vmatprep.subr.mxu0 0.0
        %2732 = vmatpush1.msra.mxu0 0.0
        %2733 = vmatprep.subr.mxu0 0.0
        %2734 = vmatpush1.msra.mxu0 0.0
        %2735 = vmatprep.subr.mxu0 0.0
        %2736 = vmatpush1.msra.mxu0 0.0
        %2737 = vmatprep.mubr.f32.mxu0 0.0
        %2738 = vmatmul.mubr.f32.gmra.mrb[0].mxu0 %v2672
        %v2739 = vpop.f32.mrb[0].mxu0
        %v2740 = vadd.f32 %v2670, %v2739
        %v2741 = vpop.f32.mrb[0].mxu0
        %2742 = vdwg.mxu0
        %v2743 = vxor.u32 %v2740, 2147483648
        %v2744 = vmul.f32 %v2743, 1.442695
        %v2745 = vpow.pop %v2744
        %v2746 = vadd.f32 %v2745, 1.0
        %v2747 = vrcp.pop %v2746
        %v2748 = vmul.f32 1.0, %v2747
        %v2749 = vadd.f32 %v2630, %v2635
        %2750 = vmatprep.subr.mxu0 0.0
        %2751 = vmatpush1.msra.mxu0 %v2654
        %2752 = vmatprep.subr.mxu0 0.0
        %2753 = vmatpush1.msra.mxu0 %v2655
        %2754 = vmatprep.subr.mxu0 0.0
        %2755 = vmatpush1.msra.mxu0 %v2656
        %2756 = vmatprep.subr.mxu0 0.0
        %2757 = vmatpush1.msra.mxu0 %v2657
        %2758 = vmatprep.subr.mxu0 0.0
        %2759 = vmatpush1.msra.mxu0 %v2658
        %2760 = vmatprep.subr.mxu0 0.0
        %2761 = vmatpush1.msra.mxu0 %v2659
        %2762 = vmatprep.subr.mxu0 0.0
        %2763 = vmatpush1.msra.mxu0 %v2660
        %2764 = vmatprep.subr.mxu0 0.0
        %2765 = vmatpush1.msra.mxu0 %v2661
        %2766 = vmatprep.subr.mxu0 0.0
        %2767 = vmatpush1.msra.mxu0 %v2662
        %2768 = vmatprep.subr.mxu0 0.0
        %2769 = vmatpush1.msra.mxu0 %v2663
        %2770 = vmatprep.subr.mxu0 0.0
        %2771 = vmatpush1.msra.mxu0 %v2664
        %2772 = vmatprep.subr.mxu0 0.0
        %2773 = vmatpush1.msra.mxu0 %v2665
        %2774 = vmatprep.subr.mxu0 0.0
        %2775 = vmatpush1.msra.mxu0 %v2666
        %2776 = vmatprep.subr.mxu0 0.0
        %2777 = vmatpush1.msra.mxu0 %v2667
        %2778 = vmatprep.subr.mxu0 0.0
        %2779 = vmatpush1.msra.mxu0 %v2668
        %2780 = vmatprep.subr.mxu0 0.0
        %2781 = vmatpush1.msra.mxu0 %v2669
        %2782 = vmatprep.subr.mxu0 0.0
        %2783 = vmatpush1.msra.mxu0 0.0
        %2784 = vmatprep.subr.mxu0 0.0
        %2785 = vmatpush1.msra.mxu0 0.0
        %2786 = vmatprep.subr.mxu0 0.0
        %2787 = vmatpush1.msra.mxu0 0.0
        %2788 = vmatprep.subr.mxu0 0.0
        %2789 = vmatpush1.msra.mxu0 0.0
        %2790 = vmatprep.subr.mxu0 0.0
        %2791 = vmatpush1.msra.mxu0 0.0
        %2792 = vmatprep.subr.mxu0 0.0
        %2793 = vmatpush1.msra.mxu0 0.0
        %2794 = vmatprep.subr.mxu0 0.0
        %2795 = vmatpush1.msra.mxu0 0.0
        %2796 = vmatprep.subr.mxu0 0.0
        %2797 = vmatpush1.msra.mxu0 0.0
        %2798 = vmatprep.subr.mxu0 0.0
        %2799 = vmatpush1.msra.mxu0 0.0
        %2800 = vmatprep.subr.mxu0 0.0
        %2801 = vmatpush1.msra.mxu0 0.0
        %2802 = vmatprep.subr.mxu0 0.0
        %2803 = vmatpush1.msra.mxu0 0.0
        %2804 = vmatprep.subr.mxu0 0.0
        %2805 = vmatpush1.msra.mxu0 0.0
        %2806 = vmatprep.subr.mxu0 0.0
        %2807 = vmatpush1.msra.mxu0 0.0
        %2808 = vmatprep.subr.mxu0 0.0
        %2809 = vmatpush1.msra.mxu0 0.0
        %2810 = vmatprep.subr.mxu0 0.0
        %2811 = vmatpush1.msra.mxu0 0.0
        %2812 = vmatprep.subr.mxu0 0.0
        %2813 = vmatpush1.msra.mxu0 0.0
        %2814 = vmatprep.mubr.f32.mxu0 0.0
        %2815 = vmatmul.mubr.f32.gmra.mrb[0].mxu0 %v2749
        %v2816 = vpop.f32.mrb[0].mxu0
        %v2817 = vadd.f32 %v2671, %v2816
        %v2818 = vpop.f32.mrb[0].mxu0
        %2819 = vdwg.mxu0
        %v2820 = vxor.u32 %v2817, 2147483648
        %v2821 = vmul.f32 %v2820, 1.442695
        %v2822 = vpow.pop %v2821
        %v2823 = vadd.f32 %v2822, 1.0
        %v2824 = vrcp.pop %v2823
        %v2825 = vmul.f32 1.0, %v2824
        %v2826 = vmul.f32 %v2825, %v2635
        %v2827 = vsub.f32 1.0, %v2825
        %v2828 = vmul.f32 %v2827, %v2637
        %v2829 = vadd.f32 %v2826, %v2828
        %v2830 = vmul.f32 %v2829, 1.8
        %v2831 = vadd.f32 %v2830, 0.1
        %v2832 = vsub.f32 %v2630, %v2633
        %v2833 = vrcp.pop %v2748
        %v2834 = vmul.f32 %v2832, %v2833
        %v2835 = vadd.f32 %v2633, %v2834
        %v2836 = vsub.f32 %v2835, %v2831
        %vm2837 = vcmp.gt.f32.partialorder %v2836, 0.0
        %v2838 = vsel %vm2837, 1, 0
        %v2839 = vcvt.s32.f32 %v2838
        %v2840 = vsub.f32 1.0, %v2839
        %v2841 = vmul.f32 %v2835, %v2840
        %v2842 = vmul.f32 %v2839, 0.0
        %v2843 = vadd.f32 %v2841, %v2842
        %2844 = vst [vmem:[%s13] sm:$0xff] %v2843
        %2845 = vst [vmem:[%s2634] sm:$0xff] %v2829
        %2846 = vst [vmem:[%s2636] sm:$0xff] %v2839
        %2847 = vst [vmem:[%s452] sm:$0xff] %v2839
        %p2848 = scmp.lt.s32.totalorder %s27, 7
        %s2849 = scalar_select %p2848, %s27, 7
        %s2850 = smul.addr %s2849, 8
        %s2851 = scalar_lea.vmem %s10, %s2850
        // Predicated region
        $region77: #{lsnn_forward.1} parent=59 // pred_check
          %p2852 = pneg %p255
        $region78: #{lsnn_forward.1} parent=59 // pred_check_branch
          %2854 = sbr.rel (%p2852) target = $region80
        $region79: #{lsnn_forward.1} parent=59 // pred_region
          _
        $region80: #{lsnn_forward.1} parent=59 // pred_fallthru
          _
        // Predicated region
        $region81: #{lsnn_forward.1} parent=59 // pred_check
          %p2855 = pneg %p276
        $region82: #{lsnn_forward.1} parent=59 // pred_check_branch
          %2857 = sbr.rel (%p2855) target = $region84
        $region83: #{lsnn_forward.1} parent=59 // pred_region
          _
        $region84: #{lsnn_forward.1} parent=59 // pred_fallthru
          _
        // Predicated region
        $region85: #{lsnn_forward.1} parent=59 // pred_check
          %p2858 = pneg %p297
        $region86: #{lsnn_forward.1} parent=59 // pred_check_branch
          %2860 = sbr.rel (%p2858) target = $region88
        $region87: #{lsnn_forward.1} parent=59 // pred_region
          _
        $region88: #{lsnn_forward.1} parent=59 // pred_fallthru
          _
        // Predicated region
        $region89: #{lsnn_forward.1} parent=59 // pred_check
          %p2861 = pneg %p318
        $region90: #{lsnn_forward.1} parent=59 // pred_check_branch
          %2863 = sbr.rel (%p2861) target = $region92
        $region91: #{lsnn_forward.1} parent=59 // pred_region
          _
        $region92: #{lsnn_forward.1} parent=59 // pred_fallthru
          _
        // Predicated region
        $region93: #{lsnn_forward.1} parent=59 // pred_check
          %p2864 = pneg %p276
        $region94: #{lsnn_forward.1} parent=59 // pred_check_branch
          %2866 = sbr.rel (%p2864) target = $region96
        $region95: #{lsnn_forward.1} parent=59 // pred_region
          _
        $region96: #{lsnn_forward.1} parent=59 // pred_fallthru
          _
        // Predicated region
        $region97: #{lsnn_forward.1} parent=59 // pred_check
          %p2867 = pneg %p297
        $region98: #{lsnn_forward.1} parent=59 // pred_check_branch
          %2869 = sbr.rel (%p2867) target = $region100
        $region99: #{lsnn_forward.1} parent=59 // pred_region
          _
        $region100: #{lsnn_forward.1} parent=59 // pred_fallthru
          _
        // Predicated region
        $region101: #{lsnn_forward.1} parent=59 // pred_check
          %p2870 = pneg %p318
        $region102: #{lsnn_forward.1} parent=59 // pred_check_branch
          %2872 = sbr.rel (%p2870) target = $region104
        $region103: #{lsnn_forward.1} parent=59 // pred_region
          _
        $region104: #{lsnn_forward.1} parent=59 // pred_fallthru
          _
      $region60: #{lsnn_forward.1} parent=5 // pred_fallthru
        _
      %p2873 = scmp.le.s32.totalorder 2, %s22
      // Predicated region
      $region105: #{lsnn_forward.1} parent=5 // pred_check
        %p2874 = pneg %p2873
      $region106: #{lsnn_forward.1} parent=5 // pred_check_branch
        %2876 = sbr.rel (%p2874) target = $region108
      $region107: #{lsnn_forward.1} parent=5 // pred_region
        %s2877 = ssub.s32 %s22, 2
        // Predicated region
        $region109: #{lsnn_forward.1} parent=107 // pred_check
          %p2878 = pneg %p261
        $region110: #{lsnn_forward.1} parent=107 // pred_check_branch
          %2880 = sbr.rel (%p2878) target = $region112
        $region111: #{lsnn_forward.1} parent=107 // pred_region
          %p2881 = scmp.lt.s32.totalorder %s28, 7
          %s2882 = scalar_select %p2881, %s28, 7
          %s2883 = smul.addr %s2882, 8
          %s2884 = scalar_lea.vmem %s10, %s2883
        $region112: #{lsnn_forward.1} parent=107 // pred_fallthru
          _
      $region108: #{lsnn_forward.1} parent=5 // pred_fallthru
        _
    $region6: #{lsnn_forward.1} parent=1 // loop_footer
      %s26 = sadd.s32 1, %s22
    $region7: #{lsnn_forward.1} parent=1 // loop_footer_branch
      %21 = sbr.rel target = $region3
    $region8: #{lsnn_forward.1} parent=1 // loop_exit
      _
    %2885 = vsyncpa [#allocation9], 1
    %s2886 = scalar_lea.sflag [#allocation9], 1
    %2887 = vsyncpa %s2886, 1
    %2888 = vsyncpa [#allocation11], 1

</llo_original>
